<compile_context>
chip_gen: v7x
topology: tpu7x:2x2x1
jax: 0.10.0
libtpu: 0.0.40
codegen_flags: <defaults>
</compile_context>

<pallas_src>
import functools
import math

import jax
import jax.numpy as jnp
from jax.experimental import pallas as pl
from jax.experimental.pallas import tpu as pltpu

# ---------------- small, ViT-consistent config ----------------
BATCH = 2
IN_CH = 3          # CLIP conv1 always takes RGB
IMG = 16
PATCH = 8
WIDTH = 32         # transformer width == feature_size
HEADS = 4
HEAD_DIM = WIDTH // HEADS
LAYERS = 2
OUT_DIM = 16       # visual.proj output dim
GRID_HW = IMG // PATCH
NUM_PATCHES = GRID_HW * GRID_HW
SEQ = NUM_PATCHES + 1            # cls token + patches
SEQ_PAD = 8                      # pad to sublane multiple; per-batch blocks tile-aligned
ROWS = BATCH * SEQ_PAD
BLOCKS_TO_MASK = (0,)            # indices of resblocks followed by a mask
MASK_SLOT = {blk: slot for slot, blk in enumerate(sorted(BLOCKS_TO_MASK))}
LN_EPS = 1e-5
DTYPE = jnp.float32
MATMUL_DTYPE = jnp.bfloat16      # MXU-native; accumulation stays f32
NEG_INF = -1e30


# ---------------- in-kernel helpers (values, not refs) ----------------
def _ln_rows(x, g, b, eps=LN_EPS):
    """Row-wise LayerNorm in f32. x: (M, D); g, b: (1, D)."""
    mean = jnp.mean(x, axis=-1, keepdims=True)
    var = jnp.mean((x - mean) ** 2, axis=-1, keepdims=True)
    return (x - mean) * jax.lax.rsqrt(var + eps) * g + b


def _mm(x, w):
    """bf16 x bf16 -> f32 MXU matmul (weights already stored in bf16)."""
    return jnp.dot(x.astype(w.dtype), w, preferred_element_type=jnp.float32)


# ---------------- the fused forward kernel ----------------
def _fused_vit_kernel(
    patches_ref, convw_ref, embed_ref, lnpre_g_ref, lnpre_b_ref,
    ln1_g_ref, ln1_b_ref, inw_ref, inb_ref, outw_ref, outb_ref,
    ln2_g_ref, ln2_b_ref, fcw_ref, fcb_ref, cpw_ref, cpb_ref,
    masks_ref, bias_ref, lnpost_g_ref, lnpost_b_ref, proj_ref,
    out_ref,
    *, batch, seq_pad, heads, head_dim, layers, mask_slot, scale):
    width = heads * head_dim
    mdt = convw_ref.dtype

    # ---- patch embedding (conv1 as matmul; cls + pos already folded into embed) ----
    # Row layout: row index = b*seq_pad + pos; pos 0 is the cls slot, padded
    # rows were zero-filled in the wrapper and are masked out of attention.
    x = _mm(patches_ref[...], convw_ref[...]) + embed_ref[...]        # (ROWS, D) f32

    # ---- ln_pre ----
    x = _ln_rows(x, lnpre_g_ref[...], lnpre_b_ref[...])

    # block-diagonal (per batch) + pad-key additive attention bias, loaded once
    attn_bias = bias_ref[...]                                         # (ROWS, ROWS)

    # ---- transformer resblocks (statically unrolled, all weights in VMEM) ----
    for i in range(layers):
        # --- attention branch ---
        h = _ln_rows(x, ln1_g_ref[i], ln1_b_ref[i])
        qkv = _mm(h, inw_ref[i]) + inb_ref[i]                         # (ROWS, 3D) f32

        head_outs = []
        for hh in range(heads):
            lo = hh * head_dim
            q = qkv[:, lo:lo + head_dim].astype(mdt)                  # (ROWS, hd)
            k = qkv[:, width + lo:width + lo + head_dim].astype(mdt)
            v = qkv[:, 2 * width + lo:2 * width + lo + head_dim].astype(mdt)
            # s = q @ k^T across ALL batches at once; cross-batch / pad-key
            # entries are pushed to -inf by the precomputed bias.
            s = jax.lax.dot_general(
                q, k, (((1,), (1,)), ((), ())),
                preferred_element_type=jnp.float32) * scale + attn_bias
            m = jnp.max(s, axis=-1, keepdims=True)
            p = jnp.exp(s - m)
            p = p * pl.reciprocal(jnp.sum(p, axis=-1, keepdims=True),
                                  approx=True)
            head_outs.append(
                jnp.dot(p.astype(mdt), v,
                        preferred_element_type=jnp.float32))          # (ROWS, hd)
        attn = jnp.concatenate(head_outs, axis=1)                     # (ROWS, D)

        x = x + (_mm(attn, outw_ref[i]) + outb_ref[i])                # residual

        # --- MLP branch (c_fc -> QuickGELU -> c_proj) ---
        h = _ln_rows(x, ln2_g_ref[i], ln2_b_ref[i])
        h = _mm(h, fcw_ref[i]) + fcb_ref[i]                           # (ROWS, 4D)
        h = h * jax.nn.sigmoid(1.702 * h)                             # QuickGELU f32
        x = x + (_mm(h, cpw_ref[i]) + cpb_ref[i])                     # residual

        # --- optional per-block mask (pre-tiled to padded row layout) ---
        if i in mask_slot:
            x = x * masks_ref[mask_slot[i]]                           # (ROWS, D)

    # ---- ln_post on cls token + final projection ----
    cls_tok = jnp.concatenate(
        [x[b * seq_pad:b * seq_pad + 1, :] for b in range(batch)], axis=0)  # (B, D)
    cls_tok = _ln_rows(cls_tok, lnpost_g_ref[...], lnpost_b_ref[...])
    out_ref[...] = _mm(cls_tok, proj_ref[...]).astype(out_ref.dtype)


# ---------------- wrapper: one pallas_call for the whole forward ----------------
def masked_vit_forward(packed, image):
    B, C, H, W = image.shape                  # NCHW, same as PyTorch conv input
    gh, gw = H // PATCH, W // PATCH
    n_p = gh * gw
    cpp = C * PATCH * PATCH
    # Patch extraction is pure layout glue (reshape/transpose/pad); all math
    # (matmuls, LayerNorms, softmax, GELU, residuals, masks) runs in the kernel.
    patches = image.reshape(B, C, gh, PATCH, gw, PATCH)
    patches = patches.transpose(0, 2, 4, 1, 3, 5).reshape(B, n_p, cpp)
    patches = jnp.concatenate(
        [jnp.zeros((B, 1, cpp), patches.dtype),                  # cls slot (row 0)
         patches,
         jnp.zeros((B, SEQ_PAD - 1 - n_p, cpp), patches.dtype)], # seq padding
        axis=1).reshape(B * SEQ_PAD, cpp)

    args = [
        patches,
        packed["conv_w"], packed["embed"],
        packed["ln_pre_g"], packed["ln_pre_b"],
        packed["ln1_g"], packed["ln1_b"], packed["in_w"], packed["in_b"],
        packed["out_w"], packed["out_b"], packed["ln2_g"], packed["ln2_b"],
        packed["fc_w"], packed["fc_b"], packed["cp_w"], packed["cp_b"],
        packed["masks"], packed["attn_bias"],
        packed["ln_post_g"], packed["ln_post_b"], packed["proj"],
    ]

    def full_spec(a):
        nd = a.ndim
        return pl.BlockSpec(a.shape, lambda i, nd=nd: (0,) * nd)

    kernel = functools.partial(
        _fused_vit_kernel,
        batch=B, seq_pad=SEQ_PAD, heads=HEADS, head_dim=HEAD_DIM,
        layers=LAYERS, mask_slot=MASK_SLOT, scale=1.0 / math.sqrt(HEAD_DIM))

    return pl.pallas_call(
        kernel,
        out_shape=jax.ShapeDtypeStruct((B, OUT_DIM), DTYPE),
        grid=(1,),
        in_specs=[full_spec(a) for a in args],
        out_specs=pl.BlockSpec((B, OUT_DIM), lambda i: (0, 0)),
        compiler_params=pltpu.CompilerParams(
            dimension_semantics=("arbitrary",)),
    )(*args)


# ---------------- deterministic parameter construction ----------------
def init_params(key):
    """Weights in PyTorch layouts (as clip_model.visual would hold them)."""
    ks = iter(jax.random.split(key, 64))
    n = lambda shape, s=0.02: (s * jax.random.normal(next(ks), shape)).astype(DTYPE)

    blocks = []
    for _ in range(LAYERS):
        blocks.append(dict(
            ln1_g=jnp.ones((WIDTH,), DTYPE), ln1_b=jnp.zeros((WIDTH,), DTYPE),
            in_proj_w=n((3 * WIDTH, WIDTH)), in_proj_b=n((3 * WIDTH,)),
            out_proj_w=n((WIDTH, WIDTH)), out_proj_b=n((WIDTH,)),
            ln2_g=jnp.ones((WIDTH,), DTYPE), ln2_b=jnp.zeros((WIDTH,), DTYPE),
            c_fc_w=n((4 * WIDTH, WIDTH)), c_fc_b=n((4 * WIDTH,)),
            c_proj_w=n((WIDTH, 4 * WIDTH)), c_proj_b=n((WIDTH,)),
        ))
    return dict(
        conv1_w=n((WIDTH, IN_CH, PATCH, PATCH)),
        class_embedding=n((WIDTH,)),
        positional_embedding=n((SEQ, WIDTH)),
        ln_pre_g=jnp.ones((WIDTH,), DTYPE), ln_pre_b=jnp.zeros((WIDTH,), DTYPE),
        blocks=blocks,
        ln_post_g=jnp.ones((WIDTH,), DTYPE), ln_post_b=jnp.zeros((WIDTH,), DTYPE),
        proj=n((WIDTH, OUT_DIM)),
        # module __init__ uses torch.zeros; small random values around 1 keep
        # the data path non-degenerate while preserving x = x * mask semantics.
        masks={i: n((SEQ, 1, WIDTH), s=0.1) + 1.0 for i in BLOCKS_TO_MASK},
    )


def pack_params(params):
    """One-time repack (outside jit):
    - pre-transpose matmul weights into (in, out) bf16 layout,
    - stack per-layer tensors along a leading layer axis,
    - fold cls + positional embeddings into one additive (ROWS, D) table,
    - pre-build the block-diagonal / pad-key attention bias,
    - pre-tile the per-block masks to the padded (ROWS, D) row layout.
    No per-forward transposes / broadcasts / concats of parameters remain."""
    stack = lambda fn: jnp.stack([fn(b) for b in params["blocks"]], axis=0)

    # cls + positional embedding folded into the padded row layout
    pos = params["positional_embedding"]                                # (SEQ, D)
    emb = jnp.zeros((SEQ_PAD, WIDTH), DTYPE)
    emb = emb.at[0, :].set(params["class_embedding"] + pos[0])
    emb = emb.at[1:SEQ, :].set(pos[1:])
    emb = jnp.tile(emb, (BATCH, 1))                                     # (ROWS, D)

    # additive attention bias: 0 within a batch block for real key positions,
    # -inf across batches and at padded key positions
    batch_ids = jnp.repeat(jnp.arange(BATCH), SEQ_PAD)
    pos_ids = jnp.tile(jnp.arange(SEQ_PAD), BATCH)
    valid = (batch_ids[:, None] == batch_ids[None, :]) & (pos_ids < SEQ)[None, :]
    attn_bias = jnp.where(valid, 0.0, NEG_INF).astype(DTYPE)            # (ROWS, ROWS)

    def tile_mask(m):
        m2 = m[:, 0, :]                                                 # (SEQ, D)
        m2 = jnp.concatenate(
            [m2, jnp.ones((SEQ_PAD - SEQ, WIDTH), DTYPE)], axis=0)      # pad rows
        return jnp.tile(m2, (BATCH, 1))                                 # (ROWS, D)

    return dict(
        conv_w=params["conv1_w"].reshape(WIDTH, IN_CH * PATCH * PATCH)
                                .T.astype(MATMUL_DTYPE),                # (CPP, D)
        embed=emb,
        attn_bias=attn_bias,
        ln_pre_g=params["ln_pre_g"].reshape(1, WIDTH),
        ln_pre_b=params["ln_pre_b"].reshape(1, WIDTH),
        ln1_g=stack(lambda b: b["ln1_g"].reshape(1, WIDTH)),
        ln1_b=stack(lambda b: b["ln1_b"].reshape(1, WIDTH)),
        in_w=stack(lambda b: b["in_proj_w"].T.astype(MATMUL_DTYPE)),    # (L, D, 3D)
        in_b=stack(lambda b: b["in_proj_b"].reshape(1, 3 * WIDTH)),
        out_w=stack(lambda b: b["out_proj_w"].T.astype(MATMUL_DTYPE)),  # (L, D, D)
        out_b=stack(lambda b: b["out_proj_b"].reshape(1, WIDTH)),
        ln2_g=stack(lambda b: b["ln2_g"].reshape(1, WIDTH)),
        ln2_b=stack(lambda b: b["ln2_b"].reshape(1, WIDTH)),
        fc_w=stack(lambda b: b["c_fc_w"].T.astype(MATMUL_DTYPE)),       # (L, D, 4D)
        fc_b=stack(lambda b: b["c_fc_b"].reshape(1, 4 * WIDTH)),
        cp_w=stack(lambda b: b["c_proj_w"].T.astype(MATMUL_DTYPE)),     # (L, 4D, D)
        cp_b=stack(lambda b: b["c_proj_b"].reshape(1, WIDTH)),
        masks=jnp.stack([tile_mask(params["masks"][i])
                         for i in sorted(BLOCKS_TO_MASK)], axis=0),     # (NM, ROWS, D)
        ln_post_g=params["ln_post_g"].reshape(1, WIDTH),
        ln_post_b=params["ln_post_b"].reshape(1, WIDTH),
        proj=params["proj"].astype(MATMUL_DTYPE),                       # (D, OUT)
    )


if __name__ == "__main__":
    key = jax.random.PRNGKey(0)
    pkey, xkey = jax.random.split(key)
    params = init_params(pkey)
    packed = pack_params(params)                 # one-time repack, outside jit
    image = jax.random.normal(xkey, (BATCH, IN_CH, IMG, IMG)).astype(DTYPE)

    fwd = jax.jit(masked_vit_forward)
    out = fwd(packed, image)
    out = jax.block_until_ready(out)
    assert out.shape == (BATCH, OUT_DIM), out.shape
    assert jnp.all(jnp.isfinite(out))
    print("KERNEL_OK")
</pallas_src>

<mosaic_0001>
module attributes {stable_mosaic.version = 11 : i64} {
  func.func @_fused_vit_kernel(%arg0: i32, %arg1: memref<16x192xf32, #tpu.memory_space<vmem>>, %arg2: memref<192x32xbf16, #tpu.memory_space<vmem>>, %arg3: memref<16x32xf32, #tpu.memory_space<vmem>>, %arg4: memref<1x32xf32, #tpu.memory_space<vmem>>, %arg5: memref<1x32xf32, #tpu.memory_space<vmem>>, %arg6: memref<2x1x32xf32, #tpu.memory_space<vmem>>, %arg7: memref<2x1x32xf32, #tpu.memory_space<vmem>>, %arg8: memref<2x32x96xbf16, #tpu.memory_space<vmem>>, %arg9: memref<2x1x96xf32, #tpu.memory_space<vmem>>, %arg10: memref<2x32x32xbf16, #tpu.memory_space<vmem>>, %arg11: memref<2x1x32xf32, #tpu.memory_space<vmem>>, %arg12: memref<2x1x32xf32, #tpu.memory_space<vmem>>, %arg13: memref<2x1x32xf32, #tpu.memory_space<vmem>>, %arg14: memref<2x32x128xbf16, #tpu.memory_space<vmem>>, %arg15: memref<2x1x128xf32, #tpu.memory_space<vmem>>, %arg16: memref<2x128x32xbf16, #tpu.memory_space<vmem>>, %arg17: memref<2x1x32xf32, #tpu.memory_space<vmem>>, %arg18: memref<1x16x32xf32, #tpu.memory_space<vmem>>, %arg19: memref<16x16xf32, #tpu.memory_space<vmem>>, %arg20: memref<1x32xf32, #tpu.memory_space<vmem>>, %arg21: memref<1x32xf32, #tpu.memory_space<vmem>>, %arg22: memref<32x16xbf16, #tpu.memory_space<vmem>>, %arg23: memref<2x16xf32, #tpu.memory_space<vmem>>) attributes {dimension_semantics = [#tpu.dimension_semantics<arbitrary>], iteration_bounds = array<i64: 1>, scalar_prefetch = 0 : i64, scratch_operands = 0 : i64, tpu.core_type = #tpu.core_type<tc>, window_params = [{pipeline_mode = #tpu.pipeline_mode<synchronous>, transform_indices = @transform_0, window_bounds = array<i64: 16, 192>}, {pipeline_mode = #tpu.pipeline_mode<synchronous>, transform_indices = @transform_1, window_bounds = array<i64: 192, 32>}, {pipeline_mode = #tpu.pipeline_mode<synchronous>, transform_indices = @transform_2, window_bounds = array<i64: 16, 32>}, {pipeline_mode = #tpu.pipeline_mode<synchronous>, transform_indices = @transform_3, window_bounds = array<i64: 1, 32>}, {pipeline_mode = #tpu.pipeline_mode<synchronous>, transform_indices = @transform_4, window_bounds = array<i64: 1, 32>}, {pipeline_mode = #tpu.pipeline_mode<synchronous>, transform_indices = @transform_5, window_bounds = array<i64: 2, 1, 32>}, {pipeline_mode = #tpu.pipeline_mode<synchronous>, transform_indices = @transform_6, window_bounds = array<i64: 2, 1, 32>}, {pipeline_mode = #tpu.pipeline_mode<synchronous>, transform_indices = @transform_7, window_bounds = array<i64: 2, 32, 96>}, {pipeline_mode = #tpu.pipeline_mode<synchronous>, transform_indices = @transform_8, window_bounds = array<i64: 2, 1, 96>}, {pipeline_mode = #tpu.pipeline_mode<synchronous>, transform_indices = @transform_9, window_bounds = array<i64: 2, 32, 32>}, {pipeline_mode = #tpu.pipeline_mode<synchronous>, transform_indices = @transform_10, window_bounds = array<i64: 2, 1, 32>}, {pipeline_mode = #tpu.pipeline_mode<synchronous>, transform_indices = @transform_11, window_bounds = array<i64: 2, 1, 32>}, {pipeline_mode = #tpu.pipeline_mode<synchronous>, transform_indices = @transform_12, window_bounds = array<i64: 2, 1, 32>}, {pipeline_mode = #tpu.pipeline_mode<synchronous>, transform_indices = @transform_13, window_bounds = array<i64: 2, 32, 128>}, {pipeline_mode = #tpu.pipeline_mode<synchronous>, transform_indices = @transform_14, window_bounds = array<i64: 2, 1, 128>}, {pipeline_mode = #tpu.pipeline_mode<synchronous>, transform_indices = @transform_15, window_bounds = array<i64: 2, 128, 32>}, {pipeline_mode = #tpu.pipeline_mode<synchronous>, transform_indices = @transform_16, window_bounds = array<i64: 2, 1, 32>}, {pipeline_mode = #tpu.pipeline_mode<synchronous>, transform_indices = @transform_17, window_bounds = array<i64: 1, 16, 32>}, {pipeline_mode = #tpu.pipeline_mode<synchronous>, transform_indices = @transform_18, window_bounds = array<i64: 16, 16>}, {pipeline_mode = #tpu.pipeline_mode<synchronous>, transform_indices = @transform_19, window_bounds = array<i64: 1, 32>}, {pipeline_mode = #tpu.pipeline_mode<synchronous>, transform_indices = @transform_20, window_bounds = array<i64: 1, 32>}, {pipeline_mode = #tpu.pipeline_mode<synchronous>, transform_indices = @transform_21, window_bounds = array<i64: 32, 16>}, {pipeline_mode = #tpu.pipeline_mode<synchronous>, transform_indices = @transform_22, window_bounds = array<i64: 2, 16>}]} {
    %c0 = arith.constant 0 : index
    %c0_0 = arith.constant 0 : index
    %0 = vector.load %arg1[%c0, %c0_0] : memref<16x192xf32, #tpu.memory_space<vmem>>, vector<16x192xf32>
    %c0_1 = arith.constant 0 : index
    %c0_2 = arith.constant 0 : index
    %1 = vector.load %arg2[%c0_1, %c0_2] : memref<192x32xbf16, #tpu.memory_space<vmem>>, vector<192x32xbf16>
    %2 = arith.truncf %0 : vector<16x192xf32> to vector<16x192xbf16>
    %cst = arith.constant dense<0.000000e+00> : vector<16x32xf32>
    %3 = tpu.matmul %2, %1, %cst {dimension_numbers = #tpu.dot_dimension_numbers<[1], [0], [0], [1], [0, 0, 1, 1], [], []>} : vector<16x192xbf16>, vector<192x32xbf16>, vector<16x32xf32> -> vector<16x32xf32>
    %c0_3 = arith.constant 0 : index
    %c0_4 = arith.constant 0 : index
    %4 = vector.load %arg3[%c0_3, %c0_4] : memref<16x32xf32, #tpu.memory_space<vmem>>, vector<16x32xf32>
    %5 = arith.addf %3, %4 : vector<16x32xf32>
    %c0_5 = arith.constant 0 : index
    %c0_6 = arith.constant 0 : index
    %6 = vector.load %arg4[%c0_5, %c0_6] : memref<1x32xf32, #tpu.memory_space<vmem>>, vector<1x32xf32>
    %c0_7 = arith.constant 0 : index
    %c0_8 = arith.constant 0 : index
    %7 = vector.load %arg5[%c0_7, %c0_8] : memref<1x32xf32, #tpu.memory_space<vmem>>, vector<1x32xf32>
    %cst_9 = arith.constant dense<0.000000e+00> : vector<16xf32>
    %8 = vector.multi_reduction <add>, %5, %cst_9 [1] : vector<16x32xf32> to vector<16xf32>
    %9 = vector.shape_cast %8 : vector<16xf32> to vector<16x1xf32>
    %cst_10 = arith.constant 3.200000e+01 : f32
    %10 = vector.broadcast %cst_10 : f32 to vector<16x1xf32>
    %11 = arith.divf %9, %10 : vector<16x1xf32>
    %12 = vector.broadcast %11 : vector<16x1xf32> to vector<16x32xf32>
    %13 = arith.subf %5, %12 : vector<16x32xf32>
    %14 = arith.mulf %13, %13 : vector<16x32xf32>
    %cst_11 = arith.constant dense<0.000000e+00> : vector<16xf32>
    %15 = vector.multi_reduction <add>, %14, %cst_11 [1] : vector<16x32xf32> to vector<16xf32>
    %16 = vector.shape_cast %15 : vector<16xf32> to vector<16x1xf32>
    %cst_12 = arith.constant 3.200000e+01 : f32
    %17 = vector.broadcast %cst_12 : f32 to vector<16x1xf32>
    %18 = arith.divf %16, %17 : vector<16x1xf32>
    %19 = vector.broadcast %11 : vector<16x1xf32> to vector<16x32xf32>
    %20 = arith.subf %5, %19 : vector<16x32xf32>
    %cst_13 = arith.constant 9.99999974E-6 : f32
    %21 = vector.broadcast %cst_13 : f32 to vector<16x1xf32>
    %22 = arith.addf %18, %21 : vector<16x1xf32>
    %23 = math.rsqrt %22 : vector<16x1xf32>
    %24 = vector.broadcast %23 : vector<16x1xf32> to vector<16x32xf32>
    %25 = arith.mulf %20, %24 : vector<16x32xf32>
    %26 = vector.broadcast %6 : vector<1x32xf32> to vector<16x32xf32>
    %27 = arith.mulf %25, %26 : vector<16x32xf32>
    %28 = vector.broadcast %7 : vector<1x32xf32> to vector<16x32xf32>
    %29 = arith.addf %27, %28 : vector<16x32xf32>
    %c0_14 = arith.constant 0 : index
    %c0_15 = arith.constant 0 : index
    %30 = vector.load %arg19[%c0_14, %c0_15] : memref<16x16xf32, #tpu.memory_space<vmem>>, vector<16x16xf32>
    %c0_16 = arith.constant 0 : index
    %c0_17 = arith.constant 0 : index
    %c0_18 = arith.constant 0 : index
    %31 = vector.load %arg6[%c0_16, %c0_17, %c0_18] : memref<2x1x32xf32, #tpu.memory_space<vmem>>, vector<1x1x32xf32>
    %32 = vector.shape_cast %31 : vector<1x1x32xf32> to vector<1x32xf32>
    %c0_19 = arith.constant 0 : index
    %c0_20 = arith.constant 0 : index
    %c0_21 = arith.constant 0 : index
    %33 = vector.load %arg7[%c0_19, %c0_20, %c0_21] : memref<2x1x32xf32, #tpu.memory_space<vmem>>, vector<1x1x32xf32>
    %34 = vector.shape_cast %33 : vector<1x1x32xf32> to vector<1x32xf32>
    %cst_22 = arith.constant dense<0.000000e+00> : vector<16xf32>
    %35 = vector.multi_reduction <add>, %29, %cst_22 [1] : vector<16x32xf32> to vector<16xf32>
    %36 = vector.shape_cast %35 : vector<16xf32> to vector<16x1xf32>
    %cst_23 = arith.constant 3.200000e+01 : f32
    %37 = vector.broadcast %cst_23 : f32 to vector<16x1xf32>
    %38 = arith.divf %36, %37 : vector<16x1xf32>
    %39 = vector.broadcast %38 : vector<16x1xf32> to vector<16x32xf32>
    %40 = arith.subf %29, %39 : vector<16x32xf32>
    %41 = arith.mulf %40, %40 : vector<16x32xf32>
    %cst_24 = arith.constant dense<0.000000e+00> : vector<16xf32>
    %42 = vector.multi_reduction <add>, %41, %cst_24 [1] : vector<16x32xf32> to vector<16xf32>
    %43 = vector.shape_cast %42 : vector<16xf32> to vector<16x1xf32>
    %cst_25 = arith.constant 3.200000e+01 : f32
    %44 = vector.broadcast %cst_25 : f32 to vector<16x1xf32>
    %45 = arith.divf %43, %44 : vector<16x1xf32>
    %46 = vector.broadcast %38 : vector<16x1xf32> to vector<16x32xf32>
    %47 = arith.subf %29, %46 : vector<16x32xf32>
    %cst_26 = arith.constant 9.99999974E-6 : f32
    %48 = vector.broadcast %cst_26 : f32 to vector<16x1xf32>
    %49 = arith.addf %45, %48 : vector<16x1xf32>
    %50 = math.rsqrt %49 : vector<16x1xf32>
    %51 = vector.broadcast %50 : vector<16x1xf32> to vector<16x32xf32>
    %52 = arith.mulf %47, %51 : vector<16x32xf32>
    %53 = vector.broadcast %32 : vector<1x32xf32> to vector<16x32xf32>
    %54 = arith.mulf %52, %53 : vector<16x32xf32>
    %55 = vector.broadcast %34 : vector<1x32xf32> to vector<16x32xf32>
    %56 = arith.addf %54, %55 : vector<16x32xf32>
    %c0_27 = arith.constant 0 : index
    %c0_28 = arith.constant 0 : index
    %c0_29 = arith.constant 0 : index
    %57 = vector.load %arg8[%c0_27, %c0_28, %c0_29] : memref<2x32x96xbf16, #tpu.memory_space<vmem>>, vector<1x32x96xbf16>
    %58 = vector.shape_cast %57 : vector<1x32x96xbf16> to vector<32x96xbf16>
    %59 = arith.truncf %56 : vector<16x32xf32> to vector<16x32xbf16>
    %cst_30 = arith.constant dense<0.000000e+00> : vector<16x96xf32>
    %60 = tpu.matmul %59, %58, %cst_30 {dimension_numbers = #tpu.dot_dimension_numbers<[1], [0], [0], [1], [0, 0, 1, 1], [], []>} : vector<16x32xbf16>, vector<32x96xbf16>, vector<16x96xf32> -> vector<16x96xf32>
    %c0_31 = arith.constant 0 : index
    %c0_32 = arith.constant 0 : index
    %c0_33 = arith.constant 0 : index
    %61 = vector.load %arg9[%c0_31, %c0_32, %c0_33] : memref<2x1x96xf32, #tpu.memory_space<vmem>>, vector<1x1x96xf32>
    %62 = vector.shape_cast %61 : vector<1x1x96xf32> to vector<1x96xf32>
    %63 = vector.broadcast %62 : vector<1x96xf32> to vector<16x96xf32>
    %64 = arith.addf %60, %63 : vector<16x96xf32>
    %65 = vector.extract_strided_slice %64 {offsets = [0, 0], sizes = [16, 8], strides = [1, 1]} : vector<16x96xf32> to vector<16x8xf32>
    %66 = arith.truncf %65 : vector<16x8xf32> to vector<16x8xbf16>
    %67 = vector.extract_strided_slice %64 {offsets = [0, 32], sizes = [16, 8], strides = [1, 1]} : vector<16x96xf32> to vector<16x8xf32>
    %68 = arith.truncf %67 : vector<16x8xf32> to vector<16x8xbf16>
    %69 = vector.extract_strided_slice %64 {offsets = [0, 64], sizes = [16, 8], strides = [1, 1]} : vector<16x96xf32> to vector<16x8xf32>
    %70 = arith.truncf %69 : vector<16x8xf32> to vector<16x8xbf16>
    %cst_34 = arith.constant dense<0.000000e+00> : vector<16x16xf32>
    %71 = tpu.matmul %66, %68, %cst_34 {dimension_numbers = #tpu.dot_dimension_numbers<[1], [1], [0], [0], [0, 0, 1, 0], [], []>} : vector<16x8xbf16>, vector<16x8xbf16>, vector<16x16xf32> -> vector<16x16xf32>
    %cst_35 = arith.constant 0.353553385 : f32
    %72 = vector.broadcast %cst_35 : f32 to vector<16x16xf32>
    %73 = arith.mulf %71, %72 : vector<16x16xf32>
    %74 = arith.addf %73, %30 : vector<16x16xf32>
    %cst_36 = arith.constant dense<0xFF800000> : vector<16xf32>
    %75 = vector.multi_reduction <maximumf>, %74, %cst_36 [1] : vector<16x16xf32> to vector<16xf32>
    %76 = vector.shape_cast %75 : vector<16xf32> to vector<16x1xf32>
    %77 = vector.broadcast %76 : vector<16x1xf32> to vector<16x16xf32>
    %78 = arith.subf %74, %77 : vector<16x16xf32>
    %79 = math.exp %78 : vector<16x16xf32>
    %cst_37 = arith.constant dense<0.000000e+00> : vector<16xf32>
    %80 = vector.multi_reduction <add>, %79, %cst_37 [1] : vector<16x16xf32> to vector<16xf32>
    %81 = vector.shape_cast %80 : vector<16xf32> to vector<16x1xf32>
    %82 = tpu.reciprocal %81 {approx = true} : vector<16x1xf32> -> vector<16x1xf32>
    %83 = vector.broadcast %82 : vector<16x1xf32> to vector<16x16xf32>
    %84 = arith.mulf %79, %83 : vector<16x16xf32>
    %85 = arith.truncf %84 : vector<16x16xf32> to vector<16x16xbf16>
    %cst_38 = arith.constant dense<0.000000e+00> : vector<16x8xf32>
    %86 = tpu.matmul %85, %70, %cst_38 {dimension_numbers = #tpu.dot_dimension_numbers<[1], [0], [0], [1], [0, 0, 1, 1], [], []>} : vector<16x16xbf16>, vector<16x8xbf16>, vector<16x8xf32> -> vector<16x8xf32>
    %87 = vector.extract_strided_slice %64 {offsets = [0, 8], sizes = [16, 8], strides = [1, 1]} : vector<16x96xf32> to vector<16x8xf32>
    %88 = arith.truncf %87 : vector<16x8xf32> to vector<16x8xbf16>
    %89 = vector.extract_strided_slice %64 {offsets = [0, 40], sizes = [16, 8], strides = [1, 1]} : vector<16x96xf32> to vector<16x8xf32>
    %90 = arith.truncf %89 : vector<16x8xf32> to vector<16x8xbf16>
    %91 = vector.extract_strided_slice %64 {offsets = [0, 72], sizes = [16, 8], strides = [1, 1]} : vector<16x96xf32> to vector<16x8xf32>
    %92 = arith.truncf %91 : vector<16x8xf32> to vector<16x8xbf16>
    %cst_39 = arith.constant dense<0.000000e+00> : vector<16x16xf32>
    %93 = tpu.matmul %88, %90, %cst_39 {dimension_numbers = #tpu.dot_dimension_numbers<[1], [1], [0], [0], [0, 0, 1, 0], [], []>} : vector<16x8xbf16>, vector<16x8xbf16>, vector<16x16xf32> -> vector<16x16xf32>
    %cst_40 = arith.constant 0.353553385 : f32
    %94 = vector.broadcast %cst_40 : f32 to vector<16x16xf32>
    %95 = arith.mulf %93, %94 : vector<16x16xf32>
    %96 = arith.addf %95, %30 : vector<16x16xf32>
    %cst_41 = arith.constant dense<0xFF800000> : vector<16xf32>
    %97 = vector.multi_reduction <maximumf>, %96, %cst_41 [1] : vector<16x16xf32> to vector<16xf32>
    %98 = vector.shape_cast %97 : vector<16xf32> to vector<16x1xf32>
    %99 = vector.broadcast %98 : vector<16x1xf32> to vector<16x16xf32>
    %100 = arith.subf %96, %99 : vector<16x16xf32>
    %101 = math.exp %100 : vector<16x16xf32>
    %cst_42 = arith.constant dense<0.000000e+00> : vector<16xf32>
    %102 = vector.multi_reduction <add>, %101, %cst_42 [1] : vector<16x16xf32> to vector<16xf32>
    %103 = vector.shape_cast %102 : vector<16xf32> to vector<16x1xf32>
    %104 = tpu.reciprocal %103 {approx = true} : vector<16x1xf32> -> vector<16x1xf32>
    %105 = vector.broadcast %104 : vector<16x1xf32> to vector<16x16xf32>
    %106 = arith.mulf %101, %105 : vector<16x16xf32>
    %107 = arith.truncf %106 : vector<16x16xf32> to vector<16x16xbf16>
    %cst_43 = arith.constant dense<0.000000e+00> : vector<16x8xf32>
    %108 = tpu.matmul %107, %92, %cst_43 {dimension_numbers = #tpu.dot_dimension_numbers<[1], [0], [0], [1], [0, 0, 1, 1], [], []>} : vector<16x16xbf16>, vector<16x8xbf16>, vector<16x8xf32> -> vector<16x8xf32>
    %109 = vector.extract_strided_slice %64 {offsets = [0, 16], sizes = [16, 8], strides = [1, 1]} : vector<16x96xf32> to vector<16x8xf32>
    %110 = arith.truncf %109 : vector<16x8xf32> to vector<16x8xbf16>
    %111 = vector.extract_strided_slice %64 {offsets = [0, 48], sizes = [16, 8], strides = [1, 1]} : vector<16x96xf32> to vector<16x8xf32>
    %112 = arith.truncf %111 : vector<16x8xf32> to vector<16x8xbf16>
    %113 = vector.extract_strided_slice %64 {offsets = [0, 80], sizes = [16, 8], strides = [1, 1]} : vector<16x96xf32> to vector<16x8xf32>
    %114 = arith.truncf %113 : vector<16x8xf32> to vector<16x8xbf16>
    %cst_44 = arith.constant dense<0.000000e+00> : vector<16x16xf32>
    %115 = tpu.matmul %110, %112, %cst_44 {dimension_numbers = #tpu.dot_dimension_numbers<[1], [1], [0], [0], [0, 0, 1, 0], [], []>} : vector<16x8xbf16>, vector<16x8xbf16>, vector<16x16xf32> -> vector<16x16xf32>
    %cst_45 = arith.constant 0.353553385 : f32
    %116 = vector.broadcast %cst_45 : f32 to vector<16x16xf32>
    %117 = arith.mulf %115, %116 : vector<16x16xf32>
    %118 = arith.addf %117, %30 : vector<16x16xf32>
    %cst_46 = arith.constant dense<0xFF800000> : vector<16xf32>
    %119 = vector.multi_reduction <maximumf>, %118, %cst_46 [1] : vector<16x16xf32> to vector<16xf32>
    %120 = vector.shape_cast %119 : vector<16xf32> to vector<16x1xf32>
    %121 = vector.broadcast %120 : vector<16x1xf32> to vector<16x16xf32>
    %122 = arith.subf %118, %121 : vector<16x16xf32>
    %123 = math.exp %122 : vector<16x16xf32>
    %cst_47 = arith.constant dense<0.000000e+00> : vector<16xf32>
    %124 = vector.multi_reduction <add>, %123, %cst_47 [1] : vector<16x16xf32> to vector<16xf32>
    %125 = vector.shape_cast %124 : vector<16xf32> to vector<16x1xf32>
    %126 = tpu.reciprocal %125 {approx = true} : vector<16x1xf32> -> vector<16x1xf32>
    %127 = vector.broadcast %126 : vector<16x1xf32> to vector<16x16xf32>
    %128 = arith.mulf %123, %127 : vector<16x16xf32>
    %129 = arith.truncf %128 : vector<16x16xf32> to vector<16x16xbf16>
    %cst_48 = arith.constant dense<0.000000e+00> : vector<16x8xf32>
    %130 = tpu.matmul %129, %114, %cst_48 {dimension_numbers = #tpu.dot_dimension_numbers<[1], [0], [0], [1], [0, 0, 1, 1], [], []>} : vector<16x16xbf16>, vector<16x8xbf16>, vector<16x8xf32> -> vector<16x8xf32>
    %131 = vector.extract_strided_slice %64 {offsets = [0, 24], sizes = [16, 8], strides = [1, 1]} : vector<16x96xf32> to vector<16x8xf32>
    %132 = arith.truncf %131 : vector<16x8xf32> to vector<16x8xbf16>
    %133 = vector.extract_strided_slice %64 {offsets = [0, 56], sizes = [16, 8], strides = [1, 1]} : vector<16x96xf32> to vector<16x8xf32>
    %134 = arith.truncf %133 : vector<16x8xf32> to vector<16x8xbf16>
    %135 = vector.extract_strided_slice %64 {offsets = [0, 88], sizes = [16, 8], strides = [1, 1]} : vector<16x96xf32> to vector<16x8xf32>
    %136 = arith.truncf %135 : vector<16x8xf32> to vector<16x8xbf16>
    %cst_49 = arith.constant dense<0.000000e+00> : vector<16x16xf32>
    %137 = tpu.matmul %132, %134, %cst_49 {dimension_numbers = #tpu.dot_dimension_numbers<[1], [1], [0], [0], [0, 0, 1, 0], [], []>} : vector<16x8xbf16>, vector<16x8xbf16>, vector<16x16xf32> -> vector<16x16xf32>
    %cst_50 = arith.constant 0.353553385 : f32
    %138 = vector.broadcast %cst_50 : f32 to vector<16x16xf32>
    %139 = arith.mulf %137, %138 : vector<16x16xf32>
    %140 = arith.addf %139, %30 : vector<16x16xf32>
    %cst_51 = arith.constant dense<0xFF800000> : vector<16xf32>
    %141 = vector.multi_reduction <maximumf>, %140, %cst_51 [1] : vector<16x16xf32> to vector<16xf32>
    %142 = vector.shape_cast %141 : vector<16xf32> to vector<16x1xf32>
    %143 = vector.broadcast %142 : vector<16x1xf32> to vector<16x16xf32>
    %144 = arith.subf %140, %143 : vector<16x16xf32>
    %145 = math.exp %144 : vector<16x16xf32>
    %cst_52 = arith.constant dense<0.000000e+00> : vector<16xf32>
    %146 = vector.multi_reduction <add>, %145, %cst_52 [1] : vector<16x16xf32> to vector<16xf32>
    %147 = vector.shape_cast %146 : vector<16xf32> to vector<16x1xf32>
    %148 = tpu.reciprocal %147 {approx = true} : vector<16x1xf32> -> vector<16x1xf32>
    %149 = vector.broadcast %148 : vector<16x1xf32> to vector<16x16xf32>
    %150 = arith.mulf %145, %149 : vector<16x16xf32>
    %151 = arith.truncf %150 : vector<16x16xf32> to vector<16x16xbf16>
    %cst_53 = arith.constant dense<0.000000e+00> : vector<16x8xf32>
    %152 = tpu.matmul %151, %136, %cst_53 {dimension_numbers = #tpu.dot_dimension_numbers<[1], [0], [0], [1], [0, 0, 1, 1], [], []>} : vector<16x16xbf16>, vector<16x8xbf16>, vector<16x8xf32> -> vector<16x8xf32>
    %153 = tpu.concatenate %86, %108, %130, %152 in 1 : vector<16x8xf32>, vector<16x8xf32>, vector<16x8xf32>, vector<16x8xf32> -> vector<16x32xf32>
    %c0_54 = arith.constant 0 : index
    %c0_55 = arith.constant 0 : index
    %c0_56 = arith.constant 0 : index
    %154 = vector.load %arg10[%c0_54, %c0_55, %c0_56] : memref<2x32x32xbf16, #tpu.memory_space<vmem>>, vector<1x32x32xbf16>
    %155 = vector.shape_cast %154 : vector<1x32x32xbf16> to vector<32x32xbf16>
    %156 = arith.truncf %153 : vector<16x32xf32> to vector<16x32xbf16>
    %cst_57 = arith.constant dense<0.000000e+00> : vector<16x32xf32>
    %157 = tpu.matmul %156, %155, %cst_57 {dimension_numbers = #tpu.dot_dimension_numbers<[1], [0], [0], [1], [0, 0, 1, 1], [], []>} : vector<16x32xbf16>, vector<32x32xbf16>, vector<16x32xf32> -> vector<16x32xf32>
    %c0_58 = arith.constant 0 : index
    %c0_59 = arith.constant 0 : index
    %c0_60 = arith.constant 0 : index
    %158 = vector.load %arg11[%c0_58, %c0_59, %c0_60] : memref<2x1x32xf32, #tpu.memory_space<vmem>>, vector<1x1x32xf32>
    %159 = vector.shape_cast %158 : vector<1x1x32xf32> to vector<1x32xf32>
    %160 = vector.broadcast %159 : vector<1x32xf32> to vector<16x32xf32>
    %161 = arith.addf %157, %160 : vector<16x32xf32>
    %162 = arith.addf %29, %161 : vector<16x32xf32>
    %c0_61 = arith.constant 0 : index
    %c0_62 = arith.constant 0 : index
    %c0_63 = arith.constant 0 : index
    %163 = vector.load %arg12[%c0_61, %c0_62, %c0_63] : memref<2x1x32xf32, #tpu.memory_space<vmem>>, vector<1x1x32xf32>
    %164 = vector.shape_cast %163 : vector<1x1x32xf32> to vector<1x32xf32>
    %c0_64 = arith.constant 0 : index
    %c0_65 = arith.constant 0 : index
    %c0_66 = arith.constant 0 : index
    %165 = vector.load %arg13[%c0_64, %c0_65, %c0_66] : memref<2x1x32xf32, #tpu.memory_space<vmem>>, vector<1x1x32xf32>
    %166 = vector.shape_cast %165 : vector<1x1x32xf32> to vector<1x32xf32>
    %cst_67 = arith.constant dense<0.000000e+00> : vector<16xf32>
    %167 = vector.multi_reduction <add>, %162, %cst_67 [1] : vector<16x32xf32> to vector<16xf32>
    %168 = vector.shape_cast %167 : vector<16xf32> to vector<16x1xf32>
    %cst_68 = arith.constant 3.200000e+01 : f32
    %169 = vector.broadcast %cst_68 : f32 to vector<16x1xf32>
    %170 = arith.divf %168, %169 : vector<16x1xf32>
    %171 = vector.broadcast %170 : vector<16x1xf32> to vector<16x32xf32>
    %172 = arith.subf %162, %171 : vector<16x32xf32>
    %173 = arith.mulf %172, %172 : vector<16x32xf32>
    %cst_69 = arith.constant dense<0.000000e+00> : vector<16xf32>
    %174 = vector.multi_reduction <add>, %173, %cst_69 [1] : vector<16x32xf32> to vector<16xf32>
    %175 = vector.shape_cast %174 : vector<16xf32> to vector<16x1xf32>
    %cst_70 = arith.constant 3.200000e+01 : f32
    %176 = vector.broadcast %cst_70 : f32 to vector<16x1xf32>
    %177 = arith.divf %175, %176 : vector<16x1xf32>
    %178 = vector.broadcast %170 : vector<16x1xf32> to vector<16x32xf32>
    %179 = arith.subf %162, %178 : vector<16x32xf32>
    %cst_71 = arith.constant 9.99999974E-6 : f32
    %180 = vector.broadcast %cst_71 : f32 to vector<16x1xf32>
    %181 = arith.addf %177, %180 : vector<16x1xf32>
    %182 = math.rsqrt %181 : vector<16x1xf32>
    %183 = vector.broadcast %182 : vector<16x1xf32> to vector<16x32xf32>
    %184 = arith.mulf %179, %183 : vector<16x32xf32>
    %185 = vector.broadcast %164 : vector<1x32xf32> to vector<16x32xf32>
    %186 = arith.mulf %184, %185 : vector<16x32xf32>
    %187 = vector.broadcast %166 : vector<1x32xf32> to vector<16x32xf32>
    %188 = arith.addf %186, %187 : vector<16x32xf32>
    %c0_72 = arith.constant 0 : index
    %c0_73 = arith.constant 0 : index
    %c0_74 = arith.constant 0 : index
    %189 = vector.load %arg14[%c0_72, %c0_73, %c0_74] : memref<2x32x128xbf16, #tpu.memory_space<vmem>>, vector<1x32x128xbf16>
    %190 = vector.shape_cast %189 : vector<1x32x128xbf16> to vector<32x128xbf16>
    %191 = arith.truncf %188 : vector<16x32xf32> to vector<16x32xbf16>
    %cst_75 = arith.constant dense<0.000000e+00> : vector<16x128xf32>
    %192 = tpu.matmul %191, %190, %cst_75 {dimension_numbers = #tpu.dot_dimension_numbers<[1], [0], [0], [1], [0, 0, 1, 1], [], []>} : vector<16x32xbf16>, vector<32x128xbf16>, vector<16x128xf32> -> vector<16x128xf32>
    %c0_76 = arith.constant 0 : index
    %c0_77 = arith.constant 0 : index
    %c0_78 = arith.constant 0 : index
    %193 = vector.load %arg15[%c0_76, %c0_77, %c0_78] : memref<2x1x128xf32, #tpu.memory_space<vmem>>, vector<1x1x128xf32>
    %194 = vector.shape_cast %193 : vector<1x1x128xf32> to vector<1x128xf32>
    %195 = vector.broadcast %194 : vector<1x128xf32> to vector<16x128xf32>
    %196 = arith.addf %192, %195 : vector<16x128xf32>
    %cst_79 = arith.constant 1.702000e+00 : f32
    %197 = vector.broadcast %cst_79 : f32 to vector<16x128xf32>
    %198 = arith.mulf %197, %196 : vector<16x128xf32>
    %199 = arith.negf %198 : vector<16x128xf32>
    %200 = math.exp %199 : vector<16x128xf32>
    %cst_80 = arith.constant 1.000000e+00 : f32
    %201 = vector.broadcast %cst_80 : f32 to vector<16x128xf32>
    %202 = arith.addf %201, %200 : vector<16x128xf32>
    %203 = arith.divf %201, %202 : vector<16x128xf32>
    %204 = arith.mulf %196, %203 : vector<16x128xf32>
    %c0_81 = arith.constant 0 : index
    %c0_82 = arith.constant 0 : index
    %c0_83 = arith.constant 0 : index
    %205 = vector.load %arg16[%c0_81, %c0_82, %c0_83] : memref<2x128x32xbf16, #tpu.memory_space<vmem>>, vector<1x128x32xbf16>
    %206 = vector.shape_cast %205 : vector<1x128x32xbf16> to vector<128x32xbf16>
    %207 = arith.truncf %204 : vector<16x128xf32> to vector<16x128xbf16>
    %cst_84 = arith.constant dense<0.000000e+00> : vector<16x32xf32>
    %208 = tpu.matmul %207, %206, %cst_84 {dimension_numbers = #tpu.dot_dimension_numbers<[1], [0], [0], [1], [0, 0, 1, 1], [], []>} : vector<16x128xbf16>, vector<128x32xbf16>, vector<16x32xf32> -> vector<16x32xf32>
    %c0_85 = arith.constant 0 : index
    %c0_86 = arith.constant 0 : index
    %c0_87 = arith.constant 0 : index
    %209 = vector.load %arg17[%c0_85, %c0_86, %c0_87] : memref<2x1x32xf32, #tpu.memory_space<vmem>>, vector<1x1x32xf32>
    %210 = vector.shape_cast %209 : vector<1x1x32xf32> to vector<1x32xf32>
    %211 = vector.broadcast %210 : vector<1x32xf32> to vector<16x32xf32>
    %212 = arith.addf %208, %211 : vector<16x32xf32>
    %213 = arith.addf %162, %212 : vector<16x32xf32>
    %c0_88 = arith.constant 0 : index
    %c0_89 = arith.constant 0 : index
    %c0_90 = arith.constant 0 : index
    %214 = vector.load %arg18[%c0_88, %c0_89, %c0_90] : memref<1x16x32xf32, #tpu.memory_space<vmem>>, vector<1x16x32xf32>
    %215 = vector.shape_cast %214 : vector<1x16x32xf32> to vector<16x32xf32>
    %216 = arith.mulf %213, %215 : vector<16x32xf32>
    %c1 = arith.constant 1 : index
    %c0_91 = arith.constant 0 : index
    %c0_92 = arith.constant 0 : index
    %217 = vector.load %arg6[%c1, %c0_91, %c0_92] : memref<2x1x32xf32, #tpu.memory_space<vmem>>, vector<1x1x32xf32>
    %218 = vector.shape_cast %217 : vector<1x1x32xf32> to vector<1x32xf32>
    %c1_93 = arith.constant 1 : index
    %c0_94 = arith.constant 0 : index
    %c0_95 = arith.constant 0 : index
    %219 = vector.load %arg7[%c1_93, %c0_94, %c0_95] : memref<2x1x32xf32, #tpu.memory_space<vmem>>, vector<1x1x32xf32>
    %220 = vector.shape_cast %219 : vector<1x1x32xf32> to vector<1x32xf32>
    %cst_96 = arith.constant dense<0.000000e+00> : vector<16xf32>
    %221 = vector.multi_reduction <add>, %216, %cst_96 [1] : vector<16x32xf32> to vector<16xf32>
    %222 = vector.shape_cast %221 : vector<16xf32> to vector<16x1xf32>
    %cst_97 = arith.constant 3.200000e+01 : f32
    %223 = vector.broadcast %cst_97 : f32 to vector<16x1xf32>
    %224 = arith.divf %222, %223 : vector<16x1xf32>
    %225 = vector.broadcast %224 : vector<16x1xf32> to vector<16x32xf32>
    %226 = arith.subf %216, %225 : vector<16x32xf32>
    %227 = arith.mulf %226, %226 : vector<16x32xf32>
    %cst_98 = arith.constant dense<0.000000e+00> : vector<16xf32>
    %228 = vector.multi_reduction <add>, %227, %cst_98 [1] : vector<16x32xf32> to vector<16xf32>
    %229 = vector.shape_cast %228 : vector<16xf32> to vector<16x1xf32>
    %cst_99 = arith.constant 3.200000e+01 : f32
    %230 = vector.broadcast %cst_99 : f32 to vector<16x1xf32>
    %231 = arith.divf %229, %230 : vector<16x1xf32>
    %232 = vector.broadcast %224 : vector<16x1xf32> to vector<16x32xf32>
    %233 = arith.subf %216, %232 : vector<16x32xf32>
    %cst_100 = arith.constant 9.99999974E-6 : f32
    %234 = vector.broadcast %cst_100 : f32 to vector<16x1xf32>
    %235 = arith.addf %231, %234 : vector<16x1xf32>
    %236 = math.rsqrt %235 : vector<16x1xf32>
    %237 = vector.broadcast %236 : vector<16x1xf32> to vector<16x32xf32>
    %238 = arith.mulf %233, %237 : vector<16x32xf32>
    %239 = vector.broadcast %218 : vector<1x32xf32> to vector<16x32xf32>
    %240 = arith.mulf %238, %239 : vector<16x32xf32>
    %241 = vector.broadcast %220 : vector<1x32xf32> to vector<16x32xf32>
    %242 = arith.addf %240, %241 : vector<16x32xf32>
    %c1_101 = arith.constant 1 : index
    %c0_102 = arith.constant 0 : index
    %c0_103 = arith.constant 0 : index
    %243 = vector.load %arg8[%c1_101, %c0_102, %c0_103] : memref<2x32x96xbf16, #tpu.memory_space<vmem>>, vector<1x32x96xbf16>
    %244 = vector.shape_cast %243 : vector<1x32x96xbf16> to vector<32x96xbf16>
    %245 = arith.truncf %242 : vector<16x32xf32> to vector<16x32xbf16>
    %cst_104 = arith.constant dense<0.000000e+00> : vector<16x96xf32>
    %246 = tpu.matmul %245, %244, %cst_104 {dimension_numbers = #tpu.dot_dimension_numbers<[1], [0], [0], [1], [0, 0, 1, 1], [], []>} : vector<16x32xbf16>, vector<32x96xbf16>, vector<16x96xf32> -> vector<16x96xf32>
    %c1_105 = arith.constant 1 : index
    %c0_106 = arith.constant 0 : index
    %c0_107 = arith.constant 0 : index
    %247 = vector.load %arg9[%c1_105, %c0_106, %c0_107] : memref<2x1x96xf32, #tpu.memory_space<vmem>>, vector<1x1x96xf32>
    %248 = vector.shape_cast %247 : vector<1x1x96xf32> to vector<1x96xf32>
    %249 = vector.broadcast %248 : vector<1x96xf32> to vector<16x96xf32>
    %250 = arith.addf %246, %249 : vector<16x96xf32>
    %251 = vector.extract_strided_slice %250 {offsets = [0, 0], sizes = [16, 8], strides = [1, 1]} : vector<16x96xf32> to vector<16x8xf32>
    %252 = arith.truncf %251 : vector<16x8xf32> to vector<16x8xbf16>
    %253 = vector.extract_strided_slice %250 {offsets = [0, 32], sizes = [16, 8], strides = [1, 1]} : vector<16x96xf32> to vector<16x8xf32>
    %254 = arith.truncf %253 : vector<16x8xf32> to vector<16x8xbf16>
    %255 = vector.extract_strided_slice %250 {offsets = [0, 64], sizes = [16, 8], strides = [1, 1]} : vector<16x96xf32> to vector<16x8xf32>
    %256 = arith.truncf %255 : vector<16x8xf32> to vector<16x8xbf16>
    %cst_108 = arith.constant dense<0.000000e+00> : vector<16x16xf32>
    %257 = tpu.matmul %252, %254, %cst_108 {dimension_numbers = #tpu.dot_dimension_numbers<[1], [1], [0], [0], [0, 0, 1, 0], [], []>} : vector<16x8xbf16>, vector<16x8xbf16>, vector<16x16xf32> -> vector<16x16xf32>
    %cst_109 = arith.constant 0.353553385 : f32
    %258 = vector.broadcast %cst_109 : f32 to vector<16x16xf32>
    %259 = arith.mulf %257, %258 : vector<16x16xf32>
    %260 = arith.addf %259, %30 : vector<16x16xf32>
    %cst_110 = arith.constant dense<0xFF800000> : vector<16xf32>
    %261 = vector.multi_reduction <maximumf>, %260, %cst_110 [1] : vector<16x16xf32> to vector<16xf32>
    %262 = vector.shape_cast %261 : vector<16xf32> to vector<16x1xf32>
    %263 = vector.broadcast %262 : vector<16x1xf32> to vector<16x16xf32>
    %264 = arith.subf %260, %263 : vector<16x16xf32>
    %265 = math.exp %264 : vector<16x16xf32>
    %cst_111 = arith.constant dense<0.000000e+00> : vector<16xf32>
    %266 = vector.multi_reduction <add>, %265, %cst_111 [1] : vector<16x16xf32> to vector<16xf32>
    %267 = vector.shape_cast %266 : vector<16xf32> to vector<16x1xf32>
    %268 = tpu.reciprocal %267 {approx = true} : vector<16x1xf32> -> vector<16x1xf32>
    %269 = vector.broadcast %268 : vector<16x1xf32> to vector<16x16xf32>
    %270 = arith.mulf %265, %269 : vector<16x16xf32>
    %271 = arith.truncf %270 : vector<16x16xf32> to vector<16x16xbf16>
    %cst_112 = arith.constant dense<0.000000e+00> : vector<16x8xf32>
    %272 = tpu.matmul %271, %256, %cst_112 {dimension_numbers = #tpu.dot_dimension_numbers<[1], [0], [0], [1], [0, 0, 1, 1], [], []>} : vector<16x16xbf16>, vector<16x8xbf16>, vector<16x8xf32> -> vector<16x8xf32>
    %273 = vector.extract_strided_slice %250 {offsets = [0, 8], sizes = [16, 8], strides = [1, 1]} : vector<16x96xf32> to vector<16x8xf32>
    %274 = arith.truncf %273 : vector<16x8xf32> to vector<16x8xbf16>
    %275 = vector.extract_strided_slice %250 {offsets = [0, 40], sizes = [16, 8], strides = [1, 1]} : vector<16x96xf32> to vector<16x8xf32>
    %276 = arith.truncf %275 : vector<16x8xf32> to vector<16x8xbf16>
    %277 = vector.extract_strided_slice %250 {offsets = [0, 72], sizes = [16, 8], strides = [1, 1]} : vector<16x96xf32> to vector<16x8xf32>
    %278 = arith.truncf %277 : vector<16x8xf32> to vector<16x8xbf16>
    %cst_113 = arith.constant dense<0.000000e+00> : vector<16x16xf32>
    %279 = tpu.matmul %274, %276, %cst_113 {dimension_numbers = #tpu.dot_dimension_numbers<[1], [1], [0], [0], [0, 0, 1, 0], [], []>} : vector<16x8xbf16>, vector<16x8xbf16>, vector<16x16xf32> -> vector<16x16xf32>
    %cst_114 = arith.constant 0.353553385 : f32
    %280 = vector.broadcast %cst_114 : f32 to vector<16x16xf32>
    %281 = arith.mulf %279, %280 : vector<16x16xf32>
    %282 = arith.addf %281, %30 : vector<16x16xf32>
    %cst_115 = arith.constant dense<0xFF800000> : vector<16xf32>
    %283 = vector.multi_reduction <maximumf>, %282, %cst_115 [1] : vector<16x16xf32> to vector<16xf32>
    %284 = vector.shape_cast %283 : vector<16xf32> to vector<16x1xf32>
    %285 = vector.broadcast %284 : vector<16x1xf32> to vector<16x16xf32>
    %286 = arith.subf %282, %285 : vector<16x16xf32>
    %287 = math.exp %286 : vector<16x16xf32>
    %cst_116 = arith.constant dense<0.000000e+00> : vector<16xf32>
    %288 = vector.multi_reduction <add>, %287, %cst_116 [1] : vector<16x16xf32> to vector<16xf32>
    %289 = vector.shape_cast %288 : vector<16xf32> to vector<16x1xf32>
    %290 = tpu.reciprocal %289 {approx = true} : vector<16x1xf32> -> vector<16x1xf32>
    %291 = vector.broadcast %290 : vector<16x1xf32> to vector<16x16xf32>
    %292 = arith.mulf %287, %291 : vector<16x16xf32>
    %293 = arith.truncf %292 : vector<16x16xf32> to vector<16x16xbf16>
    %cst_117 = arith.constant dense<0.000000e+00> : vector<16x8xf32>
    %294 = tpu.matmul %293, %278, %cst_117 {dimension_numbers = #tpu.dot_dimension_numbers<[1], [0], [0], [1], [0, 0, 1, 1], [], []>} : vector<16x16xbf16>, vector<16x8xbf16>, vector<16x8xf32> -> vector<16x8xf32>
    %295 = vector.extract_strided_slice %250 {offsets = [0, 16], sizes = [16, 8], strides = [1, 1]} : vector<16x96xf32> to vector<16x8xf32>
    %296 = arith.truncf %295 : vector<16x8xf32> to vector<16x8xbf16>
    %297 = vector.extract_strided_slice %250 {offsets = [0, 48], sizes = [16, 8], strides = [1, 1]} : vector<16x96xf32> to vector<16x8xf32>
    %298 = arith.truncf %297 : vector<16x8xf32> to vector<16x8xbf16>
    %299 = vector.extract_strided_slice %250 {offsets = [0, 80], sizes = [16, 8], strides = [1, 1]} : vector<16x96xf32> to vector<16x8xf32>
    %300 = arith.truncf %299 : vector<16x8xf32> to vector<16x8xbf16>
    %cst_118 = arith.constant dense<0.000000e+00> : vector<16x16xf32>
    %301 = tpu.matmul %296, %298, %cst_118 {dimension_numbers = #tpu.dot_dimension_numbers<[1], [1], [0], [0], [0, 0, 1, 0], [], []>} : vector<16x8xbf16>, vector<16x8xbf16>, vector<16x16xf32> -> vector<16x16xf32>
    %cst_119 = arith.constant 0.353553385 : f32
    %302 = vector.broadcast %cst_119 : f32 to vector<16x16xf32>
    %303 = arith.mulf %301, %302 : vector<16x16xf32>
    %304 = arith.addf %303, %30 : vector<16x16xf32>
    %cst_120 = arith.constant dense<0xFF800000> : vector<16xf32>
    %305 = vector.multi_reduction <maximumf>, %304, %cst_120 [1] : vector<16x16xf32> to vector<16xf32>
    %306 = vector.shape_cast %305 : vector<16xf32> to vector<16x1xf32>
    %307 = vector.broadcast %306 : vector<16x1xf32> to vector<16x16xf32>
    %308 = arith.subf %304, %307 : vector<16x16xf32>
    %309 = math.exp %308 : vector<16x16xf32>
    %cst_121 = arith.constant dense<0.000000e+00> : vector<16xf32>
    %310 = vector.multi_reduction <add>, %309, %cst_121 [1] : vector<16x16xf32> to vector<16xf32>
    %311 = vector.shape_cast %310 : vector<16xf32> to vector<16x1xf32>
    %312 = tpu.reciprocal %311 {approx = true} : vector<16x1xf32> -> vector<16x1xf32>
    %313 = vector.broadcast %312 : vector<16x1xf32> to vector<16x16xf32>
    %314 = arith.mulf %309, %313 : vector<16x16xf32>
    %315 = arith.truncf %314 : vector<16x16xf32> to vector<16x16xbf16>
    %cst_122 = arith.constant dense<0.000000e+00> : vector<16x8xf32>
    %316 = tpu.matmul %315, %300, %cst_122 {dimension_numbers = #tpu.dot_dimension_numbers<[1], [0], [0], [1], [0, 0, 1, 1], [], []>} : vector<16x16xbf16>, vector<16x8xbf16>, vector<16x8xf32> -> vector<16x8xf32>
    %317 = vector.extract_strided_slice %250 {offsets = [0, 24], sizes = [16, 8], strides = [1, 1]} : vector<16x96xf32> to vector<16x8xf32>
    %318 = arith.truncf %317 : vector<16x8xf32> to vector<16x8xbf16>
    %319 = vector.extract_strided_slice %250 {offsets = [0, 56], sizes = [16, 8], strides = [1, 1]} : vector<16x96xf32> to vector<16x8xf32>
    %320 = arith.truncf %319 : vector<16x8xf32> to vector<16x8xbf16>
    %321 = vector.extract_strided_slice %250 {offsets = [0, 88], sizes = [16, 8], strides = [1, 1]} : vector<16x96xf32> to vector<16x8xf32>
    %322 = arith.truncf %321 : vector<16x8xf32> to vector<16x8xbf16>
    %cst_123 = arith.constant dense<0.000000e+00> : vector<16x16xf32>
    %323 = tpu.matmul %318, %320, %cst_123 {dimension_numbers = #tpu.dot_dimension_numbers<[1], [1], [0], [0], [0, 0, 1, 0], [], []>} : vector<16x8xbf16>, vector<16x8xbf16>, vector<16x16xf32> -> vector<16x16xf32>
    %cst_124 = arith.constant 0.353553385 : f32
    %324 = vector.broadcast %cst_124 : f32 to vector<16x16xf32>
    %325 = arith.mulf %323, %324 : vector<16x16xf32>
    %326 = arith.addf %325, %30 : vector<16x16xf32>
    %cst_125 = arith.constant dense<0xFF800000> : vector<16xf32>
    %327 = vector.multi_reduction <maximumf>, %326, %cst_125 [1] : vector<16x16xf32> to vector<16xf32>
    %328 = vector.shape_cast %327 : vector<16xf32> to vector<16x1xf32>
    %329 = vector.broadcast %328 : vector<16x1xf32> to vector<16x16xf32>
    %330 = arith.subf %326, %329 : vector<16x16xf32>
    %331 = math.exp %330 : vector<16x16xf32>
    %cst_126 = arith.constant dense<0.000000e+00> : vector<16xf32>
    %332 = vector.multi_reduction <add>, %331, %cst_126 [1] : vector<16x16xf32> to vector<16xf32>
    %333 = vector.shape_cast %332 : vector<16xf32> to vector<16x1xf32>
    %334 = tpu.reciprocal %333 {approx = true} : vector<16x1xf32> -> vector<16x1xf32>
    %335 = vector.broadcast %334 : vector<16x1xf32> to vector<16x16xf32>
    %336 = arith.mulf %331, %335 : vector<16x16xf32>
    %337 = arith.truncf %336 : vector<16x16xf32> to vector<16x16xbf16>
    %cst_127 = arith.constant dense<0.000000e+00> : vector<16x8xf32>
    %338 = tpu.matmul %337, %322, %cst_127 {dimension_numbers = #tpu.dot_dimension_numbers<[1], [0], [0], [1], [0, 0, 1, 1], [], []>} : vector<16x16xbf16>, vector<16x8xbf16>, vector<16x8xf32> -> vector<16x8xf32>
    %339 = tpu.concatenate %272, %294, %316, %338 in 1 : vector<16x8xf32>, vector<16x8xf32>, vector<16x8xf32>, vector<16x8xf32> -> vector<16x32xf32>
    %c1_128 = arith.constant 1 : index
    %c0_129 = arith.constant 0 : index
    %c0_130 = arith.constant 0 : index
    %340 = vector.load %arg10[%c1_128, %c0_129, %c0_130] : memref<2x32x32xbf16, #tpu.memory_space<vmem>>, vector<1x32x32xbf16>
    %341 = vector.shape_cast %340 : vector<1x32x32xbf16> to vector<32x32xbf16>
    %342 = arith.truncf %339 : vector<16x32xf32> to vector<16x32xbf16>
    %cst_131 = arith.constant dense<0.000000e+00> : vector<16x32xf32>
    %343 = tpu.matmul %342, %341, %cst_131 {dimension_numbers = #tpu.dot_dimension_numbers<[1], [0], [0], [1], [0, 0, 1, 1], [], []>} : vector<16x32xbf16>, vector<32x32xbf16>, vector<16x32xf32> -> vector<16x32xf32>
    %c1_132 = arith.constant 1 : index
    %c0_133 = arith.constant 0 : index
    %c0_134 = arith.constant 0 : index
    %344 = vector.load %arg11[%c1_132, %c0_133, %c0_134] : memref<2x1x32xf32, #tpu.memory_space<vmem>>, vector<1x1x32xf32>
    %345 = vector.shape_cast %344 : vector<1x1x32xf32> to vector<1x32xf32>
    %346 = vector.broadcast %345 : vector<1x32xf32> to vector<16x32xf32>
    %347 = arith.addf %343, %346 : vector<16x32xf32>
    %348 = arith.addf %216, %347 : vector<16x32xf32>
    %c1_135 = arith.constant 1 : index
    %c0_136 = arith.constant 0 : index
    %c0_137 = arith.constant 0 : index
    %349 = vector.load %arg12[%c1_135, %c0_136, %c0_137] : memref<2x1x32xf32, #tpu.memory_space<vmem>>, vector<1x1x32xf32>
    %350 = vector.shape_cast %349 : vector<1x1x32xf32> to vector<1x32xf32>
    %c1_138 = arith.constant 1 : index
    %c0_139 = arith.constant 0 : index
    %c0_140 = arith.constant 0 : index
    %351 = vector.load %arg13[%c1_138, %c0_139, %c0_140] : memref<2x1x32xf32, #tpu.memory_space<vmem>>, vector<1x1x32xf32>
    %352 = vector.shape_cast %351 : vector<1x1x32xf32> to vector<1x32xf32>
    %cst_141 = arith.constant dense<0.000000e+00> : vector<16xf32>
    %353 = vector.multi_reduction <add>, %348, %cst_141 [1] : vector<16x32xf32> to vector<16xf32>
    %354 = vector.shape_cast %353 : vector<16xf32> to vector<16x1xf32>
    %cst_142 = arith.constant 3.200000e+01 : f32
    %355 = vector.broadcast %cst_142 : f32 to vector<16x1xf32>
    %356 = arith.divf %354, %355 : vector<16x1xf32>
    %357 = vector.broadcast %356 : vector<16x1xf32> to vector<16x32xf32>
    %358 = arith.subf %348, %357 : vector<16x32xf32>
    %359 = arith.mulf %358, %358 : vector<16x32xf32>
    %cst_143 = arith.constant dense<0.000000e+00> : vector<16xf32>
    %360 = vector.multi_reduction <add>, %359, %cst_143 [1] : vector<16x32xf32> to vector<16xf32>
    %361 = vector.shape_cast %360 : vector<16xf32> to vector<16x1xf32>
    %cst_144 = arith.constant 3.200000e+01 : f32
    %362 = vector.broadcast %cst_144 : f32 to vector<16x1xf32>
    %363 = arith.divf %361, %362 : vector<16x1xf32>
    %364 = vector.broadcast %356 : vector<16x1xf32> to vector<16x32xf32>
    %365 = arith.subf %348, %364 : vector<16x32xf32>
    %cst_145 = arith.constant 9.99999974E-6 : f32
    %366 = vector.broadcast %cst_145 : f32 to vector<16x1xf32>
    %367 = arith.addf %363, %366 : vector<16x1xf32>
    %368 = math.rsqrt %367 : vector<16x1xf32>
    %369 = vector.broadcast %368 : vector<16x1xf32> to vector<16x32xf32>
    %370 = arith.mulf %365, %369 : vector<16x32xf32>
    %371 = vector.broadcast %350 : vector<1x32xf32> to vector<16x32xf32>
    %372 = arith.mulf %370, %371 : vector<16x32xf32>
    %373 = vector.broadcast %352 : vector<1x32xf32> to vector<16x32xf32>
    %374 = arith.addf %372, %373 : vector<16x32xf32>
    %c1_146 = arith.constant 1 : index
    %c0_147 = arith.constant 0 : index
    %c0_148 = arith.constant 0 : index
    %375 = vector.load %arg14[%c1_146, %c0_147, %c0_148] : memref<2x32x128xbf16, #tpu.memory_space<vmem>>, vector<1x32x128xbf16>
    %376 = vector.shape_cast %375 : vector<1x32x128xbf16> to vector<32x128xbf16>
    %377 = arith.truncf %374 : vector<16x32xf32> to vector<16x32xbf16>
    %cst_149 = arith.constant dense<0.000000e+00> : vector<16x128xf32>
    %378 = tpu.matmul %377, %376, %cst_149 {dimension_numbers = #tpu.dot_dimension_numbers<[1], [0], [0], [1], [0, 0, 1, 1], [], []>} : vector<16x32xbf16>, vector<32x128xbf16>, vector<16x128xf32> -> vector<16x128xf32>
    %c1_150 = arith.constant 1 : index
    %c0_151 = arith.constant 0 : index
    %c0_152 = arith.constant 0 : index
    %379 = vector.load %arg15[%c1_150, %c0_151, %c0_152] : memref<2x1x128xf32, #tpu.memory_space<vmem>>, vector<1x1x128xf32>
    %380 = vector.shape_cast %379 : vector<1x1x128xf32> to vector<1x128xf32>
    %381 = vector.broadcast %380 : vector<1x128xf32> to vector<16x128xf32>
    %382 = arith.addf %378, %381 : vector<16x128xf32>
    %cst_153 = arith.constant 1.702000e+00 : f32
    %383 = vector.broadcast %cst_153 : f32 to vector<16x128xf32>
    %384 = arith.mulf %383, %382 : vector<16x128xf32>
    %385 = arith.negf %384 : vector<16x128xf32>
    %386 = math.exp %385 : vector<16x128xf32>
    %cst_154 = arith.constant 1.000000e+00 : f32
    %387 = vector.broadcast %cst_154 : f32 to vector<16x128xf32>
    %388 = arith.addf %387, %386 : vector<16x128xf32>
    %389 = arith.divf %387, %388 : vector<16x128xf32>
    %390 = arith.mulf %382, %389 : vector<16x128xf32>
    %c1_155 = arith.constant 1 : index
    %c0_156 = arith.constant 0 : index
    %c0_157 = arith.constant 0 : index
    %391 = vector.load %arg16[%c1_155, %c0_156, %c0_157] : memref<2x128x32xbf16, #tpu.memory_space<vmem>>, vector<1x128x32xbf16>
    %392 = vector.shape_cast %391 : vector<1x128x32xbf16> to vector<128x32xbf16>
    %393 = arith.truncf %390 : vector<16x128xf32> to vector<16x128xbf16>
    %cst_158 = arith.constant dense<0.000000e+00> : vector<16x32xf32>
    %394 = tpu.matmul %393, %392, %cst_158 {dimension_numbers = #tpu.dot_dimension_numbers<[1], [0], [0], [1], [0, 0, 1, 1], [], []>} : vector<16x128xbf16>, vector<128x32xbf16>, vector<16x32xf32> -> vector<16x32xf32>
    %c1_159 = arith.constant 1 : index
    %c0_160 = arith.constant 0 : index
    %c0_161 = arith.constant 0 : index
    %395 = vector.load %arg17[%c1_159, %c0_160, %c0_161] : memref<2x1x32xf32, #tpu.memory_space<vmem>>, vector<1x1x32xf32>
    %396 = vector.shape_cast %395 : vector<1x1x32xf32> to vector<1x32xf32>
    %397 = vector.broadcast %396 : vector<1x32xf32> to vector<16x32xf32>
    %398 = arith.addf %394, %397 : vector<16x32xf32>
    %399 = arith.addf %348, %398 : vector<16x32xf32>
    %400 = vector.extract_strided_slice %399 {offsets = [0, 0], sizes = [1, 32], strides = [1, 1]} : vector<16x32xf32> to vector<1x32xf32>
    %401 = vector.extract_strided_slice %399 {offsets = [8, 0], sizes = [1, 32], strides = [1, 1]} : vector<16x32xf32> to vector<1x32xf32>
    %402 = tpu.concatenate %400, %401 in 0 : vector<1x32xf32>, vector<1x32xf32> -> vector<2x32xf32>
    %c0_162 = arith.constant 0 : index
    %c0_163 = arith.constant 0 : index
    %403 = vector.load %arg20[%c0_162, %c0_163] : memref<1x32xf32, #tpu.memory_space<vmem>>, vector<1x32xf32>
    %c0_164 = arith.constant 0 : index
    %c0_165 = arith.constant 0 : index
    %404 = vector.load %arg21[%c0_164, %c0_165] : memref<1x32xf32, #tpu.memory_space<vmem>>, vector<1x32xf32>
    %cst_166 = arith.constant dense<0.000000e+00> : vector<2xf32>
    %405 = vector.multi_reduction <add>, %402, %cst_166 [1] : vector<2x32xf32> to vector<2xf32>
    %406 = vector.shape_cast %405 : vector<2xf32> to vector<2x1xf32>
    %cst_167 = arith.constant 3.200000e+01 : f32
    %407 = vector.broadcast %cst_167 : f32 to vector<2x1xf32>
    %408 = arith.divf %406, %407 : vector<2x1xf32>
    %409 = vector.broadcast %408 : vector<2x1xf32> to vector<2x32xf32>
    %410 = arith.subf %402, %409 : vector<2x32xf32>
    %411 = arith.mulf %410, %410 : vector<2x32xf32>
    %cst_168 = arith.constant dense<0.000000e+00> : vector<2xf32>
    %412 = vector.multi_reduction <add>, %411, %cst_168 [1] : vector<2x32xf32> to vector<2xf32>
    %413 = vector.shape_cast %412 : vector<2xf32> to vector<2x1xf32>
    %cst_169 = arith.constant 3.200000e+01 : f32
    %414 = vector.broadcast %cst_169 : f32 to vector<2x1xf32>
    %415 = arith.divf %413, %414 : vector<2x1xf32>
    %416 = vector.broadcast %408 : vector<2x1xf32> to vector<2x32xf32>
    %417 = arith.subf %402, %416 : vector<2x32xf32>
    %cst_170 = arith.constant 9.99999974E-6 : f32
    %418 = vector.broadcast %cst_170 : f32 to vector<2x1xf32>
    %419 = arith.addf %415, %418 : vector<2x1xf32>
    %420 = math.rsqrt %419 : vector<2x1xf32>
    %421 = vector.broadcast %420 : vector<2x1xf32> to vector<2x32xf32>
    %422 = arith.mulf %417, %421 : vector<2x32xf32>
    %423 = vector.broadcast %403 : vector<1x32xf32> to vector<2x32xf32>
    %424 = arith.mulf %422, %423 : vector<2x32xf32>
    %425 = vector.broadcast %404 : vector<1x32xf32> to vector<2x32xf32>
    %426 = arith.addf %424, %425 : vector<2x32xf32>
    %c0_171 = arith.constant 0 : index
    %c0_172 = arith.constant 0 : index
    %427 = vector.load %arg22[%c0_171, %c0_172] : memref<32x16xbf16, #tpu.memory_space<vmem>>, vector<32x16xbf16>
    %428 = arith.truncf %426 : vector<2x32xf32> to vector<2x32xbf16>
    %cst_173 = arith.constant dense<0.000000e+00> : vector<2x16xf32>
    %429 = tpu.matmul %428, %427, %cst_173 {dimension_numbers = #tpu.dot_dimension_numbers<[1], [0], [0], [1], [0, 0, 1, 1], [], []>} : vector<2x32xbf16>, vector<32x16xbf16>, vector<2x16xf32> -> vector<2x16xf32>
    %c0_174 = arith.constant 0 : index
    %c0_175 = arith.constant 0 : index
    %430 = vector.load %arg23[%c0_174, %c0_175] : memref<2x16xf32, #tpu.memory_space<vmem>>, vector<2x16xf32>
    tpu.vector_store %arg23[%c0_174, %c0_175], %429 {strides = array<i32>} : memref<2x16xf32, #tpu.memory_space<vmem>>, vector<2x16xf32>,
    return
  }
  func.func @transform_0(%arg0: i32) -> (i32, i32) {
    %c0_i32 = arith.constant 0 : i32
    %c0_i32_0 = arith.constant 0 : i32
    %c0_i32_1 = arith.constant 0 : i32
    return %c0_i32, %c0_i32_0 : i32, i32
  }
  func.func @transform_1(%arg0: i32) -> (i32, i32) {
    %c0_i32 = arith.constant 0 : i32
    %c0_i32_0 = arith.constant 0 : i32
    %c0_i32_1 = arith.constant 0 : i32
    return %c0_i32, %c0_i32_0 : i32, i32
  }
  func.func @transform_2(%arg0: i32) -> (i32, i32) {
    %c0_i32 = arith.constant 0 : i32
    %c0_i32_0 = arith.constant 0 : i32
    %c0_i32_1 = arith.constant 0 : i32
    return %c0_i32, %c0_i32_0 : i32, i32
  }
  func.func @transform_3(%arg0: i32) -> (i32, i32) {
    %c0_i32 = arith.constant 0 : i32
    %c0_i32_0 = arith.constant 0 : i32
    %c0_i32_1 = arith.constant 0 : i32
    return %c0_i32, %c0_i32_0 : i32, i32
  }
  func.func @transform_4(%arg0: i32) -> (i32, i32) {
    %c0_i32 = arith.constant 0 : i32
    %c0_i32_0 = arith.constant 0 : i32
    %c0_i32_1 = arith.constant 0 : i32
    return %c0_i32, %c0_i32_0 : i32, i32
  }
  func.func @transform_5(%arg0: i32) -> (i32, i32, i32) {
    %c0_i32 = arith.constant 0 : i32
    %c0_i32_0 = arith.constant 0 : i32
    %c0_i32_1 = arith.constant 0 : i32
    %c0_i32_2 = arith.constant 0 : i32
    return %c0_i32, %c0_i32_0, %c0_i32_1 : i32, i32, i32
  }
  func.func @transform_6(%arg0: i32) -> (i32, i32, i32) {
    %c0_i32 = arith.constant 0 : i32
    %c0_i32_0 = arith.constant 0 : i32
    %c0_i32_1 = arith.constant 0 : i32
    %c0_i32_2 = arith.constant 0 : i32
    return %c0_i32, %c0_i32_0, %c0_i32_1 : i32, i32, i32
  }
  func.func @transform_7(%arg0: i32) -> (i32, i32, i32) {
    %c0_i32 = arith.constant 0 : i32
    %c0_i32_0 = arith.constant 0 : i32
    %c0_i32_1 = arith.constant 0 : i32
    %c0_i32_2 = arith.constant 0 : i32
    return %c0_i32, %c0_i32_0, %c0_i32_1 : i32, i32, i32
  }
  func.func @transform_8(%arg0: i32) -> (i32, i32, i32) {
    %c0_i32 = arith.constant 0 : i32
    %c0_i32_0 = arith.constant 0 : i32
    %c0_i32_1 = arith.constant 0 : i32
    %c0_i32_2 = arith.constant 0 : i32
    return %c0_i32, %c0_i32_0, %c0_i32_1 : i32, i32, i32
  }
  func.func @transform_9(%arg0: i32) -> (i32, i32, i32) {
    %c0_i32 = arith.constant 0 : i32
    %c0_i32_0 = arith.constant 0 : i32
    %c0_i32_1 = arith.constant 0 : i32
    %c0_i32_2 = arith.constant 0 : i32
    return %c0_i32, %c0_i32_0, %c0_i32_1 : i32, i32, i32
  }
  func.func @transform_10(%arg0: i32) -> (i32, i32, i32) {
    %c0_i32 = arith.constant 0 : i32
    %c0_i32_0 = arith.constant 0 : i32
    %c0_i32_1 = arith.constant 0 : i32
    %c0_i32_2 = arith.constant 0 : i32
    return %c0_i32, %c0_i32_0, %c0_i32_1 : i32, i32, i32
  }
  func.func @transform_11(%arg0: i32) -> (i32, i32, i32) {
    %c0_i32 = arith.constant 0 : i32
    %c0_i32_0 = arith.constant 0 : i32
    %c0_i32_1 = arith.constant 0 : i32
    %c0_i32_2 = arith.constant 0 : i32
    return %c0_i32, %c0_i32_0, %c0_i32_1 : i32, i32, i32
  }
  func.func @transform_12(%arg0: i32) -> (i32, i32, i32) {
    %c0_i32 = arith.constant 0 : i32
    %c0_i32_0 = arith.constant 0 : i32
    %c0_i32_1 = arith.constant 0 : i32
    %c0_i32_2 = arith.constant 0 : i32
    return %c0_i32, %c0_i32_0, %c0_i32_1 : i32, i32, i32
  }
  func.func @transform_13(%arg0: i32) -> (i32, i32, i32) {
    %c0_i32 = arith.constant 0 : i32
    %c0_i32_0 = arith.constant 0 : i32
    %c0_i32_1 = arith.constant 0 : i32
    %c0_i32_2 = arith.constant 0 : i32
    return %c0_i32, %c0_i32_0, %c0_i32_1 : i32, i32, i32
  }
  func.func @transform_14(%arg0: i32) -> (i32, i32, i32) {
    %c0_i32 = arith.constant 0 : i32
    %c0_i32_0 = arith.constant 0 : i32
    %c0_i32_1 = arith.constant 0 : i32
    %c0_i32_2 = arith.constant 0 : i32
    return %c0_i32, %c0_i32_0, %c0_i32_1 : i32, i32, i32
  }
  func.func @transform_15(%arg0: i32) -> (i32, i32, i32) {
    %c0_i32 = arith.constant 0 : i32
    %c0_i32_0 = arith.constant 0 : i32
    %c0_i32_1 = arith.constant 0 : i32
    %c0_i32_2 = arith.constant 0 : i32
    return %c0_i32, %c0_i32_0, %c0_i32_1 : i32, i32, i32
  }
  func.func @transform_16(%arg0: i32) -> (i32, i32, i32) {
    %c0_i32 = arith.constant 0 : i32
    %c0_i32_0 = arith.constant 0 : i32
    %c0_i32_1 = arith.constant 0 : i32
    %c0_i32_2 = arith.constant 0 : i32
    return %c0_i32, %c0_i32_0, %c0_i32_1 : i32, i32, i32
  }
  func.func @transform_17(%arg0: i32) -> (i32, i32, i32) {
    %c0_i32 = arith.constant 0 : i32
    %c0_i32_0 = arith.constant 0 : i32
    %c0_i32_1 = arith.constant 0 : i32
    %c0_i32_2 = arith.constant 0 : i32
    return %c0_i32, %c0_i32_0, %c0_i32_1 : i32, i32, i32
  }
  func.func @transform_18(%arg0: i32) -> (i32, i32) {
    %c0_i32 = arith.constant 0 : i32
    %c0_i32_0 = arith.constant 0 : i32
    %c0_i32_1 = arith.constant 0 : i32
    return %c0_i32, %c0_i32_0 : i32, i32
  }
  func.func @transform_19(%arg0: i32) -> (i32, i32) {
    %c0_i32 = arith.constant 0 : i32
    %c0_i32_0 = arith.constant 0 : i32
    %c0_i32_1 = arith.constant 0 : i32
    return %c0_i32, %c0_i32_0 : i32, i32
  }
  func.func @transform_20(%arg0: i32) -> (i32, i32) {
    %c0_i32 = arith.constant 0 : i32
    %c0_i32_0 = arith.constant 0 : i32
    %c0_i32_1 = arith.constant 0 : i32
    return %c0_i32, %c0_i32_0 : i32, i32
  }
  func.func @transform_21(%arg0: i32) -> (i32, i32) {
    %c0_i32 = arith.constant 0 : i32
    %c0_i32_0 = arith.constant 0 : i32
    %c0_i32_1 = arith.constant 0 : i32
    return %c0_i32, %c0_i32_0 : i32, i32
  }
  func.func @transform_22(%arg0: i32) -> (i32, i32) {
    %c0_i32 = arith.constant 0 : i32
    %c0_i32_0 = arith.constant 0 : i32
    %c0_i32_1 = arith.constant 0 : i32
    return %c0_i32, %c0_i32_0 : i32, i32
  }
}

</mosaic_0001>

<llo_original>
// kernel: masked_vit_forward.1
$region0: #{masked_vit_forward.1}
  #allocation0 [shape = 'u32[]', space=smem, size = 0x4, offset = 0x4, fixed_abs, tag = 'smem constant byte address 0x4 - core index']
  #allocation1 [shape = 'u32[144,128]{1,0:T(1,128)}', space=vmem, size = 0x12000, scoped, tag = 'internal scratch']
  %s0 = inlined_call_operand.vmem [shape: f32[16,192], index: 0, kind: input, shape index: {}]
  %s1 = inlined_call_operand.vmem [shape: bf16[192,32], index: 1, kind: input, shape index: {}]
  %s2 = inlined_call_operand.vmem [shape: f32[16,32], index: 2, kind: input, shape index: {}]
  %s3 = inlined_call_operand.vmem [shape: f32[1,32], index: 3, kind: input, shape index: {}]
  %s4 = inlined_call_operand.vmem [shape: f32[1,32], index: 4, kind: input, shape index: {}]
  %s5 = inlined_call_operand.vmem [shape: f32[2,1,32], index: 5, kind: input, shape index: {}]
  %s6 = inlined_call_operand.vmem [shape: f32[2,1,32], index: 6, kind: input, shape index: {}]
  %s7 = inlined_call_operand.vmem [shape: bf16[2,32,96], index: 7, kind: input, shape index: {}]
  %s8 = inlined_call_operand.vmem [shape: f32[2,1,96], index: 8, kind: input, shape index: {}]
  %s9 = inlined_call_operand.vmem [shape: bf16[2,32,32], index: 9, kind: input, shape index: {}]
  %s10 = inlined_call_operand.vmem [shape: f32[2,1,32], index: 10, kind: input, shape index: {}]
  %s11 = inlined_call_operand.vmem [shape: f32[2,1,32], index: 11, kind: input, shape index: {}]
  %s12 = inlined_call_operand.vmem [shape: f32[2,1,32], index: 12, kind: input, shape index: {}]
  %s13 = inlined_call_operand.vmem [shape: bf16[2,32,128], index: 13, kind: input, shape index: {}]
  %s14 = inlined_call_operand.vmem [shape: f32[2,1,128], index: 14, kind: input, shape index: {}]
  %s15 = inlined_call_operand.vmem [shape: bf16[2,128,32], index: 15, kind: input, shape index: {}]
  %s16 = inlined_call_operand.vmem [shape: f32[2,1,32], index: 16, kind: input, shape index: {}]
  %s17 = inlined_call_operand.vmem [shape: f32[1,16,32], index: 17, kind: input, shape index: {}]
  %s18 = inlined_call_operand.vmem [shape: f32[16,16], index: 18, kind: input, shape index: {}]
  %s19 = inlined_call_operand.vmem [shape: f32[1,32], index: 19, kind: input, shape index: {}]
  %s20 = inlined_call_operand.vmem [shape: f32[1,32], index: 20, kind: input, shape index: {}]
  %s21 = inlined_call_operand.vmem [shape: bf16[32,16], index: 21, kind: input, shape index: {}]
  %s22 = inlined_call_operand.hbm [shape: f32[2,16], index: 22, kind: output, shape index: {}]
  %s23 = sld [smem:[#allocation0]]
  $region98: #{masked_vit_forward.1} parent=0
    _
  %s25 = ssub.s32 1, %s23
  %s26 = scalar_select 0, %s25, %s23
  $region1: #{masked_vit_forward.1} parent=0
    #allocation2 [shape = 'u8[1024]{0}', space=vmem, size = 0x400, scoped, tag = 'output window, operand 0, single buffered']
    #allocation3 [shape = 's32[1]{0}', space=sflag, size = 0x4, scoped, tag = 'scoped memory for masked_vit_forward.1']
    %27 = vsyncpa [#allocation3], 0
    // Predicated region
    $region2: #{masked_vit_forward.1} parent=1 // pred_check
      _
    $region3: #{masked_vit_forward.1} parent=1 // pred_check_branch
      %29 = sbr.rel (0) target = $region5
    $region4: #{masked_vit_forward.1} parent=1 // pred_region
      _
    $region5: #{masked_vit_forward.1} parent=1 // pred_fallthru
      _
    // Predicated region
    $region6: #{masked_vit_forward.1} parent=1 // pred_check
      _
    $region7: #{masked_vit_forward.1} parent=1 // pred_check_branch
      %31 = sbr.rel (0) target = $region9
    $region8: #{masked_vit_forward.1} parent=1 // pred_region
      _
    $region9: #{masked_vit_forward.1} parent=1 // pred_fallthru
      _
    // Predicated region
    $region10: #{masked_vit_forward.1} parent=1 // pred_check
      _
    $region11: #{masked_vit_forward.1} parent=1 // pred_check_branch
      %33 = sbr.rel (0) target = $region13
    $region12: #{masked_vit_forward.1} parent=1 // pred_region
      _
    $region13: #{masked_vit_forward.1} parent=1 // pred_fallthru
      _
    // Predicated region
    $region14: #{masked_vit_forward.1} parent=1 // pred_check
      _
    $region15: #{masked_vit_forward.1} parent=1 // pred_check_branch
      %35 = sbr.rel (0) target = $region17
    $region16: #{masked_vit_forward.1} parent=1 // pred_region
      _
    $region17: #{masked_vit_forward.1} parent=1 // pred_fallthru
      _
    // Predicated region
    $region18: #{masked_vit_forward.1} parent=1 // pred_check
      _
    $region19: #{masked_vit_forward.1} parent=1 // pred_check_branch
      %37 = sbr.rel (0) target = $region21
    $region20: #{masked_vit_forward.1} parent=1 // pred_region
      _
    $region21: #{masked_vit_forward.1} parent=1 // pred_fallthru
      _
    // Predicated region
    $region22: #{masked_vit_forward.1} parent=1 // pred_check
      _
    $region23: #{masked_vit_forward.1} parent=1 // pred_check_branch
      %39 = sbr.rel (0) target = $region25
    $region24: #{masked_vit_forward.1} parent=1 // pred_region
      _
    $region25: #{masked_vit_forward.1} parent=1 // pred_fallthru
      _
    // Predicated region
    $region26: #{masked_vit_forward.1} parent=1 // pred_check
      _
    $region27: #{masked_vit_forward.1} parent=1 // pred_check_branch
      %41 = sbr.rel (0) target = $region29
    $region28: #{masked_vit_forward.1} parent=1 // pred_region
      _
    $region29: #{masked_vit_forward.1} parent=1 // pred_fallthru
      _
    // Predicated region
    $region30: #{masked_vit_forward.1} parent=1 // pred_check
      _
    $region31: #{masked_vit_forward.1} parent=1 // pred_check_branch
      %43 = sbr.rel (0) target = $region33
    $region32: #{masked_vit_forward.1} parent=1 // pred_region
      _
    $region33: #{masked_vit_forward.1} parent=1 // pred_fallthru
      _
    // Predicated region
    $region34: #{masked_vit_forward.1} parent=1 // pred_check
      _
    $region35: #{masked_vit_forward.1} parent=1 // pred_check_branch
      %45 = sbr.rel (0) target = $region37
    $region36: #{masked_vit_forward.1} parent=1 // pred_region
      _
    $region37: #{masked_vit_forward.1} parent=1 // pred_fallthru
      _
    // Predicated region
    $region38: #{masked_vit_forward.1} parent=1 // pred_check
      _
    $region39: #{masked_vit_forward.1} parent=1 // pred_check_branch
      %47 = sbr.rel (0) target = $region41
    $region40: #{masked_vit_forward.1} parent=1 // pred_region
      _
    $region41: #{masked_vit_forward.1} parent=1 // pred_fallthru
      _
    // Predicated region
    $region42: #{masked_vit_forward.1} parent=1 // pred_check
      _
    $region43: #{masked_vit_forward.1} parent=1 // pred_check_branch
      %49 = sbr.rel (0) target = $region45
    $region44: #{masked_vit_forward.1} parent=1 // pred_region
      _
    $region45: #{masked_vit_forward.1} parent=1 // pred_fallthru
      _
    // Predicated region
    $region46: #{masked_vit_forward.1} parent=1 // pred_check
      _
    $region47: #{masked_vit_forward.1} parent=1 // pred_check_branch
      %51 = sbr.rel (0) target = $region49
    $region48: #{masked_vit_forward.1} parent=1 // pred_region
      _
    $region49: #{masked_vit_forward.1} parent=1 // pred_fallthru
      _
    // Predicated region
    $region50: #{masked_vit_forward.1} parent=1 // pred_check
      _
    $region51: #{masked_vit_forward.1} parent=1 // pred_check_branch
      %53 = sbr.rel (0) target = $region53
    $region52: #{masked_vit_forward.1} parent=1 // pred_region
      _
    $region53: #{masked_vit_forward.1} parent=1 // pred_fallthru
      _
    // Predicated region
    $region54: #{masked_vit_forward.1} parent=1 // pred_check
      _
    $region55: #{masked_vit_forward.1} parent=1 // pred_check_branch
      %55 = sbr.rel (0) target = $region57
    $region56: #{masked_vit_forward.1} parent=1 // pred_region
      _
    $region57: #{masked_vit_forward.1} parent=1 // pred_fallthru
      _
    // Predicated region
    $region58: #{masked_vit_forward.1} parent=1 // pred_check
      _
    $region59: #{masked_vit_forward.1} parent=1 // pred_check_branch
      %57 = sbr.rel (0) target = $region61
    $region60: #{masked_vit_forward.1} parent=1 // pred_region
      _
    $region61: #{masked_vit_forward.1} parent=1 // pred_fallthru
      _
    // Predicated region
    $region62: #{masked_vit_forward.1} parent=1 // pred_check
      _
    $region63: #{masked_vit_forward.1} parent=1 // pred_check_branch
      %59 = sbr.rel (0) target = $region65
    $region64: #{masked_vit_forward.1} parent=1 // pred_region
      _
    $region65: #{masked_vit_forward.1} parent=1 // pred_fallthru
      _
    // Predicated region
    $region66: #{masked_vit_forward.1} parent=1 // pred_check
      _
    $region67: #{masked_vit_forward.1} parent=1 // pred_check_branch
      %61 = sbr.rel (0) target = $region69
    $region68: #{masked_vit_forward.1} parent=1 // pred_region
      _
    $region69: #{masked_vit_forward.1} parent=1 // pred_fallthru
      _
    // Predicated region
    $region70: #{masked_vit_forward.1} parent=1 // pred_check
      _
    $region71: #{masked_vit_forward.1} parent=1 // pred_check_branch
      %63 = sbr.rel (0) target = $region73
    $region72: #{masked_vit_forward.1} parent=1 // pred_region
      _
    $region73: #{masked_vit_forward.1} parent=1 // pred_fallthru
      _
    // Predicated region
    $region74: #{masked_vit_forward.1} parent=1 // pred_check
      _
    $region75: #{masked_vit_forward.1} parent=1 // pred_check_branch
      %65 = sbr.rel (0) target = $region77
    $region76: #{masked_vit_forward.1} parent=1 // pred_region
      _
    $region77: #{masked_vit_forward.1} parent=1 // pred_fallthru
      _
    // Predicated region
    $region78: #{masked_vit_forward.1} parent=1 // pred_check
      _
    $region79: #{masked_vit_forward.1} parent=1 // pred_check_branch
      %67 = sbr.rel (0) target = $region81
    $region80: #{masked_vit_forward.1} parent=1 // pred_region
      _
    $region81: #{masked_vit_forward.1} parent=1 // pred_fallthru
      _
    // Predicated region
    $region82: #{masked_vit_forward.1} parent=1 // pred_check
      _
    $region83: #{masked_vit_forward.1} parent=1 // pred_check_branch
      %69 = sbr.rel (0) target = $region85
    $region84: #{masked_vit_forward.1} parent=1 // pred_region
      _
    $region85: #{masked_vit_forward.1} parent=1 // pred_fallthru
      _
    // Predicated region
    $region86: #{masked_vit_forward.1} parent=1 // pred_check
      _
    $region87: #{masked_vit_forward.1} parent=1 // pred_check_branch
      %71 = sbr.rel (0) target = $region89
    $region88: #{masked_vit_forward.1} parent=1 // pred_region
      _
    $region89: #{masked_vit_forward.1} parent=1 // pred_fallthru
      _
    %v73 = vld [vmem:[%s0] sm:$0xff]
    %v74 = vld [vmem:[%s0 + $0x8] sm:$0xff]
    %v75 = vld [vmem:[%s0 + $0x10] sm:$0xff]
    %v76 = vld [vmem:[%s0 + $0x18] sm:$0xff]
    %v77 = vld [vmem:[%s1] sm:$0xf]
    %v78 = vld [vmem:[%s1 + $0x4] sm:$0xf]
    %v79 = vld [vmem:[%s1 + $0x8] sm:$0xf]
    %v80 = vld [vmem:[%s1 + $0xc] sm:$0xf]
    %v81 = vld [vmem:[%s1 + $0x10] sm:$0xf]
    %v82 = vld [vmem:[%s1 + $0x14] sm:$0xf]
    %v83 = vld [vmem:[%s1 + $0x18] sm:$0xf]
    %v84 = vld [vmem:[%s1 + $0x1c] sm:$0xf]
    %v85 = vld [vmem:[%s1 + $0x20] sm:$0xf]
    %v86 = vld [vmem:[%s1 + $0x24] sm:$0xf]
    %v87 = vld [vmem:[%s1 + $0x28] sm:$0xf]
    %v88 = vld [vmem:[%s1 + $0x2c] sm:$0xf]
    %v89 = vld [vmem:[%s1 + $0x30] sm:$0xf]
    %v90 = vld [vmem:[%s1 + $0x34] sm:$0xf]
    %v91 = vld [vmem:[%s1 + $0x38] sm:$0xf]
    %v92 = vld [vmem:[%s1 + $0x3c] sm:$0xf]
    %v93 = vld [vmem:[%s1 + $0x40] sm:$0xf]
    %v94 = vld [vmem:[%s1 + $0x44] sm:$0xf]
    %v95 = vld [vmem:[%s1 + $0x48] sm:$0xf]
    %v96 = vld [vmem:[%s1 + $0x4c] sm:$0xf]
    %v97 = vld [vmem:[%s1 + $0x50] sm:$0xf]
    %v98 = vld [vmem:[%s1 + $0x54] sm:$0xf]
    %v99 = vld [vmem:[%s1 + $0x58] sm:$0xf]
    %v100 = vld [vmem:[%s1 + $0x5c] sm:$0xf]
    %v101 = vpack.c.bf16 %v75, %v73
    %v102 = vpack.c.bf16 %v76, %v74
    %v103 = vld [vmem:[%s2] sm:$0xff]
    %v104 = vld [vmem:[%s2 + $0x8] sm:$0xff]
    %v129 = vunpack.c.l.b16 %v77
    %v130 = vunpack.c.l.b16 %v78
    %v131 = vunpack.c.l.b16 %v79
    %v132 = vunpack.c.l.b16 %v80
    %v133 = vunpack.c.l.b16 %v81
    %v134 = vunpack.c.l.b16 %v82
    %v135 = vunpack.c.l.b16 %v83
    %v136 = vunpack.c.l.b16 %v84
    %v137 = vunpack.c.l.b16 %v85
    %v138 = vunpack.c.l.b16 %v86
    %v139 = vunpack.c.l.b16 %v87
    %v140 = vunpack.c.l.b16 %v88
    %v141 = vunpack.c.l.b16 %v89
    %v142 = vunpack.c.l.b16 %v90
    %v143 = vunpack.c.l.b16 %v91
    %v144 = vunpack.c.l.b16 %v92
    %v145 = vunpack.c.l.b16 %v93
    %v146 = vunpack.c.l.b16 %v94
    %v147 = vunpack.c.l.b16 %v95
    %v148 = vunpack.c.l.b16 %v96
    %v149 = vunpack.c.l.b16 %v97
    %v150 = vunpack.c.l.b16 %v98
    %v151 = vunpack.c.l.b16 %v99
    %v152 = vunpack.c.l.b16 %v100
    %v153 = vpack.c.b16 %v130, %v129
    %v154 = vpack.c.b16 %v132, %v131
    %v155 = vpack.c.b16 %v134, %v133
    %v156 = vpack.c.b16 %v136, %v135
    %v157 = vpack.c.b16 %v138, %v137
    %v158 = vpack.c.b16 %v140, %v139
    %v159 = vpack.c.b16 %v142, %v141
    %v160 = vpack.c.b16 %v144, %v143
    %v161 = vpack.c.b16 %v146, %v145
    %v162 = vpack.c.b16 %v148, %v147
    %v163 = vpack.c.b16 %v150, %v149
    %v164 = vpack.c.b16 %v152, %v151
    %vm177 = vcmask 523264
    %v179 = vsel %vm177, %v102, 0
    %181 = vmatprep.subr.bf16.mxu0 0
    %182 = vmatpush1.bf16.msra.mxu0 %v153
    %183 = vmatprep.subr.bf16.mxu0 0
    %184 = vmatpush1.bf16.msra.mxu0 %v154
    %185 = vmatprep.subr.bf16.mxu0 0
    %186 = vmatpush1.bf16.msra.mxu0 %v155
    %187 = vmatprep.subr.bf16.mxu0 0
    %188 = vmatpush1.bf16.msra.mxu0 %v156
    %189 = vmatprep.subr.bf16.mxu0 0
    %190 = vmatpush1.bf16.msra.mxu0 %v157
    %191 = vmatprep.subr.bf16.mxu0 0
    %192 = vmatpush1.bf16.msra.mxu0 %v158
    %193 = vmatprep.subr.bf16.mxu0 0
    %194 = vmatpush1.bf16.msra.mxu0 %v159
    %195 = vmatprep.subr.bf16.mxu0 0
    %196 = vmatpush1.bf16.msra.mxu0 %v160
    %197 = vmatprep.subr.bf16.mxu0 0
    %198 = vmatpush1.bf16.msra.mxu0 %v161
    %199 = vmatprep.subr.bf16.mxu0 0
    %200 = vmatpush1.bf16.msra.mxu0 %v162
    %201 = vmatprep.subr.bf16.mxu0 0
    %202 = vmatpush1.bf16.msra.mxu0 %v163
    %203 = vmatprep.subr.bf16.mxu0 0
    %204 = vmatpush1.bf16.msra.mxu0 %v164
    %205 = vmatprep.subr.bf16.mxu0 0
    %206 = vmatpush1.bf16.msra.mxu0 0
    %207 = vmatprep.subr.bf16.mxu0 0
    %208 = vmatpush1.bf16.msra.mxu0 0
    %209 = vmatprep.subr.bf16.mxu0 0
    %210 = vmatpush1.bf16.msra.mxu0 0
    %211 = vmatprep.subr.bf16.mxu0 0
    %212 = vmatpush1.bf16.msra.mxu0 0
    %213 = vmatprep.mubr.bf16.mxu0 %v179
    %214 = vmatmul.mubr.bf16.gmra.mrb[0].mxu0 %v101
    %v215 = vpop.f32.mrb[0].mxu0
    %v216 = vadd.f32 %v103, %v215
    %v217 = vpop.f32.mrb[0].mxu0
    %v218 = vpop.f32.mrb[0].mxu0
    %v219 = vadd.f32 %v104, %v218
    %v220 = vpop.f32.mrb[0].mxu0
    %221 = vdwg.mxu0
    %v222 = vld [vmem:[%s3] sm:$0x1]
    %v223 = vld [vmem:[%s4] sm:$0x1]
    %vm224 = vcmask 261120
    %v225 = vsel %vm224, %v216, 0.0
    %226 = vadd.xlane.f32.xlu0 %v225
    %v227 = vpop.xlane.xlu0 %226
    %v228 = vsel %vm224, %v219, 0.0
    %229 = vadd.xlane.f32.xlu0 %v228
    %v230 = vpop.xlane.xlu0 %229
    %v231 = vrcp.pop 32.0
    %v232 = vmul.f32 %v227, %v231
    %v233 = vmul.f32 %v230, %v231
    %v234 = vsub.f32 %v216, %v232
    %v235 = vsub.f32 %v219, %v233
    %v236 = vmul.f32 %v234, %v234
    %v237 = vmul.f32 %v235, %v235
    %v238 = vsel %vm224, %v236, 0.0
    %239 = vadd.xlane.f32.xlu0 %v238
    %v240 = vpop.xlane.xlu0 %239
    %v241 = vsel %vm224, %v237, 0.0
    %242 = vadd.xlane.f32.xlu0 %v241
    %v243 = vpop.xlane.xlu0 %242
    %v244 = vmul.f32 %v240, %v231
    %v245 = vmul.f32 %v243, %v231
    %v246 = vadd.f32 %v244, 1e-05
    %v247 = vadd.f32 %v245, 1e-05
    %v248 = vrsqrt.pop %v246
    %v249 = vrsqrt.pop %v247
    %v250 = vmul.f32 %v234, %v248
    %v251 = vmul.f32 %v235, %v249
    %v253 = vlaneseq
    %v254 = vshrl.u32 %v253, 7
    %v255 = vsub.s32 0, %v254
    %v256 = vrot.slane %v222, %v255
    %v258 = vmul.f32 %v250, %v256
    %v259 = vmul.f32 %v251, %v256
    %v261 = vlaneseq
    %v262 = vshrl.u32 %v261, 7
    %v263 = vsub.s32 0, %v262
    %v264 = vrot.slane %v223, %v263
    %v266 = vadd.f32 %v258, %v264
    %v267 = vadd.f32 %v259, %v264
    %v268 = vld [vmem:[%s18] sm:$0xff]
    %v269 = vld [vmem:[%s18 + $0x8] sm:$0xff]
    %v270 = vld [vmem:[%s5] sm:$0x1]
    %v271 = vld [vmem:[%s6] sm:$0x1]
    %v272 = vsel %vm224, %v266, 0.0
    %273 = vadd.xlane.f32.xlu0 %v272
    %v274 = vpop.xlane.xlu0 %273
    %v275 = vsel %vm224, %v267, 0.0
    %276 = vadd.xlane.f32.xlu0 %v275
    %v277 = vpop.xlane.xlu0 %276
    %v278 = vmul.f32 %v274, %v231
    %v279 = vmul.f32 %v277, %v231
    %v280 = vsub.f32 %v266, %v278
    %v281 = vsub.f32 %v267, %v279
    %v282 = vmul.f32 %v280, %v280
    %v283 = vmul.f32 %v281, %v281
    %v284 = vsel %vm224, %v282, 0.0
    %285 = vadd.xlane.f32.xlu0 %v284
    %v286 = vpop.xlane.xlu0 %285
    %v287 = vsel %vm224, %v283, 0.0
    %288 = vadd.xlane.f32.xlu0 %v287
    %v289 = vpop.xlane.xlu0 %288
    %v290 = vmul.f32 %v286, %v231
    %v291 = vmul.f32 %v289, %v231
    %v292 = vadd.f32 %v290, 1e-05
    %v293 = vadd.f32 %v291, 1e-05
    %v294 = vrsqrt.pop %v292
    %v295 = vrsqrt.pop %v293
    %v296 = vmul.f32 %v280, %v294
    %v297 = vmul.f32 %v281, %v295
    %v299 = vlaneseq
    %v300 = vshrl.u32 %v299, 7
    %v301 = vsub.s32 0, %v300
    %v302 = vrot.slane %v270, %v301
    %v304 = vmul.f32 %v296, %v302
    %v305 = vmul.f32 %v297, %v302
    %v307 = vlaneseq
    %v308 = vshrl.u32 %v307, 7
    %v309 = vsub.s32 0, %v308
    %v310 = vrot.slane %v271, %v309
    %v312 = vadd.f32 %v304, %v310
    %v313 = vadd.f32 %v305, %v310
    %v314 = vld [vmem:[%s7] sm:$0xf]
    %v315 = vld [vmem:[%s7 + $0x4] sm:$0xf]
    %v316 = vld [vmem:[%s7 + $0x8] sm:$0xf]
    %v317 = vld [vmem:[%s7 + $0xc] sm:$0xf]
    %v318 = vpack.c.bf16 %v313, %v312
    %v319 = vld [vmem:[%s8] sm:$0x1]
    %v321 = vlaneseq
    %v322 = vshrl.u32 %v321, 7
    %v323 = vsub.s32 0, %v322
    %v324 = vrot.slane %v319, %v323
    %v330 = vunpack.c.l.b16 %v314
    %v331 = vunpack.c.l.b16 %v315
    %v332 = vunpack.c.l.b16 %v316
    %v333 = vunpack.c.l.b16 %v317
    %v334 = vpack.c.b16 %v331, %v330
    %v335 = vpack.c.b16 %v333, %v332
    %v339 = vsel %vm224, %v318, 0
    %341 = vmatprep.subr.bf16.mxu0 0
    %342 = vmatpush1.bf16.msra.mxu0 %v334
    %343 = vmatprep.subr.bf16.mxu0 0
    %344 = vmatpush1.bf16.msra.mxu0 %v335
    %345 = vmatprep.subr.bf16.mxu0 0
    %346 = vmatpush1.bf16.msra.mxu0 0
    %347 = vmatprep.subr.bf16.mxu0 0
    %348 = vmatpush1.bf16.msra.mxu0 0
    %349 = vmatprep.subr.bf16.mxu0 0
    %350 = vmatpush1.bf16.msra.mxu0 0
    %351 = vmatprep.subr.bf16.mxu0 0
    %352 = vmatpush1.bf16.msra.mxu0 0
    %353 = vmatprep.subr.bf16.mxu0 0
    %354 = vmatpush1.bf16.msra.mxu0 0
    %355 = vmatprep.subr.bf16.mxu0 0
    %356 = vmatpush1.bf16.msra.mxu0 0
    %357 = vmatprep.subr.bf16.mxu0 0
    %358 = vmatpush1.bf16.msra.mxu0 0
    %359 = vmatprep.subr.bf16.mxu0 0
    %360 = vmatpush1.bf16.msra.mxu0 0
    %361 = vmatprep.subr.bf16.mxu0 0
    %362 = vmatpush1.bf16.msra.mxu0 0
    %363 = vmatprep.subr.bf16.mxu0 0
    %364 = vmatpush1.bf16.msra.mxu0 0
    %365 = vmatprep.subr.bf16.mxu0 0
    %366 = vmatpush1.bf16.msra.mxu0 0
    %367 = vmatprep.subr.bf16.mxu0 0
    %368 = vmatpush1.bf16.msra.mxu0 0
    %369 = vmatprep.subr.bf16.mxu0 0
    %370 = vmatpush1.bf16.msra.mxu0 0
    %371 = vmatprep.subr.bf16.mxu0 0
    %372 = vmatpush1.bf16.msra.mxu0 0
    %373 = vmatprep.mubr.bf16.mxu0 0
    %374 = vmatmul.mubr.bf16.gmra.mrb[0].mxu0 %v339
    %v375 = vpop.f32.mrb[0].mxu0
    %v376 = vadd.f32 %v324, %v375
    %v377 = vpop.f32.mrb[0].mxu0
    %v378 = vpop.f32.mrb[0].mxu0
    %v379 = vadd.f32 %v324, %v378
    %v380 = vpop.f32.mrb[0].mxu0
    %381 = vdwg.mxu0
    %v382 = vpack.c.bf16 %v379, %v376
    %384 = vrot.lane.b32.xlu0 %v382, 96
    %v385 = vpop.permute.xlu0 %384
    %vm386 = vcmask 64512
    %v388 = vsel %vm386, %v382, 0
    %v391 = vsel %vm386, %v385, 0
    %393 = vmatprep.subr.bf16.mxu0 0
    %394 = vmatpush1.bf16.xpose.msra.mxu0 %v391
    %395 = vmatprep.subr.bf16.mxu0 0
    %396 = vmatpush1.bf16.xpose.msra.mxu0 0
    %397 = vmatprep.subr.bf16.mxu0 0
    %398 = vmatpush1.bf16.xpose.msra.mxu0 0
    %399 = vmatprep.subr.bf16.mxu0 0
    %400 = vmatpush1.bf16.xpose.msra.mxu0 0
    %401 = vmatprep.subr.bf16.mxu0 0
    %402 = vmatpush1.bf16.xpose.msra.mxu0 0
    %403 = vmatprep.subr.bf16.mxu0 0
    %404 = vmatpush1.bf16.xpose.msra.mxu0 0
    %405 = vmatprep.subr.bf16.mxu0 0
    %406 = vmatpush1.bf16.xpose.msra.mxu0 0
    %407 = vmatprep.subr.bf16.mxu0 0
    %408 = vmatpush1.bf16.xpose.msra.mxu0 0
    %409 = vmatprep.subr.bf16.mxu0 0
    %410 = vmatpush1.bf16.xpose.msra.mxu0 0
    %411 = vmatprep.subr.bf16.mxu0 0
    %412 = vmatpush1.bf16.xpose.msra.mxu0 0
    %413 = vmatprep.subr.bf16.mxu0 0
    %414 = vmatpush1.bf16.xpose.msra.mxu0 0
    %415 = vmatprep.subr.bf16.mxu0 0
    %416 = vmatpush1.bf16.xpose.msra.mxu0 0
    %417 = vmatprep.subr.bf16.mxu0 0
    %418 = vmatpush1.bf16.xpose.msra.mxu0 0
    %419 = vmatprep.subr.bf16.mxu0 0
    %420 = vmatpush1.bf16.xpose.msra.mxu0 0
    %421 = vmatprep.subr.bf16.mxu0 0
    %422 = vmatpush1.bf16.xpose.msra.mxu0 0
    %423 = vmatprep.subr.bf16.mxu0 0
    %424 = vmatpush1.bf16.xpose.msra.mxu0 0
    %425 = vmatprep.mubr.bf16.mxu0 0
    %426 = vmatmul.mubr.bf16.gmra.mrb[0].mxu0 %v388
    %v427 = vpop.f32.mrb[0].mxu0
    %v428 = vadd.f32 0.0, %v427
    %v429 = vpop.f32.mrb[0].mxu0
    %v430 = vpop.f32.mrb[0].mxu0
    %v431 = vadd.f32 0.0, %v430
    %v432 = vpop.f32.mrb[0].mxu0
    %433 = vdwg.mxu0
    %v434 = vmul.f32 %v428, 0.35355338
    %v435 = vmul.f32 %v431, 0.35355338
    %v436 = vadd.f32 %v434, %v268
    %v437 = vadd.f32 %v435, %v269
    %vm438 = vcmask 130048
    %v439 = vsel %vm438, %v436, -inf
    %440 = vmax.xlane.f32.xlu0 %v439
    %v441 = vpop.xlane.xlu0 %440
    %v442 = vsel %vm438, %v437, -inf
    %443 = vmax.xlane.f32.xlu0 %v442
    %v444 = vpop.xlane.xlu0 %443
    %v445 = vsub.f32 %v436, %v441
    %v446 = vsub.f32 %v437, %v444
    %v447 = vmul.f32 %v445, 1.442695
    %v448 = vpow.pop %v447
    %v449 = vmul.f32 %v446, 1.442695
    %v450 = vpow.pop %v449
    %v451 = vsel %vm438, %v448, 0.0
    %452 = vadd.xlane.f32.xlu0 %v451
    %v453 = vpop.xlane.xlu0 %452
    %v454 = vsel %vm438, %v450, 0.0
    %455 = vadd.xlane.f32.xlu0 %v454
    %v456 = vpop.xlane.xlu0 %455
    %v457 = vrcp.pop %v453
    %v458 = vrcp.pop %v456
    %v459 = vmul.f32 %v448, %v457
    %v460 = vmul.f32 %v450, %v458
    %v461 = vpack.c.bf16 %v460, %v459
    %462 = vrot.lane.b32.xlu0 %v382, 64
    %v463 = vpop.permute.xlu0 %462
    %v466 = vsel %vm438, %v461, 0
    %468 = vmatprep.subr.bf16.mxu0 0
    %469 = vmatpush1.bf16.msra.mxu0 %v463
    %470 = vmatprep.subr.bf16.mxu0 0
    %471 = vmatpush1.bf16.msra.mxu0 0
    %472 = vmatprep.subr.bf16.mxu0 0
    %473 = vmatpush1.bf16.msra.mxu0 0
    %474 = vmatprep.subr.bf16.mxu0 0
    %475 = vmatpush1.bf16.msra.mxu0 0
    %476 = vmatprep.subr.bf16.mxu0 0
    %477 = vmatpush1.bf16.msra.mxu0 0
    %478 = vmatprep.subr.bf16.mxu0 0
    %479 = vmatpush1.bf16.msra.mxu0 0
    %480 = vmatprep.subr.bf16.mxu0 0
    %481 = vmatpush1.bf16.msra.mxu0 0
    %482 = vmatprep.subr.bf16.mxu0 0
    %483 = vmatpush1.bf16.msra.mxu0 0
    %484 = vmatprep.subr.bf16.mxu0 0
    %485 = vmatpush1.bf16.msra.mxu0 0
    %486 = vmatprep.subr.bf16.mxu0 0
    %487 = vmatpush1.bf16.msra.mxu0 0
    %488 = vmatprep.subr.bf16.mxu0 0
    %489 = vmatpush1.bf16.msra.mxu0 0
    %490 = vmatprep.subr.bf16.mxu0 0
    %491 = vmatpush1.bf16.msra.mxu0 0
    %492 = vmatprep.subr.bf16.mxu0 0
    %493 = vmatpush1.bf16.msra.mxu0 0
    %494 = vmatprep.subr.bf16.mxu0 0
    %495 = vmatpush1.bf16.msra.mxu0 0
    %496 = vmatprep.subr.bf16.mxu0 0
    %497 = vmatpush1.bf16.msra.mxu0 0
    %498 = vmatprep.subr.bf16.mxu0 0
    %499 = vmatpush1.bf16.msra.mxu0 0
    %500 = vmatprep.mubr.bf16.mxu0 0
    %501 = vmatmul.mubr.bf16.gmra.mrb[0].mxu0 %v466
    %v502 = vpop.f32.mrb[0].mxu0
    %v503 = vadd.f32 0.0, %v502
    %v504 = vpop.f32.mrb[0].mxu0
    %v505 = vpop.f32.mrb[0].mxu0
    %v506 = vadd.f32 0.0, %v505
    %v507 = vpop.f32.mrb[0].mxu0
    %508 = vdwg.mxu0
    %509 = vrot.lane.b32.xlu0 %v382, 120
    %v510 = vpop.permute.xlu0 %509
    %511 = vrot.lane.b32.xlu0 %v382, 88
    %v512 = vpop.permute.xlu0 %511
    %v514 = vsel %vm386, %v510, 0
    %v517 = vsel %vm386, %v512, 0
    %519 = vmatprep.subr.bf16.mxu0 0
    %520 = vmatpush1.bf16.xpose.msra.mxu0 %v517
    %521 = vmatprep.subr.bf16.mxu0 0
    %522 = vmatpush1.bf16.xpose.msra.mxu0 0
    %523 = vmatprep.subr.bf16.mxu0 0
    %524 = vmatpush1.bf16.xpose.msra.mxu0 0
    %525 = vmatprep.subr.bf16.mxu0 0
    %526 = vmatpush1.bf16.xpose.msra.mxu0 0
    %527 = vmatprep.subr.bf16.mxu0 0
    %528 = vmatpush1.bf16.xpose.msra.mxu0 0
    %529 = vmatprep.subr.bf16.mxu0 0
    %530 = vmatpush1.bf16.xpose.msra.mxu0 0
    %531 = vmatprep.subr.bf16.mxu0 0
    %532 = vmatpush1.bf16.xpose.msra.mxu0 0
    %533 = vmatprep.subr.bf16.mxu0 0
    %534 = vmatpush1.bf16.xpose.msra.mxu0 0
    %535 = vmatprep.subr.bf16.mxu0 0
    %536 = vmatpush1.bf16.xpose.msra.mxu0 0
    %537 = vmatprep.subr.bf16.mxu0 0
    %538 = vmatpush1.bf16.xpose.msra.mxu0 0
    %539 = vmatprep.subr.bf16.mxu0 0
    %540 = vmatpush1.bf16.xpose.msra.mxu0 0
    %541 = vmatprep.subr.bf16.mxu0 0
    %542 = vmatpush1.bf16.xpose.msra.mxu0 0
    %543 = vmatprep.subr.bf16.mxu0 0
    %544 = vmatpush1.bf16.xpose.msra.mxu0 0
    %545 = vmatprep.subr.bf16.mxu0 0
    %546 = vmatpush1.bf16.xpose.msra.mxu0 0
    %547 = vmatprep.subr.bf16.mxu0 0
    %548 = vmatpush1.bf16.xpose.msra.mxu0 0
    %549 = vmatprep.subr.bf16.mxu0 0
    %550 = vmatpush1.bf16.xpose.msra.mxu0 0
    %551 = vmatprep.mubr.bf16.mxu0 0
    %552 = vmatmul.mubr.bf16.gmra.mrb[0].mxu0 %v514
    %v553 = vpop.f32.mrb[0].mxu0
    %v554 = vadd.f32 0.0, %v553
    %v555 = vpop.f32.mrb[0].mxu0
    %v556 = vpop.f32.mrb[0].mxu0
    %v557 = vadd.f32 0.0, %v556
    %v558 = vpop.f32.mrb[0].mxu0
    %559 = vdwg.mxu0
    %v560 = vmul.f32 %v554, 0.35355338
    %v561 = vmul.f32 %v557, 0.35355338
    %v562 = vadd.f32 %v560, %v268
    %v563 = vadd.f32 %v561, %v269
    %v564 = vsel %vm438, %v562, -inf
    %565 = vmax.xlane.f32.xlu0 %v564
    %v566 = vpop.xlane.xlu0 %565
    %v567 = vsel %vm438, %v563, -inf
    %568 = vmax.xlane.f32.xlu0 %v567
    %v569 = vpop.xlane.xlu0 %568
    %v570 = vsub.f32 %v562, %v566
    %v571 = vsub.f32 %v563, %v569
    %v572 = vmul.f32 %v570, 1.442695
    %v573 = vpow.pop %v572
    %v574 = vmul.f32 %v571, 1.442695
    %v575 = vpow.pop %v574
    %v576 = vsel %vm438, %v573, 0.0
    %577 = vadd.xlane.f32.xlu0 %v576
    %v578 = vpop.xlane.xlu0 %577
    %v579 = vsel %vm438, %v575, 0.0
    %580 = vadd.xlane.f32.xlu0 %v579
    %v581 = vpop.xlane.xlu0 %580
    %v582 = vrcp.pop %v578
    %v583 = vrcp.pop %v581
    %v584 = vmul.f32 %v573, %v582
    %v585 = vmul.f32 %v575, %v583
    %v586 = vpack.c.bf16 %v585, %v584
    %587 = vrot.lane.b32.xlu0 %v382, 56
    %v588 = vpop.permute.xlu0 %587
    %v591 = vsel %vm438, %v586, 0
    %593 = vmatprep.subr.bf16.mxu0 0
    %594 = vmatpush1.bf16.msra.mxu0 %v588
    %595 = vmatprep.subr.bf16.mxu0 0
    %596 = vmatpush1.bf16.msra.mxu0 0
    %597 = vmatprep.subr.bf16.mxu0 0
    %598 = vmatpush1.bf16.msra.mxu0 0
    %599 = vmatprep.subr.bf16.mxu0 0
    %600 = vmatpush1.bf16.msra.mxu0 0
    %601 = vmatprep.subr.bf16.mxu0 0
    %602 = vmatpush1.bf16.msra.mxu0 0
    %603 = vmatprep.subr.bf16.mxu0 0
    %604 = vmatpush1.bf16.msra.mxu0 0
    %605 = vmatprep.subr.bf16.mxu0 0
    %606 = vmatpush1.bf16.msra.mxu0 0
    %607 = vmatprep.subr.bf16.mxu0 0
    %608 = vmatpush1.bf16.msra.mxu0 0
    %609 = vmatprep.subr.bf16.mxu0 0
    %610 = vmatpush1.bf16.msra.mxu0 0
    %611 = vmatprep.subr.bf16.mxu0 0
    %612 = vmatpush1.bf16.msra.mxu0 0
    %613 = vmatprep.subr.bf16.mxu0 0
    %614 = vmatpush1.bf16.msra.mxu0 0
    %615 = vmatprep.subr.bf16.mxu0 0
    %616 = vmatpush1.bf16.msra.mxu0 0
    %617 = vmatprep.subr.bf16.mxu0 0
    %618 = vmatpush1.bf16.msra.mxu0 0
    %619 = vmatprep.subr.bf16.mxu0 0
    %620 = vmatpush1.bf16.msra.mxu0 0
    %621 = vmatprep.subr.bf16.mxu0 0
    %622 = vmatpush1.bf16.msra.mxu0 0
    %623 = vmatprep.subr.bf16.mxu0 0
    %624 = vmatpush1.bf16.msra.mxu0 0
    %625 = vmatprep.mubr.bf16.mxu0 0
    %626 = vmatmul.mubr.bf16.gmra.mrb[0].mxu0 %v591
    %v627 = vpop.f32.mrb[0].mxu0
    %v628 = vadd.f32 0.0, %v627
    %v629 = vpop.f32.mrb[0].mxu0
    %v630 = vpop.f32.mrb[0].mxu0
    %v631 = vadd.f32 0.0, %v630
    %v632 = vpop.f32.mrb[0].mxu0
    %633 = vdwg.mxu0
    %634 = vrot.lane.b32.xlu0 %v382, 112
    %v635 = vpop.permute.xlu0 %634
    %636 = vrot.lane.b32.xlu0 %v382, 80
    %v637 = vpop.permute.xlu0 %636
    %v639 = vsel %vm386, %v635, 0
    %v642 = vsel %vm386, %v637, 0
    %644 = vmatprep.subr.bf16.mxu0 0
    %645 = vmatpush1.bf16.xpose.msra.mxu0 %v642
    %646 = vmatprep.subr.bf16.mxu0 0
    %647 = vmatpush1.bf16.xpose.msra.mxu0 0
    %648 = vmatprep.subr.bf16.mxu0 0
    %649 = vmatpush1.bf16.xpose.msra.mxu0 0
    %650 = vmatprep.subr.bf16.mxu0 0
    %651 = vmatpush1.bf16.xpose.msra.mxu0 0
    %652 = vmatprep.subr.bf16.mxu0 0
    %653 = vmatpush1.bf16.xpose.msra.mxu0 0
    %654 = vmatprep.subr.bf16.mxu0 0
    %655 = vmatpush1.bf16.xpose.msra.mxu0 0
    %656 = vmatprep.subr.bf16.mxu0 0
    %657 = vmatpush1.bf16.xpose.msra.mxu0 0
    %658 = vmatprep.subr.bf16.mxu0 0
    %659 = vmatpush1.bf16.xpose.msra.mxu0 0
    %660 = vmatprep.subr.bf16.mxu0 0
    %661 = vmatpush1.bf16.xpose.msra.mxu0 0
    %662 = vmatprep.subr.bf16.mxu0 0
    %663 = vmatpush1.bf16.xpose.msra.mxu0 0
    %664 = vmatprep.subr.bf16.mxu0 0
    %665 = vmatpush1.bf16.xpose.msra.mxu0 0
    %666 = vmatprep.subr.bf16.mxu0 0
    %667 = vmatpush1.bf16.xpose.msra.mxu0 0
    %668 = vmatprep.subr.bf16.mxu0 0
    %669 = vmatpush1.bf16.xpose.msra.mxu0 0
    %670 = vmatprep.subr.bf16.mxu0 0
    %671 = vmatpush1.bf16.xpose.msra.mxu0 0
    %672 = vmatprep.subr.bf16.mxu0 0
    %673 = vmatpush1.bf16.xpose.msra.mxu0 0
    %674 = vmatprep.subr.bf16.mxu0 0
    %675 = vmatpush1.bf16.xpose.msra.mxu0 0
    %676 = vmatprep.mubr.bf16.mxu0 0
    %677 = vmatmul.mubr.bf16.gmra.mrb[0].mxu0 %v639
    %v678 = vpop.f32.mrb[0].mxu0
    %v679 = vadd.f32 0.0, %v678
    %v680 = vpop.f32.mrb[0].mxu0
    %v681 = vpop.f32.mrb[0].mxu0
    %v682 = vadd.f32 0.0, %v681
    %v683 = vpop.f32.mrb[0].mxu0
    %684 = vdwg.mxu0
    %v685 = vmul.f32 %v679, 0.35355338
    %v686 = vmul.f32 %v682, 0.35355338
    %v687 = vadd.f32 %v685, %v268
    %v688 = vadd.f32 %v686, %v269
    %v689 = vsel %vm438, %v687, -inf
    %690 = vmax.xlane.f32.xlu0 %v689
    %v691 = vpop.xlane.xlu0 %690
    %v692 = vsel %vm438, %v688, -inf
    %693 = vmax.xlane.f32.xlu0 %v692
    %v694 = vpop.xlane.xlu0 %693
    %v695 = vsub.f32 %v687, %v691
    %v696 = vsub.f32 %v688, %v694
    %v697 = vmul.f32 %v695, 1.442695
    %v698 = vpow.pop %v697
    %v699 = vmul.f32 %v696, 1.442695
    %v700 = vpow.pop %v699
    %v701 = vsel %vm438, %v698, 0.0
    %702 = vadd.xlane.f32.xlu0 %v701
    %v703 = vpop.xlane.xlu0 %702
    %v704 = vsel %vm438, %v700, 0.0
    %705 = vadd.xlane.f32.xlu0 %v704
    %v706 = vpop.xlane.xlu0 %705
    %v707 = vrcp.pop %v703
    %v708 = vrcp.pop %v706
    %v709 = vmul.f32 %v698, %v707
    %v710 = vmul.f32 %v700, %v708
    %v711 = vpack.c.bf16 %v710, %v709
    %712 = vrot.lane.b32.xlu0 %v382, 48
    %v713 = vpop.permute.xlu0 %712
    %v716 = vsel %vm438, %v711, 0
    %718 = vmatprep.subr.bf16.mxu0 0
    %719 = vmatpush1.bf16.msra.mxu0 %v713
    %720 = vmatprep.subr.bf16.mxu0 0
    %721 = vmatpush1.bf16.msra.mxu0 0
    %722 = vmatprep.subr.bf16.mxu0 0
    %723 = vmatpush1.bf16.msra.mxu0 0
    %724 = vmatprep.subr.bf16.mxu0 0
    %725 = vmatpush1.bf16.msra.mxu0 0
    %726 = vmatprep.subr.bf16.mxu0 0
    %727 = vmatpush1.bf16.msra.mxu0 0
    %728 = vmatprep.subr.bf16.mxu0 0
    %729 = vmatpush1.bf16.msra.mxu0 0
    %730 = vmatprep.subr.bf16.mxu0 0
    %731 = vmatpush1.bf16.msra.mxu0 0
    %732 = vmatprep.subr.bf16.mxu0 0
    %733 = vmatpush1.bf16.msra.mxu0 0
    %734 = vmatprep.subr.bf16.mxu0 0
    %735 = vmatpush1.bf16.msra.mxu0 0
    %736 = vmatprep.subr.bf16.mxu0 0
    %737 = vmatpush1.bf16.msra.mxu0 0
    %738 = vmatprep.subr.bf16.mxu0 0
    %739 = vmatpush1.bf16.msra.mxu0 0
    %740 = vmatprep.subr.bf16.mxu0 0
    %741 = vmatpush1.bf16.msra.mxu0 0
    %742 = vmatprep.subr.bf16.mxu0 0
    %743 = vmatpush1.bf16.msra.mxu0 0
    %744 = vmatprep.subr.bf16.mxu0 0
    %745 = vmatpush1.bf16.msra.mxu0 0
    %746 = vmatprep.subr.bf16.mxu0 0
    %747 = vmatpush1.bf16.msra.mxu0 0
    %748 = vmatprep.subr.bf16.mxu0 0
    %749 = vmatpush1.bf16.msra.mxu0 0
    %750 = vmatprep.mubr.bf16.mxu0 0
    %751 = vmatmul.mubr.bf16.gmra.mrb[0].mxu0 %v716
    %v752 = vpop.f32.mrb[0].mxu0
    %v753 = vadd.f32 0.0, %v752
    %v754 = vpop.f32.mrb[0].mxu0
    %v755 = vpop.f32.mrb[0].mxu0
    %v756 = vadd.f32 0.0, %v755
    %v757 = vpop.f32.mrb[0].mxu0
    %758 = vdwg.mxu0
    %759 = vrot.lane.b32.xlu0 %v382, 104
    %v760 = vpop.permute.xlu0 %759
    %761 = vrot.lane.b32.xlu0 %v382, 72
    %v762 = vpop.permute.xlu0 %761
    %v764 = vsel %vm386, %v760, 0
    %v767 = vsel %vm386, %v762, 0
    %769 = vmatprep.subr.bf16.mxu0 0
    %770 = vmatpush1.bf16.xpose.msra.mxu0 %v767
    %771 = vmatprep.subr.bf16.mxu0 0
    %772 = vmatpush1.bf16.xpose.msra.mxu0 0
    %773 = vmatprep.subr.bf16.mxu0 0
    %774 = vmatpush1.bf16.xpose.msra.mxu0 0
    %775 = vmatprep.subr.bf16.mxu0 0
    %776 = vmatpush1.bf16.xpose.msra.mxu0 0
    %777 = vmatprep.subr.bf16.mxu0 0
    %778 = vmatpush1.bf16.xpose.msra.mxu0 0
    %779 = vmatprep.subr.bf16.mxu0 0
    %780 = vmatpush1.bf16.xpose.msra.mxu0 0
    %781 = vmatprep.subr.bf16.mxu0 0
    %782 = vmatpush1.bf16.xpose.msra.mxu0 0
    %783 = vmatprep.subr.bf16.mxu0 0
    %784 = vmatpush1.bf16.xpose.msra.mxu0 0
    %785 = vmatprep.subr.bf16.mxu0 0
    %786 = vmatpush1.bf16.xpose.msra.mxu0 0
    %787 = vmatprep.subr.bf16.mxu0 0
    %788 = vmatpush1.bf16.xpose.msra.mxu0 0
    %789 = vmatprep.subr.bf16.mxu0 0
    %790 = vmatpush1.bf16.xpose.msra.mxu0 0
    %791 = vmatprep.subr.bf16.mxu0 0
    %792 = vmatpush1.bf16.xpose.msra.mxu0 0
    %793 = vmatprep.subr.bf16.mxu0 0
    %794 = vmatpush1.bf16.xpose.msra.mxu0 0
    %795 = vmatprep.subr.bf16.mxu0 0
    %796 = vmatpush1.bf16.xpose.msra.mxu0 0
    %797 = vmatprep.subr.bf16.mxu0 0
    %798 = vmatpush1.bf16.xpose.msra.mxu0 0
    %799 = vmatprep.subr.bf16.mxu0 0
    %800 = vmatpush1.bf16.xpose.msra.mxu0 0
    %801 = vmatprep.mubr.bf16.mxu0 0
    %802 = vmatmul.mubr.bf16.gmra.mrb[0].mxu0 %v764
    %v803 = vpop.f32.mrb[0].mxu0
    %v804 = vadd.f32 0.0, %v803
    %v805 = vpop.f32.mrb[0].mxu0
    %v806 = vpop.f32.mrb[0].mxu0
    %v807 = vadd.f32 0.0, %v806
    %v808 = vpop.f32.mrb[0].mxu0
    %809 = vdwg.mxu0
    %v810 = vmul.f32 %v804, 0.35355338
    %v811 = vmul.f32 %v807, 0.35355338
    %v812 = vadd.f32 %v810, %v268
    %v813 = vadd.f32 %v811, %v269
    %v814 = vsel %vm438, %v812, -inf
    %815 = vmax.xlane.f32.xlu0 %v814
    %v816 = vpop.xlane.xlu0 %815
    %v817 = vsel %vm438, %v813, -inf
    %818 = vmax.xlane.f32.xlu0 %v817
    %v819 = vpop.xlane.xlu0 %818
    %v820 = vsub.f32 %v812, %v816
    %v821 = vsub.f32 %v813, %v819
    %v822 = vmul.f32 %v820, 1.442695
    %v823 = vpow.pop %v822
    %v824 = vmul.f32 %v821, 1.442695
    %v825 = vpow.pop %v824
    %v826 = vsel %vm438, %v823, 0.0
    %827 = vadd.xlane.f32.xlu0 %v826
    %v828 = vpop.xlane.xlu0 %827
    %v829 = vsel %vm438, %v825, 0.0
    %830 = vadd.xlane.f32.xlu0 %v829
    %v831 = vpop.xlane.xlu0 %830
    %v832 = vrcp.pop %v828
    %v833 = vrcp.pop %v831
    %v834 = vmul.f32 %v823, %v832
    %v835 = vmul.f32 %v825, %v833
    %v836 = vpack.c.bf16 %v835, %v834
    %837 = vrot.lane.b32.xlu0 %v382, 40
    %v838 = vpop.permute.xlu0 %837
    %v841 = vsel %vm438, %v836, 0
    %843 = vmatprep.subr.bf16.mxu0 0
    %844 = vmatpush1.bf16.msra.mxu0 %v838
    %845 = vmatprep.subr.bf16.mxu0 0
    %846 = vmatpush1.bf16.msra.mxu0 0
    %847 = vmatprep.subr.bf16.mxu0 0
    %848 = vmatpush1.bf16.msra.mxu0 0
    %849 = vmatprep.subr.bf16.mxu0 0
    %850 = vmatpush1.bf16.msra.mxu0 0
    %851 = vmatprep.subr.bf16.mxu0 0
    %852 = vmatpush1.bf16.msra.mxu0 0
    %853 = vmatprep.subr.bf16.mxu0 0
    %854 = vmatpush1.bf16.msra.mxu0 0
    %855 = vmatprep.subr.bf16.mxu0 0
    %856 = vmatpush1.bf16.msra.mxu0 0
    %857 = vmatprep.subr.bf16.mxu0 0
    %858 = vmatpush1.bf16.msra.mxu0 0
    %859 = vmatprep.subr.bf16.mxu0 0
    %860 = vmatpush1.bf16.msra.mxu0 0
    %861 = vmatprep.subr.bf16.mxu0 0
    %862 = vmatpush1.bf16.msra.mxu0 0
    %863 = vmatprep.subr.bf16.mxu0 0
    %864 = vmatpush1.bf16.msra.mxu0 0
    %865 = vmatprep.subr.bf16.mxu0 0
    %866 = vmatpush1.bf16.msra.mxu0 0
    %867 = vmatprep.subr.bf16.mxu0 0
    %868 = vmatpush1.bf16.msra.mxu0 0
    %869 = vmatprep.subr.bf16.mxu0 0
    %870 = vmatpush1.bf16.msra.mxu0 0
    %871 = vmatprep.subr.bf16.mxu0 0
    %872 = vmatpush1.bf16.msra.mxu0 0
    %873 = vmatprep.subr.bf16.mxu0 0
    %874 = vmatpush1.bf16.msra.mxu0 0
    %875 = vmatprep.mubr.bf16.mxu0 0
    %876 = vmatmul.mubr.bf16.gmra.mrb[0].mxu0 %v841
    %v877 = vpop.f32.mrb[0].mxu0
    %v878 = vadd.f32 0.0, %v877
    %v879 = vpop.f32.mrb[0].mxu0
    %v880 = vpop.f32.mrb[0].mxu0
    %v881 = vadd.f32 0.0, %v880
    %v882 = vpop.f32.mrb[0].mxu0
    %883 = vdwg.mxu0
    %886 = vrot.lane.b32.xlu0 %v628, 8
    %v887 = vpop.permute.xlu0 %886
    %888 = vrot.lane.b32.xlu0 %v631, 8
    %v889 = vpop.permute.xlu0 %888
    %894 = vrot.lane.b32.xlu0 %v753, 16
    %v895 = vpop.permute.xlu0 %894
    %896 = vrot.lane.b32.xlu0 %v756, 16
    %v897 = vpop.permute.xlu0 %896
    %902 = vrot.lane.b32.xlu0 %v878, 24
    %v903 = vpop.permute.xlu0 %902
    %904 = vrot.lane.b32.xlu0 %v881, 24
    %v905 = vpop.permute.xlu0 %904
    %v908 = vsel %vm386, %v503, %v887
    %v909 = vsel %vm386, %v506, %v889
    %v910 = vsel %vm438, %v908, %v895
    %v911 = vsel %vm438, %v909, %v897
    %vm912 = vcmask 195584
    %v913 = vsel %vm912, %v910, %v903
    %v914 = vsel %vm912, %v911, %v905
    %v915 = vld [vmem:[%s9] sm:$0xf]
    %v916 = vld [vmem:[%s9 + $0x4] sm:$0xf]
    %v917 = vld [vmem:[%s9 + $0x8] sm:$0xf]
    %v918 = vld [vmem:[%s9 + $0xc] sm:$0xf]
    %v919 = vpack.c.bf16 %v914, %v913
    %v920 = vld [vmem:[%s10] sm:$0x1]
    %v922 = vlaneseq
    %v923 = vshrl.u32 %v922, 7
    %v924 = vsub.s32 0, %v923
    %v925 = vrot.slane %v920, %v924
    %v931 = vunpack.c.l.b16 %v915
    %v932 = vunpack.c.l.b16 %v916
    %v933 = vunpack.c.l.b16 %v917
    %v934 = vunpack.c.l.b16 %v918
    %v935 = vpack.c.b16 %v932, %v931
    %v936 = vpack.c.b16 %v934, %v933
    %v940 = vsel %vm224, %v919, 0
    %942 = vmatprep.subr.bf16.mxu0 0
    %943 = vmatpush1.bf16.msra.mxu0 %v935
    %944 = vmatprep.subr.bf16.mxu0 0
    %945 = vmatpush1.bf16.msra.mxu0 %v936
    %946 = vmatprep.subr.bf16.mxu0 0
    %947 = vmatpush1.bf16.msra.mxu0 0
    %948 = vmatprep.subr.bf16.mxu0 0
    %949 = vmatpush1.bf16.msra.mxu0 0
    %950 = vmatprep.subr.bf16.mxu0 0
    %951 = vmatpush1.bf16.msra.mxu0 0
    %952 = vmatprep.subr.bf16.mxu0 0
    %953 = vmatpush1.bf16.msra.mxu0 0
    %954 = vmatprep.subr.bf16.mxu0 0
    %955 = vmatpush1.bf16.msra.mxu0 0
    %956 = vmatprep.subr.bf16.mxu0 0
    %957 = vmatpush1.bf16.msra.mxu0 0
    %958 = vmatprep.subr.bf16.mxu0 0
    %959 = vmatpush1.bf16.msra.mxu0 0
    %960 = vmatprep.subr.bf16.mxu0 0
    %961 = vmatpush1.bf16.msra.mxu0 0
    %962 = vmatprep.subr.bf16.mxu0 0
    %963 = vmatpush1.bf16.msra.mxu0 0
    %964 = vmatprep.subr.bf16.mxu0 0
    %965 = vmatpush1.bf16.msra.mxu0 0
    %966 = vmatprep.subr.bf16.mxu0 0
    %967 = vmatpush1.bf16.msra.mxu0 0
    %968 = vmatprep.subr.bf16.mxu0 0
    %969 = vmatpush1.bf16.msra.mxu0 0
    %970 = vmatprep.subr.bf16.mxu0 0
    %971 = vmatpush1.bf16.msra.mxu0 0
    %972 = vmatprep.subr.bf16.mxu0 0
    %973 = vmatpush1.bf16.msra.mxu0 0
    %974 = vmatprep.mubr.bf16.mxu0 0
    %975 = vmatmul.mubr.bf16.gmra.mrb[0].mxu0 %v940
    %v976 = vpop.f32.mrb[0].mxu0
    %v977 = vadd.f32 %v925, %v976
    %v978 = vpop.f32.mrb[0].mxu0
    %v979 = vpop.f32.mrb[0].mxu0
    %v980 = vadd.f32 %v925, %v979
    %v981 = vpop.f32.mrb[0].mxu0
    %982 = vdwg.mxu0
    %v983 = vadd.f32 %v266, %v977
    %v984 = vadd.f32 %v267, %v980
    %v985 = vld [vmem:[%s11] sm:$0x1]
    %v986 = vld [vmem:[%s12] sm:$0x1]
    %v987 = vsel %vm224, %v983, 0.0
    %988 = vadd.xlane.f32.xlu0 %v987
    %v989 = vpop.xlane.xlu0 %988
    %v990 = vsel %vm224, %v984, 0.0
    %991 = vadd.xlane.f32.xlu0 %v990
    %v992 = vpop.xlane.xlu0 %991
    %v993 = vmul.f32 %v989, %v231
    %v994 = vmul.f32 %v992, %v231
    %v995 = vsub.f32 %v983, %v993
    %v996 = vsub.f32 %v984, %v994
    %v997 = vmul.f32 %v995, %v995
    %v998 = vmul.f32 %v996, %v996
    %v999 = vsel %vm224, %v997, 0.0
    %1000 = vadd.xlane.f32.xlu0 %v999
    %v1001 = vpop.xlane.xlu0 %1000
    %v1002 = vsel %vm224, %v998, 0.0
    %1003 = vadd.xlane.f32.xlu0 %v1002
    %v1004 = vpop.xlane.xlu0 %1003
    %v1005 = vmul.f32 %v1001, %v231
    %v1006 = vmul.f32 %v1004, %v231
    %v1007 = vadd.f32 %v1005, 1e-05
    %v1008 = vadd.f32 %v1006, 1e-05
    %v1009 = vrsqrt.pop %v1007
    %v1010 = vrsqrt.pop %v1008
    %v1011 = vmul.f32 %v995, %v1009
    %v1012 = vmul.f32 %v996, %v1010
    %v1014 = vlaneseq
    %v1015 = vshrl.u32 %v1014, 7
    %v1016 = vsub.s32 0, %v1015
    %v1017 = vrot.slane %v985, %v1016
    %v1019 = vmul.f32 %v1011, %v1017
    %v1020 = vmul.f32 %v1012, %v1017
    %v1022 = vlaneseq
    %v1023 = vshrl.u32 %v1022, 7
    %v1024 = vsub.s32 0, %v1023
    %v1025 = vrot.slane %v986, %v1024
    %v1027 = vadd.f32 %v1019, %v1025
    %v1028 = vadd.f32 %v1020, %v1025
    %v1029 = vld [vmem:[%s13] sm:$0xf]
    %v1030 = vld [vmem:[%s13 + $0x4] sm:$0xf]
    %v1031 = vld [vmem:[%s13 + $0x8] sm:$0xf]
    %v1032 = vld [vmem:[%s13 + $0xc] sm:$0xf]
    %v1033 = vpack.c.bf16 %v1028, %v1027
    %v1034 = vld [vmem:[%s14] sm:$0x1]
    %v1036 = vlaneseq
    %v1037 = vshrl.u32 %v1036, 7
    %v1038 = vsub.s32 0, %v1037
    %v1039 = vrot.slane %v1034, %v1038
    %v1045 = vunpack.c.l.b16 %v1029
    %v1046 = vunpack.c.l.b16 %v1030
    %v1047 = vunpack.c.l.b16 %v1031
    %v1048 = vunpack.c.l.b16 %v1032
    %v1049 = vpack.c.b16 %v1046, %v1045
    %v1050 = vpack.c.b16 %v1048, %v1047
    %v1054 = vsel %vm224, %v1033, 0
    %1056 = vmatprep.subr.bf16.mxu0 0
    %1057 = vmatpush1.bf16.msra.mxu0 %v1049
    %1058 = vmatprep.subr.bf16.mxu0 0
    %1059 = vmatpush1.bf16.msra.mxu0 %v1050
    %1060 = vmatprep.subr.bf16.mxu0 0
    %1061 = vmatpush1.bf16.msra.mxu0 0
    %1062 = vmatprep.subr.bf16.mxu0 0
    %1063 = vmatpush1.bf16.msra.mxu0 0
    %1064 = vmatprep.subr.bf16.mxu0 0
    %1065 = vmatpush1.bf16.msra.mxu0 0
    %1066 = vmatprep.subr.bf16.mxu0 0
    %1067 = vmatpush1.bf16.msra.mxu0 0
    %1068 = vmatprep.subr.bf16.mxu0 0
    %1069 = vmatpush1.bf16.msra.mxu0 0
    %1070 = vmatprep.subr.bf16.mxu0 0
    %1071 = vmatpush1.bf16.msra.mxu0 0
    %1072 = vmatprep.subr.bf16.mxu0 0
    %1073 = vmatpush1.bf16.msra.mxu0 0
    %1074 = vmatprep.subr.bf16.mxu0 0
    %1075 = vmatpush1.bf16.msra.mxu0 0
    %1076 = vmatprep.subr.bf16.mxu0 0
    %1077 = vmatpush1.bf16.msra.mxu0 0
    %1078 = vmatprep.subr.bf16.mxu0 0
    %1079 = vmatpush1.bf16.msra.mxu0 0
    %1080 = vmatprep.subr.bf16.mxu0 0
    %1081 = vmatpush1.bf16.msra.mxu0 0
    %1082 = vmatprep.subr.bf16.mxu0 0
    %1083 = vmatpush1.bf16.msra.mxu0 0
    %1084 = vmatprep.subr.bf16.mxu0 0
    %1085 = vmatpush1.bf16.msra.mxu0 0
    %1086 = vmatprep.subr.bf16.mxu0 0
    %1087 = vmatpush1.bf16.msra.mxu0 0
    %1088 = vmatprep.mubr.bf16.mxu0 0
    %1089 = vmatmul.mubr.bf16.gmra.mrb[0].mxu0 %v1054
    %v1090 = vpop.f32.mrb[0].mxu0
    %v1091 = vadd.f32 %v1039, %v1090
    %v1092 = vpop.f32.mrb[0].mxu0
    %v1093 = vpop.f32.mrb[0].mxu0
    %v1094 = vadd.f32 %v1039, %v1093
    %v1095 = vpop.f32.mrb[0].mxu0
    %1096 = vdwg.mxu0
    %v1097 = vmul.f32 %v1091, 1.702
    %v1098 = vmul.f32 %v1094, 1.702
    %v1099 = vxor.u32 %v1097, 2147483648
    %v1100 = vxor.u32 %v1098, 2147483648
    %v1101 = vmul.f32 %v1099, 1.442695
    %v1102 = vpow.pop %v1101
    %v1103 = vmul.f32 %v1100, 1.442695
    %v1104 = vpow.pop %v1103
    %v1105 = vadd.f32 %v1102, 1.0
    %v1106 = vadd.f32 %v1104, 1.0
    %v1107 = vrcp.pop %v1105
    %v1108 = vmul.f32 1.0, %v1107
    %v1109 = vrcp.pop %v1106
    %v1110 = vmul.f32 1.0, %v1109
    %v1111 = vmul.f32 %v1091, %v1108
    %v1112 = vmul.f32 %v1094, %v1110
    %v1113 = vld [vmem:[%s15] sm:$0xf]
    %v1114 = vld [vmem:[%s15 + $0x4] sm:$0xf]
    %v1115 = vld [vmem:[%s15 + $0x8] sm:$0xf]
    %v1116 = vld [vmem:[%s15 + $0xc] sm:$0xf]
    %v1117 = vld [vmem:[%s15 + $0x10] sm:$0xf]
    %v1118 = vld [vmem:[%s15 + $0x14] sm:$0xf]
    %v1119 = vld [vmem:[%s15 + $0x18] sm:$0xf]
    %v1120 = vld [vmem:[%s15 + $0x1c] sm:$0xf]
    %v1121 = vld [vmem:[%s15 + $0x20] sm:$0xf]
    %v1122 = vld [vmem:[%s15 + $0x24] sm:$0xf]
    %v1123 = vld [vmem:[%s15 + $0x28] sm:$0xf]
    %v1124 = vld [vmem:[%s15 + $0x2c] sm:$0xf]
    %v1125 = vld [vmem:[%s15 + $0x30] sm:$0xf]
    %v1126 = vld [vmem:[%s15 + $0x34] sm:$0xf]
    %v1127 = vld [vmem:[%s15 + $0x38] sm:$0xf]
    %v1128 = vld [vmem:[%s15 + $0x3c] sm:$0xf]
    %v1129 = vpack.c.bf16 %v1112, %v1111
    %v1130 = vld [vmem:[%s16] sm:$0x1]
    %v1132 = vlaneseq
    %v1133 = vshrl.u32 %v1132, 7
    %v1134 = vsub.s32 0, %v1133
    %v1135 = vrot.slane %v1130, %v1134
    %v1153 = vunpack.c.l.b16 %v1113
    %v1154 = vunpack.c.l.b16 %v1114
    %v1155 = vunpack.c.l.b16 %v1115
    %v1156 = vunpack.c.l.b16 %v1116
    %v1157 = vunpack.c.l.b16 %v1117
    %v1158 = vunpack.c.l.b16 %v1118
    %v1159 = vunpack.c.l.b16 %v1119
    %v1160 = vunpack.c.l.b16 %v1120
    %v1161 = vunpack.c.l.b16 %v1121
    %v1162 = vunpack.c.l.b16 %v1122
    %v1163 = vunpack.c.l.b16 %v1123
    %v1164 = vunpack.c.l.b16 %v1124
    %v1165 = vunpack.c.l.b16 %v1125
    %v1166 = vunpack.c.l.b16 %v1126
    %v1167 = vunpack.c.l.b16 %v1127
    %v1168 = vunpack.c.l.b16 %v1128
    %v1169 = vpack.c.b16 %v1154, %v1153
    %v1170 = vpack.c.b16 %v1156, %v1155
    %v1171 = vpack.c.b16 %v1158, %v1157
    %v1172 = vpack.c.b16 %v1160, %v1159
    %v1173 = vpack.c.b16 %v1162, %v1161
    %v1174 = vpack.c.b16 %v1164, %v1163
    %v1175 = vpack.c.b16 %v1166, %v1165
    %v1176 = vpack.c.b16 %v1168, %v1167
    %1185 = vmatprep.subr.bf16.mxu0 0
    %1186 = vmatpush1.bf16.msra.mxu0 %v1169
    %1187 = vmatprep.subr.bf16.mxu0 0
    %1188 = vmatpush1.bf16.msra.mxu0 %v1170
    %1189 = vmatprep.subr.bf16.mxu0 0
    %1190 = vmatpush1.bf16.msra.mxu0 %v1171
    %1191 = vmatprep.subr.bf16.mxu0 0
    %1192 = vmatpush1.bf16.msra.mxu0 %v1172
    %1193 = vmatprep.subr.bf16.mxu0 0
    %1194 = vmatpush1.bf16.msra.mxu0 %v1173
    %1195 = vmatprep.subr.bf16.mxu0 0
    %1196 = vmatpush1.bf16.msra.mxu0 %v1174
    %1197 = vmatprep.subr.bf16.mxu0 0
    %1198 = vmatpush1.bf16.msra.mxu0 %v1175
    %1199 = vmatprep.subr.bf16.mxu0 0
    %1200 = vmatpush1.bf16.msra.mxu0 %v1176
    %1201 = vmatprep.subr.bf16.mxu0 0
    %1202 = vmatpush1.bf16.msra.mxu0 0
    %1203 = vmatprep.subr.bf16.mxu0 0
    %1204 = vmatpush1.bf16.msra.mxu0 0
    %1205 = vmatprep.subr.bf16.mxu0 0
    %1206 = vmatpush1.bf16.msra.mxu0 0
    %1207 = vmatprep.subr.bf16.mxu0 0
    %1208 = vmatpush1.bf16.msra.mxu0 0
    %1209 = vmatprep.subr.bf16.mxu0 0
    %1210 = vmatpush1.bf16.msra.mxu0 0
    %1211 = vmatprep.subr.bf16.mxu0 0
    %1212 = vmatpush1.bf16.msra.mxu0 0
    %1213 = vmatprep.subr.bf16.mxu0 0
    %1214 = vmatpush1.bf16.msra.mxu0 0
    %1215 = vmatprep.subr.bf16.mxu0 0
    %1216 = vmatpush1.bf16.msra.mxu0 0
    %1217 = vmatprep.mubr.bf16.mxu0 0
    %1218 = vmatmul.mubr.bf16.gmra.mrb[0].mxu0 %v1129
    %v1219 = vpop.f32.mrb[0].mxu0
    %v1220 = vadd.f32 %v1135, %v1219
    %v1221 = vpop.f32.mrb[0].mxu0
    %v1222 = vpop.f32.mrb[0].mxu0
    %v1223 = vadd.f32 %v1135, %v1222
    %v1224 = vpop.f32.mrb[0].mxu0
    %1225 = vdwg.mxu0
    %v1226 = vadd.f32 %v983, %v1220
    %v1227 = vadd.f32 %v984, %v1223
    %v1228 = vld [vmem:[%s17] sm:$0xff]
    %v1229 = vld [vmem:[%s17 + $0x8] sm:$0xff]
    %v1230 = vmul.f32 %v1226, %v1228
    %v1231 = vmul.f32 %v1227, %v1229
    %s1232 = scalar_lea.vmem %s5, 1
    %v1233 = vld [vmem:[%s1232] sm:$0x1]
    %s1234 = scalar_lea.vmem %s6, 1
    %v1235 = vld [vmem:[%s1234] sm:$0x1]
    %v1236 = vsel %vm224, %v1230, 0.0
    %1237 = vadd.xlane.f32.xlu0 %v1236
    %v1238 = vpop.xlane.xlu0 %1237
    %v1239 = vsel %vm224, %v1231, 0.0
    %1240 = vadd.xlane.f32.xlu0 %v1239
    %v1241 = vpop.xlane.xlu0 %1240
    %v1242 = vmul.f32 %v1238, %v231
    %v1243 = vmul.f32 %v1241, %v231
    %v1244 = vsub.f32 %v1230, %v1242
    %v1245 = vsub.f32 %v1231, %v1243
    %v1246 = vmul.f32 %v1244, %v1244
    %v1247 = vmul.f32 %v1245, %v1245
    %v1248 = vsel %vm224, %v1246, 0.0
    %1249 = vadd.xlane.f32.xlu0 %v1248
    %v1250 = vpop.xlane.xlu0 %1249
    %v1251 = vsel %vm224, %v1247, 0.0
    %1252 = vadd.xlane.f32.xlu0 %v1251
    %v1253 = vpop.xlane.xlu0 %1252
    %v1254 = vmul.f32 %v1250, %v231
    %v1255 = vmul.f32 %v1253, %v231
    %v1256 = vadd.f32 %v1254, 1e-05
    %v1257 = vadd.f32 %v1255, 1e-05
    %v1258 = vrsqrt.pop %v1256
    %v1259 = vrsqrt.pop %v1257
    %v1260 = vmul.f32 %v1244, %v1258
    %v1261 = vmul.f32 %v1245, %v1259
    %v1263 = vlaneseq
    %v1264 = vshrl.u32 %v1263, 7
    %v1265 = vsub.s32 0, %v1264
    %v1266 = vrot.slane %v1233, %v1265
    %v1268 = vmul.f32 %v1260, %v1266
    %v1269 = vmul.f32 %v1261, %v1266
    %v1271 = vlaneseq
    %v1272 = vshrl.u32 %v1271, 7
    %v1273 = vsub.s32 0, %v1272
    %v1274 = vrot.slane %v1235, %v1273
    %v1276 = vadd.f32 %v1268, %v1274
    %v1277 = vadd.f32 %v1269, %v1274
    %s1278 = scalar_lea.vmem %s7, 16
    %v1279 = vld [vmem:[%s1278] sm:$0xf]
    %v1280 = vld [vmem:[%s1278 + $0x4] sm:$0xf]
    %v1281 = vld [vmem:[%s1278 + $0x8] sm:$0xf]
    %v1282 = vld [vmem:[%s1278 + $0xc] sm:$0xf]
    %v1283 = vpack.c.bf16 %v1277, %v1276
    %s1284 = scalar_lea.vmem %s8, 1
    %v1285 = vld [vmem:[%s1284] sm:$0x1]
    %v1287 = vlaneseq
    %v1288 = vshrl.u32 %v1287, 7
    %v1289 = vsub.s32 0, %v1288
    %v1290 = vrot.slane %v1285, %v1289
    %v1296 = vunpack.c.l.b16 %v1279
    %v1297 = vunpack.c.l.b16 %v1280
    %v1298 = vunpack.c.l.b16 %v1281
    %v1299 = vunpack.c.l.b16 %v1282
    %v1300 = vpack.c.b16 %v1297, %v1296
    %v1301 = vpack.c.b16 %v1299, %v1298
    %v1305 = vsel %vm224, %v1283, 0
    %1307 = vmatprep.subr.bf16.mxu0 0
    %1308 = vmatpush1.bf16.msra.mxu0 %v1300
    %1309 = vmatprep.subr.bf16.mxu0 0
    %1310 = vmatpush1.bf16.msra.mxu0 %v1301
    %1311 = vmatprep.subr.bf16.mxu0 0
    %1312 = vmatpush1.bf16.msra.mxu0 0
    %1313 = vmatprep.subr.bf16.mxu0 0
    %1314 = vmatpush1.bf16.msra.mxu0 0
    %1315 = vmatprep.subr.bf16.mxu0 0
    %1316 = vmatpush1.bf16.msra.mxu0 0
    %1317 = vmatprep.subr.bf16.mxu0 0
    %1318 = vmatpush1.bf16.msra.mxu0 0
    %1319 = vmatprep.subr.bf16.mxu0 0
    %1320 = vmatpush1.bf16.msra.mxu0 0
    %1321 = vmatprep.subr.bf16.mxu0 0
    %1322 = vmatpush1.bf16.msra.mxu0 0
    %1323 = vmatprep.subr.bf16.mxu0 0
    %1324 = vmatpush1.bf16.msra.mxu0 0
    %1325 = vmatprep.subr.bf16.mxu0 0
    %1326 = vmatpush1.bf16.msra.mxu0 0
    %1327 = vmatprep.subr.bf16.mxu0 0
    %1328 = vmatpush1.bf16.msra.mxu0 0
    %1329 = vmatprep.subr.bf16.mxu0 0
    %1330 = vmatpush1.bf16.msra.mxu0 0
    %1331 = vmatprep.subr.bf16.mxu0 0
    %1332 = vmatpush1.bf16.msra.mxu0 0
    %1333 = vmatprep.subr.bf16.mxu0 0
    %1334 = vmatpush1.bf16.msra.mxu0 0
    %1335 = vmatprep.subr.bf16.mxu0 0
    %1336 = vmatpush1.bf16.msra.mxu0 0
    %1337 = vmatprep.subr.bf16.mxu0 0
    %1338 = vmatpush1.bf16.msra.mxu0 0
    %1339 = vmatprep.mubr.bf16.mxu0 0
    %1340 = vmatmul.mubr.bf16.gmra.mrb[0].mxu0 %v1305
    %v1341 = vpop.f32.mrb[0].mxu0
    %v1342 = vadd.f32 %v1290, %v1341
    %v1343 = vpop.f32.mrb[0].mxu0
    %v1344 = vpop.f32.mrb[0].mxu0
    %v1345 = vadd.f32 %v1290, %v1344
    %v1346 = vpop.f32.mrb[0].mxu0
    %1347 = vdwg.mxu0
    %v1348 = vpack.c.bf16 %v1345, %v1342
    %1350 = vrot.lane.b32.xlu0 %v1348, 96
    %v1351 = vpop.permute.xlu0 %1350
    %v1353 = vsel %vm386, %v1348, 0
    %v1356 = vsel %vm386, %v1351, 0
    %1358 = vmatprep.subr.bf16.mxu0 0
    %1359 = vmatpush1.bf16.xpose.msra.mxu0 %v1356
    %1360 = vmatprep.subr.bf16.mxu0 0
    %1361 = vmatpush1.bf16.xpose.msra.mxu0 0
    %1362 = vmatprep.subr.bf16.mxu0 0
    %1363 = vmatpush1.bf16.xpose.msra.mxu0 0
    %1364 = vmatprep.subr.bf16.mxu0 0
    %1365 = vmatpush1.bf16.xpose.msra.mxu0 0
    %1366 = vmatprep.subr.bf16.mxu0 0
    %1367 = vmatpush1.bf16.xpose.msra.mxu0 0
    %1368 = vmatprep.subr.bf16.mxu0 0
    %1369 = vmatpush1.bf16.xpose.msra.mxu0 0
    %1370 = vmatprep.subr.bf16.mxu0 0
    %1371 = vmatpush1.bf16.xpose.msra.mxu0 0
    %1372 = vmatprep.subr.bf16.mxu0 0
    %1373 = vmatpush1.bf16.xpose.msra.mxu0 0
    %1374 = vmatprep.subr.bf16.mxu0 0
    %1375 = vmatpush1.bf16.xpose.msra.mxu0 0
    %1376 = vmatprep.subr.bf16.mxu0 0
    %1377 = vmatpush1.bf16.xpose.msra.mxu0 0
    %1378 = vmatprep.subr.bf16.mxu0 0
    %1379 = vmatpush1.bf16.xpose.msra.mxu0 0
    %1380 = vmatprep.subr.bf16.mxu0 0
    %1381 = vmatpush1.bf16.xpose.msra.mxu0 0
    %1382 = vmatprep.subr.bf16.mxu0 0
    %1383 = vmatpush1.bf16.xpose.msra.mxu0 0
    %1384 = vmatprep.subr.bf16.mxu0 0
    %1385 = vmatpush1.bf16.xpose.msra.mxu0 0
    %1386 = vmatprep.subr.bf16.mxu0 0
    %1387 = vmatpush1.bf16.xpose.msra.mxu0 0
    %1388 = vmatprep.subr.bf16.mxu0 0
    %1389 = vmatpush1.bf16.xpose.msra.mxu0 0
    %1390 = vmatprep.mubr.bf16.mxu0 0
    %1391 = vmatmul.mubr.bf16.gmra.mrb[0].mxu0 %v1353
    %v1392 = vpop.f32.mrb[0].mxu0
    %v1393 = vadd.f32 0.0, %v1392
    %v1394 = vpop.f32.mrb[0].mxu0
    %v1395 = vpop.f32.mrb[0].mxu0
    %v1396 = vadd.f32 0.0, %v1395
    %v1397 = vpop.f32.mrb[0].mxu0
    %1398 = vdwg.mxu0
    %v1399 = vmul.f32 %v1393, 0.35355338
    %v1400 = vmul.f32 %v1396, 0.35355338
    %v1401 = vadd.f32 %v1399, %v268
    %v1402 = vadd.f32 %v1400, %v269
    %v1403 = vsel %vm438, %v1401, -inf
    %1404 = vmax.xlane.f32.xlu0 %v1403
    %v1405 = vpop.xlane.xlu0 %1404
    %v1406 = vsel %vm438, %v1402, -inf
    %1407 = vmax.xlane.f32.xlu0 %v1406
    %v1408 = vpop.xlane.xlu0 %1407
    %v1409 = vsub.f32 %v1401, %v1405
    %v1410 = vsub.f32 %v1402, %v1408
    %v1411 = vmul.f32 %v1409, 1.442695
    %v1412 = vpow.pop %v1411
    %v1413 = vmul.f32 %v1410, 1.442695
    %v1414 = vpow.pop %v1413
    %v1415 = vsel %vm438, %v1412, 0.0
    %1416 = vadd.xlane.f32.xlu0 %v1415
    %v1417 = vpop.xlane.xlu0 %1416
    %v1418 = vsel %vm438, %v1414, 0.0
    %1419 = vadd.xlane.f32.xlu0 %v1418
    %v1420 = vpop.xlane.xlu0 %1419
    %v1421 = vrcp.pop %v1417
    %v1422 = vrcp.pop %v1420
    %v1423 = vmul.f32 %v1412, %v1421
    %v1424 = vmul.f32 %v1414, %v1422
    %v1425 = vpack.c.bf16 %v1424, %v1423
    %1426 = vrot.lane.b32.xlu0 %v1348, 64
    %v1427 = vpop.permute.xlu0 %1426
    %v1430 = vsel %vm438, %v1425, 0
    %1432 = vmatprep.subr.bf16.mxu0 0
    %1433 = vmatpush1.bf16.msra.mxu0 %v1427
    %1434 = vmatprep.subr.bf16.mxu0 0
    %1435 = vmatpush1.bf16.msra.mxu0 0
    %1436 = vmatprep.subr.bf16.mxu0 0
    %1437 = vmatpush1.bf16.msra.mxu0 0
    %1438 = vmatprep.subr.bf16.mxu0 0
    %1439 = vmatpush1.bf16.msra.mxu0 0
    %1440 = vmatprep.subr.bf16.mxu0 0
    %1441 = vmatpush1.bf16.msra.mxu0 0
    %1442 = vmatprep.subr.bf16.mxu0 0
    %1443 = vmatpush1.bf16.msra.mxu0 0
    %1444 = vmatprep.subr.bf16.mxu0 0
    %1445 = vmatpush1.bf16.msra.mxu0 0
    %1446 = vmatprep.subr.bf16.mxu0 0
    %1447 = vmatpush1.bf16.msra.mxu0 0
    %1448 = vmatprep.subr.bf16.mxu0 0
    %1449 = vmatpush1.bf16.msra.mxu0 0
    %1450 = vmatprep.subr.bf16.mxu0 0
    %1451 = vmatpush1.bf16.msra.mxu0 0
    %1452 = vmatprep.subr.bf16.mxu0 0
    %1453 = vmatpush1.bf16.msra.mxu0 0
    %1454 = vmatprep.subr.bf16.mxu0 0
    %1455 = vmatpush1.bf16.msra.mxu0 0
    %1456 = vmatprep.subr.bf16.mxu0 0
    %1457 = vmatpush1.bf16.msra.mxu0 0
    %1458 = vmatprep.subr.bf16.mxu0 0
    %1459 = vmatpush1.bf16.msra.mxu0 0
    %1460 = vmatprep.subr.bf16.mxu0 0
    %1461 = vmatpush1.bf16.msra.mxu0 0
    %1462 = vmatprep.subr.bf16.mxu0 0
    %1463 = vmatpush1.bf16.msra.mxu0 0
    %1464 = vmatprep.mubr.bf16.mxu0 0
    %1465 = vmatmul.mubr.bf16.gmra.mrb[0].mxu0 %v1430
    %v1466 = vpop.f32.mrb[0].mxu0
    %v1467 = vadd.f32 0.0, %v1466
    %v1468 = vpop.f32.mrb[0].mxu0
    %v1469 = vpop.f32.mrb[0].mxu0
    %v1470 = vadd.f32 0.0, %v1469
    %v1471 = vpop.f32.mrb[0].mxu0
    %1472 = vdwg.mxu0
    %1473 = vrot.lane.b32.xlu0 %v1348, 120
    %v1474 = vpop.permute.xlu0 %1473
    %1475 = vrot.lane.b32.xlu0 %v1348, 88
    %v1476 = vpop.permute.xlu0 %1475
    %v1478 = vsel %vm386, %v1474, 0
    %v1481 = vsel %vm386, %v1476, 0
    %1483 = vmatprep.subr.bf16.mxu0 0
    %1484 = vmatpush1.bf16.xpose.msra.mxu0 %v1481
    %1485 = vmatprep.subr.bf16.mxu0 0
    %1486 = vmatpush1.bf16.xpose.msra.mxu0 0
    %1487 = vmatprep.subr.bf16.mxu0 0
    %1488 = vmatpush1.bf16.xpose.msra.mxu0 0
    %1489 = vmatprep.subr.bf16.mxu0 0
    %1490 = vmatpush1.bf16.xpose.msra.mxu0 0
    %1491 = vmatprep.subr.bf16.mxu0 0
    %1492 = vmatpush1.bf16.xpose.msra.mxu0 0
    %1493 = vmatprep.subr.bf16.mxu0 0
    %1494 = vmatpush1.bf16.xpose.msra.mxu0 0
    %1495 = vmatprep.subr.bf16.mxu0 0
    %1496 = vmatpush1.bf16.xpose.msra.mxu0 0
    %1497 = vmatprep.subr.bf16.mxu0 0
    %1498 = vmatpush1.bf16.xpose.msra.mxu0 0
    %1499 = vmatprep.subr.bf16.mxu0 0
    %1500 = vmatpush1.bf16.xpose.msra.mxu0 0
    %1501 = vmatprep.subr.bf16.mxu0 0
    %1502 = vmatpush1.bf16.xpose.msra.mxu0 0
    %1503 = vmatprep.subr.bf16.mxu0 0
    %1504 = vmatpush1.bf16.xpose.msra.mxu0 0
    %1505 = vmatprep.subr.bf16.mxu0 0
    %1506 = vmatpush1.bf16.xpose.msra.mxu0 0
    %1507 = vmatprep.subr.bf16.mxu0 0
    %1508 = vmatpush1.bf16.xpose.msra.mxu0 0
    %1509 = vmatprep.subr.bf16.mxu0 0
    %1510 = vmatpush1.bf16.xpose.msra.mxu0 0
    %1511 = vmatprep.subr.bf16.mxu0 0
    %1512 = vmatpush1.bf16.xpose.msra.mxu0 0
    %1513 = vmatprep.subr.bf16.mxu0 0
    %1514 = vmatpush1.bf16.xpose.msra.mxu0 0
    %1515 = vmatprep.mubr.bf16.mxu0 0
    %1516 = vmatmul.mubr.bf16.gmra.mrb[0].mxu0 %v1478
    %v1517 = vpop.f32.mrb[0].mxu0
    %v1518 = vadd.f32 0.0, %v1517
    %v1519 = vpop.f32.mrb[0].mxu0
    %v1520 = vpop.f32.mrb[0].mxu0
    %v1521 = vadd.f32 0.0, %v1520
    %v1522 = vpop.f32.mrb[0].mxu0
    %1523 = vdwg.mxu0
    %v1524 = vmul.f32 %v1518, 0.35355338
    %v1525 = vmul.f32 %v1521, 0.35355338
    %v1526 = vadd.f32 %v1524, %v268
    %v1527 = vadd.f32 %v1525, %v269
    %v1528 = vsel %vm438, %v1526, -inf
    %1529 = vmax.xlane.f32.xlu0 %v1528
    %v1530 = vpop.xlane.xlu0 %1529
    %v1531 = vsel %vm438, %v1527, -inf
    %1532 = vmax.xlane.f32.xlu0 %v1531
    %v1533 = vpop.xlane.xlu0 %1532
    %v1534 = vsub.f32 %v1526, %v1530
    %v1535 = vsub.f32 %v1527, %v1533
    %v1536 = vmul.f32 %v1534, 1.442695
    %v1537 = vpow.pop %v1536
    %v1538 = vmul.f32 %v1535, 1.442695
    %v1539 = vpow.pop %v1538
    %v1540 = vsel %vm438, %v1537, 0.0
    %1541 = vadd.xlane.f32.xlu0 %v1540
    %v1542 = vpop.xlane.xlu0 %1541
    %v1543 = vsel %vm438, %v1539, 0.0
    %1544 = vadd.xlane.f32.xlu0 %v1543
    %v1545 = vpop.xlane.xlu0 %1544
    %v1546 = vrcp.pop %v1542
    %v1547 = vrcp.pop %v1545
    %v1548 = vmul.f32 %v1537, %v1546
    %v1549 = vmul.f32 %v1539, %v1547
    %v1550 = vpack.c.bf16 %v1549, %v1548
    %1551 = vrot.lane.b32.xlu0 %v1348, 56
    %v1552 = vpop.permute.xlu0 %1551
    %v1555 = vsel %vm438, %v1550, 0
    %1557 = vmatprep.subr.bf16.mxu0 0
    %1558 = vmatpush1.bf16.msra.mxu0 %v1552
    %1559 = vmatprep.subr.bf16.mxu0 0
    %1560 = vmatpush1.bf16.msra.mxu0 0
    %1561 = vmatprep.subr.bf16.mxu0 0
    %1562 = vmatpush1.bf16.msra.mxu0 0
    %1563 = vmatprep.subr.bf16.mxu0 0
    %1564 = vmatpush1.bf16.msra.mxu0 0
    %1565 = vmatprep.subr.bf16.mxu0 0
    %1566 = vmatpush1.bf16.msra.mxu0 0
    %1567 = vmatprep.subr.bf16.mxu0 0
    %1568 = vmatpush1.bf16.msra.mxu0 0
    %1569 = vmatprep.subr.bf16.mxu0 0
    %1570 = vmatpush1.bf16.msra.mxu0 0
    %1571 = vmatprep.subr.bf16.mxu0 0
    %1572 = vmatpush1.bf16.msra.mxu0 0
    %1573 = vmatprep.subr.bf16.mxu0 0
    %1574 = vmatpush1.bf16.msra.mxu0 0
    %1575 = vmatprep.subr.bf16.mxu0 0
    %1576 = vmatpush1.bf16.msra.mxu0 0
    %1577 = vmatprep.subr.bf16.mxu0 0
    %1578 = vmatpush1.bf16.msra.mxu0 0
    %1579 = vmatprep.subr.bf16.mxu0 0
    %1580 = vmatpush1.bf16.msra.mxu0 0
    %1581 = vmatprep.subr.bf16.mxu0 0
    %1582 = vmatpush1.bf16.msra.mxu0 0
    %1583 = vmatprep.subr.bf16.mxu0 0
    %1584 = vmatpush1.bf16.msra.mxu0 0
    %1585 = vmatprep.subr.bf16.mxu0 0
    %1586 = vmatpush1.bf16.msra.mxu0 0
    %1587 = vmatprep.subr.bf16.mxu0 0
    %1588 = vmatpush1.bf16.msra.mxu0 0
    %1589 = vmatprep.mubr.bf16.mxu0 0
    %1590 = vmatmul.mubr.bf16.gmra.mrb[0].mxu0 %v1555
    %v1591 = vpop.f32.mrb[0].mxu0
    %v1592 = vadd.f32 0.0, %v1591
    %v1593 = vpop.f32.mrb[0].mxu0
    %v1594 = vpop.f32.mrb[0].mxu0
    %v1595 = vadd.f32 0.0, %v1594
    %v1596 = vpop.f32.mrb[0].mxu0
    %1597 = vdwg.mxu0
    %1598 = vrot.lane.b32.xlu0 %v1348, 112
    %v1599 = vpop.permute.xlu0 %1598
    %1600 = vrot.lane.b32.xlu0 %v1348, 80
    %v1601 = vpop.permute.xlu0 %1600
    %v1603 = vsel %vm386, %v1599, 0
    %v1606 = vsel %vm386, %v1601, 0
    %1608 = vmatprep.subr.bf16.mxu0 0
    %1609 = vmatpush1.bf16.xpose.msra.mxu0 %v1606
    %1610 = vmatprep.subr.bf16.mxu0 0
    %1611 = vmatpush1.bf16.xpose.msra.mxu0 0
    %1612 = vmatprep.subr.bf16.mxu0 0
    %1613 = vmatpush1.bf16.xpose.msra.mxu0 0
    %1614 = vmatprep.subr.bf16.mxu0 0
    %1615 = vmatpush1.bf16.xpose.msra.mxu0 0
    %1616 = vmatprep.subr.bf16.mxu0 0
    %1617 = vmatpush1.bf16.xpose.msra.mxu0 0
    %1618 = vmatprep.subr.bf16.mxu0 0
    %1619 = vmatpush1.bf16.xpose.msra.mxu0 0
    %1620 = vmatprep.subr.bf16.mxu0 0
    %1621 = vmatpush1.bf16.xpose.msra.mxu0 0
    %1622 = vmatprep.subr.bf16.mxu0 0
    %1623 = vmatpush1.bf16.xpose.msra.mxu0 0
    %1624 = vmatprep.subr.bf16.mxu0 0
    %1625 = vmatpush1.bf16.xpose.msra.mxu0 0
    %1626 = vmatprep.subr.bf16.mxu0 0
    %1627 = vmatpush1.bf16.xpose.msra.mxu0 0
    %1628 = vmatprep.subr.bf16.mxu0 0
    %1629 = vmatpush1.bf16.xpose.msra.mxu0 0
    %1630 = vmatprep.subr.bf16.mxu0 0
    %1631 = vmatpush1.bf16.xpose.msra.mxu0 0
    %1632 = vmatprep.subr.bf16.mxu0 0
    %1633 = vmatpush1.bf16.xpose.msra.mxu0 0
    %1634 = vmatprep.subr.bf16.mxu0 0
    %1635 = vmatpush1.bf16.xpose.msra.mxu0 0
    %1636 = vmatprep.subr.bf16.mxu0 0
    %1637 = vmatpush1.bf16.xpose.msra.mxu0 0
    %1638 = vmatprep.subr.bf16.mxu0 0
    %1639 = vmatpush1.bf16.xpose.msra.mxu0 0
    %1640 = vmatprep.mubr.bf16.mxu0 0
    %1641 = vmatmul.mubr.bf16.gmra.mrb[0].mxu0 %v1603
    %v1642 = vpop.f32.mrb[0].mxu0
    %v1643 = vadd.f32 0.0, %v1642
    %v1644 = vpop.f32.mrb[0].mxu0
    %v1645 = vpop.f32.mrb[0].mxu0
    %v1646 = vadd.f32 0.0, %v1645
    %v1647 = vpop.f32.mrb[0].mxu0
    %1648 = vdwg.mxu0
    %v1649 = vmul.f32 %v1643, 0.35355338
    %v1650 = vmul.f32 %v1646, 0.35355338
    %v1651 = vadd.f32 %v1649, %v268
    %v1652 = vadd.f32 %v1650, %v269
    %v1653 = vsel %vm438, %v1651, -inf
    %1654 = vmax.xlane.f32.xlu0 %v1653
    %v1655 = vpop.xlane.xlu0 %1654
    %v1656 = vsel %vm438, %v1652, -inf
    %1657 = vmax.xlane.f32.xlu0 %v1656
    %v1658 = vpop.xlane.xlu0 %1657
    %v1659 = vsub.f32 %v1651, %v1655
    %v1660 = vsub.f32 %v1652, %v1658
    %v1661 = vmul.f32 %v1659, 1.442695
    %v1662 = vpow.pop %v1661
    %v1663 = vmul.f32 %v1660, 1.442695
    %v1664 = vpow.pop %v1663
    %v1665 = vsel %vm438, %v1662, 0.0
    %1666 = vadd.xlane.f32.xlu0 %v1665
    %v1667 = vpop.xlane.xlu0 %1666
    %v1668 = vsel %vm438, %v1664, 0.0
    %1669 = vadd.xlane.f32.xlu0 %v1668
    %v1670 = vpop.xlane.xlu0 %1669
    %v1671 = vrcp.pop %v1667
    %v1672 = vrcp.pop %v1670
    %v1673 = vmul.f32 %v1662, %v1671
    %v1674 = vmul.f32 %v1664, %v1672
    %v1675 = vpack.c.bf16 %v1674, %v1673
    %1676 = vrot.lane.b32.xlu0 %v1348, 48
    %v1677 = vpop.permute.xlu0 %1676
    %v1680 = vsel %vm438, %v1675, 0
    %1682 = vmatprep.subr.bf16.mxu0 0
    %1683 = vmatpush1.bf16.msra.mxu0 %v1677
    %1684 = vmatprep.subr.bf16.mxu0 0
    %1685 = vmatpush1.bf16.msra.mxu0 0
    %1686 = vmatprep.subr.bf16.mxu0 0
    %1687 = vmatpush1.bf16.msra.mxu0 0
    %1688 = vmatprep.subr.bf16.mxu0 0
    %1689 = vmatpush1.bf16.msra.mxu0 0
    %1690 = vmatprep.subr.bf16.mxu0 0
    %1691 = vmatpush1.bf16.msra.mxu0 0
    %1692 = vmatprep.subr.bf16.mxu0 0
    %1693 = vmatpush1.bf16.msra.mxu0 0
    %1694 = vmatprep.subr.bf16.mxu0 0
    %1695 = vmatpush1.bf16.msra.mxu0 0
    %1696 = vmatprep.subr.bf16.mxu0 0
    %1697 = vmatpush1.bf16.msra.mxu0 0
    %1698 = vmatprep.subr.bf16.mxu0 0
    %1699 = vmatpush1.bf16.msra.mxu0 0
    %1700 = vmatprep.subr.bf16.mxu0 0
    %1701 = vmatpush1.bf16.msra.mxu0 0
    %1702 = vmatprep.subr.bf16.mxu0 0
    %1703 = vmatpush1.bf16.msra.mxu0 0
    %1704 = vmatprep.subr.bf16.mxu0 0
    %1705 = vmatpush1.bf16.msra.mxu0 0
    %1706 = vmatprep.subr.bf16.mxu0 0
    %1707 = vmatpush1.bf16.msra.mxu0 0
    %1708 = vmatprep.subr.bf16.mxu0 0
    %1709 = vmatpush1.bf16.msra.mxu0 0
    %1710 = vmatprep.subr.bf16.mxu0 0
    %1711 = vmatpush1.bf16.msra.mxu0 0
    %1712 = vmatprep.subr.bf16.mxu0 0
    %1713 = vmatpush1.bf16.msra.mxu0 0
    %1714 = vmatprep.mubr.bf16.mxu0 0
    %1715 = vmatmul.mubr.bf16.gmra.mrb[0].mxu0 %v1680
    %v1716 = vpop.f32.mrb[0].mxu0
    %v1717 = vadd.f32 0.0, %v1716
    %v1718 = vpop.f32.mrb[0].mxu0
    %v1719 = vpop.f32.mrb[0].mxu0
    %v1720 = vadd.f32 0.0, %v1719
    %v1721 = vpop.f32.mrb[0].mxu0
    %1722 = vdwg.mxu0
    %1723 = vrot.lane.b32.xlu0 %v1348, 104
    %v1724 = vpop.permute.xlu0 %1723
    %1725 = vrot.lane.b32.xlu0 %v1348, 72
    %v1726 = vpop.permute.xlu0 %1725
    %v1728 = vsel %vm386, %v1724, 0
    %v1731 = vsel %vm386, %v1726, 0
    %1733 = vmatprep.subr.bf16.mxu0 0
    %1734 = vmatpush1.bf16.xpose.msra.mxu0 %v1731
    %1735 = vmatprep.subr.bf16.mxu0 0
    %1736 = vmatpush1.bf16.xpose.msra.mxu0 0
    %1737 = vmatprep.subr.bf16.mxu0 0
    %1738 = vmatpush1.bf16.xpose.msra.mxu0 0
    %1739 = vmatprep.subr.bf16.mxu0 0
    %1740 = vmatpush1.bf16.xpose.msra.mxu0 0
    %1741 = vmatprep.subr.bf16.mxu0 0
    %1742 = vmatpush1.bf16.xpose.msra.mxu0 0
    %1743 = vmatprep.subr.bf16.mxu0 0
    %1744 = vmatpush1.bf16.xpose.msra.mxu0 0
    %1745 = vmatprep.subr.bf16.mxu0 0
    %1746 = vmatpush1.bf16.xpose.msra.mxu0 0
    %1747 = vmatprep.subr.bf16.mxu0 0
    %1748 = vmatpush1.bf16.xpose.msra.mxu0 0
    %1749 = vmatprep.subr.bf16.mxu0 0
    %1750 = vmatpush1.bf16.xpose.msra.mxu0 0
    %1751 = vmatprep.subr.bf16.mxu0 0
    %1752 = vmatpush1.bf16.xpose.msra.mxu0 0
    %1753 = vmatprep.subr.bf16.mxu0 0
    %1754 = vmatpush1.bf16.xpose.msra.mxu0 0
    %1755 = vmatprep.subr.bf16.mxu0 0
    %1756 = vmatpush1.bf16.xpose.msra.mxu0 0
    %1757 = vmatprep.subr.bf16.mxu0 0
    %1758 = vmatpush1.bf16.xpose.msra.mxu0 0
    %1759 = vmatprep.subr.bf16.mxu0 0
    %1760 = vmatpush1.bf16.xpose.msra.mxu0 0
    %1761 = vmatprep.subr.bf16.mxu0 0
    %1762 = vmatpush1.bf16.xpose.msra.mxu0 0
    %1763 = vmatprep.subr.bf16.mxu0 0
    %1764 = vmatpush1.bf16.xpose.msra.mxu0 0
    %1765 = vmatprep.mubr.bf16.mxu0 0
    %1766 = vmatmul.mubr.bf16.gmra.mrb[0].mxu0 %v1728
    %v1767 = vpop.f32.mrb[0].mxu0
    %v1768 = vadd.f32 0.0, %v1767
    %v1769 = vpop.f32.mrb[0].mxu0
    %v1770 = vpop.f32.mrb[0].mxu0
    %v1771 = vadd.f32 0.0, %v1770
    %v1772 = vpop.f32.mrb[0].mxu0
    %1773 = vdwg.mxu0
    %v1774 = vmul.f32 %v1768, 0.35355338
    %v1775 = vmul.f32 %v1771, 0.35355338
    %v1776 = vadd.f32 %v1774, %v268
    %v1777 = vadd.f32 %v1775, %v269
    %v1778 = vsel %vm438, %v1776, -inf
    %1779 = vmax.xlane.f32.xlu0 %v1778
    %v1780 = vpop.xlane.xlu0 %1779
    %v1781 = vsel %vm438, %v1777, -inf
    %1782 = vmax.xlane.f32.xlu0 %v1781
    %v1783 = vpop.xlane.xlu0 %1782
    %v1784 = vsub.f32 %v1776, %v1780
    %v1785 = vsub.f32 %v1777, %v1783
    %v1786 = vmul.f32 %v1784, 1.442695
    %v1787 = vpow.pop %v1786
    %v1788 = vmul.f32 %v1785, 1.442695
    %v1789 = vpow.pop %v1788
    %v1790 = vsel %vm438, %v1787, 0.0
    %1791 = vadd.xlane.f32.xlu0 %v1790
    %v1792 = vpop.xlane.xlu0 %1791
    %v1793 = vsel %vm438, %v1789, 0.0
    %1794 = vadd.xlane.f32.xlu0 %v1793
    %v1795 = vpop.xlane.xlu0 %1794
    %v1796 = vrcp.pop %v1792
    %v1797 = vrcp.pop %v1795
    %v1798 = vmul.f32 %v1787, %v1796
    %v1799 = vmul.f32 %v1789, %v1797
    %v1800 = vpack.c.bf16 %v1799, %v1798
    %1801 = vrot.lane.b32.xlu0 %v1348, 40
    %v1802 = vpop.permute.xlu0 %1801
    %v1805 = vsel %vm438, %v1800, 0
    %1807 = vmatprep.subr.bf16.mxu0 0
    %1808 = vmatpush1.bf16.msra.mxu0 %v1802
    %1809 = vmatprep.subr.bf16.mxu0 0
    %1810 = vmatpush1.bf16.msra.mxu0 0
    %1811 = vmatprep.subr.bf16.mxu0 0
    %1812 = vmatpush1.bf16.msra.mxu0 0
    %1813 = vmatprep.subr.bf16.mxu0 0
    %1814 = vmatpush1.bf16.msra.mxu0 0
    %1815 = vmatprep.subr.bf16.mxu0 0
    %1816 = vmatpush1.bf16.msra.mxu0 0
    %1817 = vmatprep.subr.bf16.mxu0 0
    %1818 = vmatpush1.bf16.msra.mxu0 0
    %1819 = vmatprep.subr.bf16.mxu0 0
    %1820 = vmatpush1.bf16.msra.mxu0 0
    %1821 = vmatprep.subr.bf16.mxu0 0
    %1822 = vmatpush1.bf16.msra.mxu0 0
    %1823 = vmatprep.subr.bf16.mxu0 0
    %1824 = vmatpush1.bf16.msra.mxu0 0
    %1825 = vmatprep.subr.bf16.mxu0 0
    %1826 = vmatpush1.bf16.msra.mxu0 0
    %1827 = vmatprep.subr.bf16.mxu0 0
    %1828 = vmatpush1.bf16.msra.mxu0 0
    %1829 = vmatprep.subr.bf16.mxu0 0
    %1830 = vmatpush1.bf16.msra.mxu0 0
    %1831 = vmatprep.subr.bf16.mxu0 0
    %1832 = vmatpush1.bf16.msra.mxu0 0
    %1833 = vmatprep.subr.bf16.mxu0 0
    %1834 = vmatpush1.bf16.msra.mxu0 0
    %1835 = vmatprep.subr.bf16.mxu0 0
    %1836 = vmatpush1.bf16.msra.mxu0 0
    %1837 = vmatprep.subr.bf16.mxu0 0
    %1838 = vmatpush1.bf16.msra.mxu0 0
    %1839 = vmatprep.mubr.bf16.mxu0 0
    %1840 = vmatmul.mubr.bf16.gmra.mrb[0].mxu0 %v1805
    %v1841 = vpop.f32.mrb[0].mxu0
    %v1842 = vadd.f32 0.0, %v1841
    %v1843 = vpop.f32.mrb[0].mxu0
    %v1844 = vpop.f32.mrb[0].mxu0
    %v1845 = vadd.f32 0.0, %v1844
    %v1846 = vpop.f32.mrb[0].mxu0
    %1847 = vdwg.mxu0
    %1850 = vrot.lane.b32.xlu0 %v1592, 8
    %v1851 = vpop.permute.xlu0 %1850
    %1852 = vrot.lane.b32.xlu0 %v1595, 8
    %v1853 = vpop.permute.xlu0 %1852
    %1858 = vrot.lane.b32.xlu0 %v1717, 16
    %v1859 = vpop.permute.xlu0 %1858
    %1860 = vrot.lane.b32.xlu0 %v1720, 16
    %v1861 = vpop.permute.xlu0 %1860
    %1866 = vrot.lane.b32.xlu0 %v1842, 24
    %v1867 = vpop.permute.xlu0 %1866
    %1868 = vrot.lane.b32.xlu0 %v1845, 24
    %v1869 = vpop.permute.xlu0 %1868
    %v1872 = vsel %vm386, %v1467, %v1851
    %v1873 = vsel %vm386, %v1470, %v1853
    %v1874 = vsel %vm438, %v1872, %v1859
    %v1875 = vsel %vm438, %v1873, %v1861
    %v1876 = vsel %vm912, %v1874, %v1867
    %v1877 = vsel %vm912, %v1875, %v1869
    %s1878 = scalar_lea.vmem %s9, 16
    %v1879 = vld [vmem:[%s1878] sm:$0xf]
    %v1880 = vld [vmem:[%s1878 + $0x4] sm:$0xf]
    %v1881 = vld [vmem:[%s1878 + $0x8] sm:$0xf]
    %v1882 = vld [vmem:[%s1878 + $0xc] sm:$0xf]
    %v1883 = vpack.c.bf16 %v1877, %v1876
    %s1884 = scalar_lea.vmem %s10, 1
    %v1885 = vld [vmem:[%s1884] sm:$0x1]
    %v1887 = vlaneseq
    %v1888 = vshrl.u32 %v1887, 7
    %v1889 = vsub.s32 0, %v1888
    %v1890 = vrot.slane %v1885, %v1889
    %v1896 = vunpack.c.l.b16 %v1879
    %v1897 = vunpack.c.l.b16 %v1880
    %v1898 = vunpack.c.l.b16 %v1881
    %v1899 = vunpack.c.l.b16 %v1882
    %v1900 = vpack.c.b16 %v1897, %v1896
    %v1901 = vpack.c.b16 %v1899, %v1898
    %v1905 = vsel %vm224, %v1883, 0
    %1907 = vmatprep.subr.bf16.mxu0 0
    %1908 = vmatpush1.bf16.msra.mxu0 %v1900
    %1909 = vmatprep.subr.bf16.mxu0 0
    %1910 = vmatpush1.bf16.msra.mxu0 %v1901
    %1911 = vmatprep.subr.bf16.mxu0 0
    %1912 = vmatpush1.bf16.msra.mxu0 0
    %1913 = vmatprep.subr.bf16.mxu0 0
    %1914 = vmatpush1.bf16.msra.mxu0 0
    %1915 = vmatprep.subr.bf16.mxu0 0
    %1916 = vmatpush1.bf16.msra.mxu0 0
    %1917 = vmatprep.subr.bf16.mxu0 0
    %1918 = vmatpush1.bf16.msra.mxu0 0
    %1919 = vmatprep.subr.bf16.mxu0 0
    %1920 = vmatpush1.bf16.msra.mxu0 0
    %1921 = vmatprep.subr.bf16.mxu0 0
    %1922 = vmatpush1.bf16.msra.mxu0 0
    %1923 = vmatprep.subr.bf16.mxu0 0
    %1924 = vmatpush1.bf16.msra.mxu0 0
    %1925 = vmatprep.subr.bf16.mxu0 0
    %1926 = vmatpush1.bf16.msra.mxu0 0
    %1927 = vmatprep.subr.bf16.mxu0 0
    %1928 = vmatpush1.bf16.msra.mxu0 0
    %1929 = vmatprep.subr.bf16.mxu0 0
    %1930 = vmatpush1.bf16.msra.mxu0 0
    %1931 = vmatprep.subr.bf16.mxu0 0
    %1932 = vmatpush1.bf16.msra.mxu0 0
    %1933 = vmatprep.subr.bf16.mxu0 0
    %1934 = vmatpush1.bf16.msra.mxu0 0
    %1935 = vmatprep.subr.bf16.mxu0 0
    %1936 = vmatpush1.bf16.msra.mxu0 0
    %1937 = vmatprep.subr.bf16.mxu0 0
    %1938 = vmatpush1.bf16.msra.mxu0 0
    %1939 = vmatprep.mubr.bf16.mxu0 0
    %1940 = vmatmul.mubr.bf16.gmra.mrb[0].mxu0 %v1905
    %v1941 = vpop.f32.mrb[0].mxu0
    %v1942 = vadd.f32 %v1890, %v1941
    %v1943 = vpop.f32.mrb[0].mxu0
    %v1944 = vpop.f32.mrb[0].mxu0
    %v1945 = vadd.f32 %v1890, %v1944
    %v1946 = vpop.f32.mrb[0].mxu0
    %1947 = vdwg.mxu0
    %v1948 = vadd.f32 %v1230, %v1942
    %v1949 = vadd.f32 %v1231, %v1945
    %s1950 = scalar_lea.vmem %s11, 1
    %v1951 = vld [vmem:[%s1950] sm:$0x1]
    %s1952 = scalar_lea.vmem %s12, 1
    %v1953 = vld [vmem:[%s1952] sm:$0x1]
    %v1954 = vsel %vm224, %v1948, 0.0
    %1955 = vadd.xlane.f32.xlu0 %v1954
    %v1956 = vpop.xlane.xlu0 %1955
    %v1957 = vsel %vm224, %v1949, 0.0
    %1958 = vadd.xlane.f32.xlu0 %v1957
    %v1959 = vpop.xlane.xlu0 %1958
    %v1960 = vmul.f32 %v1956, %v231
    %v1961 = vmul.f32 %v1959, %v231
    %v1962 = vsub.f32 %v1948, %v1960
    %v1963 = vsub.f32 %v1949, %v1961
    %v1964 = vmul.f32 %v1962, %v1962
    %v1965 = vmul.f32 %v1963, %v1963
    %v1966 = vsel %vm224, %v1964, 0.0
    %1967 = vadd.xlane.f32.xlu0 %v1966
    %v1968 = vpop.xlane.xlu0 %1967
    %v1969 = vsel %vm224, %v1965, 0.0
    %1970 = vadd.xlane.f32.xlu0 %v1969
    %v1971 = vpop.xlane.xlu0 %1970
    %v1972 = vmul.f32 %v1968, %v231
    %v1973 = vmul.f32 %v1971, %v231
    %v1974 = vadd.f32 %v1972, 1e-05
    %v1975 = vadd.f32 %v1973, 1e-05
    %v1976 = vrsqrt.pop %v1974
    %v1977 = vrsqrt.pop %v1975
    %v1978 = vmul.f32 %v1962, %v1976
    %v1979 = vmul.f32 %v1963, %v1977
    %v1981 = vlaneseq
    %v1982 = vshrl.u32 %v1981, 7
    %v1983 = vsub.s32 0, %v1982
    %v1984 = vrot.slane %v1951, %v1983
    %v1986 = vmul.f32 %v1978, %v1984
    %v1987 = vmul.f32 %v1979, %v1984
    %v1989 = vlaneseq
    %v1990 = vshrl.u32 %v1989, 7
    %v1991 = vsub.s32 0, %v1990
    %v1992 = vrot.slane %v1953, %v1991
    %v1994 = vadd.f32 %v1986, %v1992
    %v1995 = vadd.f32 %v1987, %v1992
    %s1996 = scalar_lea.vmem %s13, 16
    %v1997 = vld [vmem:[%s1996] sm:$0xf]
    %v1998 = vld [vmem:[%s1996 + $0x4] sm:$0xf]
    %v1999 = vld [vmem:[%s1996 + $0x8] sm:$0xf]
    %v2000 = vld [vmem:[%s1996 + $0xc] sm:$0xf]
    %v2001 = vpack.c.bf16 %v1995, %v1994
    %s2002 = scalar_lea.vmem %s14, 1
    %v2003 = vld [vmem:[%s2002] sm:$0x1]
    %v2005 = vlaneseq
    %v2006 = vshrl.u32 %v2005, 7
    %v2007 = vsub.s32 0, %v2006
    %v2008 = vrot.slane %v2003, %v2007
    %v2014 = vunpack.c.l.b16 %v1997
    %v2015 = vunpack.c.l.b16 %v1998
    %v2016 = vunpack.c.l.b16 %v1999
    %v2017 = vunpack.c.l.b16 %v2000
    %v2018 = vpack.c.b16 %v2015, %v2014
    %v2019 = vpack.c.b16 %v2017, %v2016
    %v2023 = vsel %vm224, %v2001, 0
    %2025 = vmatprep.subr.bf16.mxu0 0
    %2026 = vmatpush1.bf16.msra.mxu0 %v2018
    %2027 = vmatprep.subr.bf16.mxu0 0
    %2028 = vmatpush1.bf16.msra.mxu0 %v2019
    %2029 = vmatprep.subr.bf16.mxu0 0
    %2030 = vmatpush1.bf16.msra.mxu0 0
    %2031 = vmatprep.subr.bf16.mxu0 0
    %2032 = vmatpush1.bf16.msra.mxu0 0
    %2033 = vmatprep.subr.bf16.mxu0 0
    %2034 = vmatpush1.bf16.msra.mxu0 0
    %2035 = vmatprep.subr.bf16.mxu0 0
    %2036 = vmatpush1.bf16.msra.mxu0 0
    %2037 = vmatprep.subr.bf16.mxu0 0
    %2038 = vmatpush1.bf16.msra.mxu0 0
    %2039 = vmatprep.subr.bf16.mxu0 0
    %2040 = vmatpush1.bf16.msra.mxu0 0
    %2041 = vmatprep.subr.bf16.mxu0 0
    %2042 = vmatpush1.bf16.msra.mxu0 0
    %2043 = vmatprep.subr.bf16.mxu0 0
    %2044 = vmatpush1.bf16.msra.mxu0 0
    %2045 = vmatprep.subr.bf16.mxu0 0
    %2046 = vmatpush1.bf16.msra.mxu0 0
    %2047 = vmatprep.subr.bf16.mxu0 0
    %2048 = vmatpush1.bf16.msra.mxu0 0
    %2049 = vmatprep.subr.bf16.mxu0 0
    %2050 = vmatpush1.bf16.msra.mxu0 0
    %2051 = vmatprep.subr.bf16.mxu0 0
    %2052 = vmatpush1.bf16.msra.mxu0 0
    %2053 = vmatprep.subr.bf16.mxu0 0
    %2054 = vmatpush1.bf16.msra.mxu0 0
    %2055 = vmatprep.subr.bf16.mxu0 0
    %2056 = vmatpush1.bf16.msra.mxu0 0
    %2057 = vmatprep.mubr.bf16.mxu0 0
    %2058 = vmatmul.mubr.bf16.gmra.mrb[0].mxu0 %v2023
    %v2059 = vpop.f32.mrb[0].mxu0
    %v2060 = vadd.f32 %v2008, %v2059
    %v2061 = vpop.f32.mrb[0].mxu0
    %v2062 = vpop.f32.mrb[0].mxu0
    %v2063 = vadd.f32 %v2008, %v2062
    %v2064 = vpop.f32.mrb[0].mxu0
    %2065 = vdwg.mxu0
    %v2066 = vmul.f32 %v2060, 1.702
    %v2067 = vmul.f32 %v2063, 1.702
    %v2068 = vxor.u32 %v2066, 2147483648
    %v2069 = vxor.u32 %v2067, 2147483648
    %v2070 = vmul.f32 %v2068, 1.442695
    %v2071 = vpow.pop %v2070
    %v2072 = vmul.f32 %v2069, 1.442695
    %v2073 = vpow.pop %v2072
    %v2074 = vadd.f32 %v2071, 1.0
    %v2075 = vadd.f32 %v2073, 1.0
    %v2076 = vrcp.pop %v2074
    %v2077 = vmul.f32 1.0, %v2076
    %v2078 = vrcp.pop %v2075
    %v2079 = vmul.f32 1.0, %v2078
    %v2080 = vmul.f32 %v2060, %v2077
    %v2081 = vmul.f32 %v2063, %v2079
    %s2082 = scalar_lea.vmem %s15, 64
    %v2083 = vld [vmem:[%s2082] sm:$0xf]
    %v2084 = vld [vmem:[%s2082 + $0x4] sm:$0xf]
    %v2085 = vld [vmem:[%s2082 + $0x8] sm:$0xf]
    %v2086 = vld [vmem:[%s2082 + $0xc] sm:$0xf]
    %v2087 = vld [vmem:[%s2082 + $0x10] sm:$0xf]
    %v2088 = vld [vmem:[%s2082 + $0x14] sm:$0xf]
    %v2089 = vld [vmem:[%s2082 + $0x18] sm:$0xf]
    %v2090 = vld [vmem:[%s2082 + $0x1c] sm:$0xf]
    %v2091 = vld [vmem:[%s2082 + $0x20] sm:$0xf]
    %v2092 = vld [vmem:[%s2082 + $0x24] sm:$0xf]
    %v2093 = vld [vmem:[%s2082 + $0x28] sm:$0xf]
    %v2094 = vld [vmem:[%s2082 + $0x2c] sm:$0xf]
    %v2095 = vld [vmem:[%s2082 + $0x30] sm:$0xf]
    %v2096 = vld [vmem:[%s2082 + $0x34] sm:$0xf]
    %v2097 = vld [vmem:[%s2082 + $0x38] sm:$0xf]
    %v2098 = vld [vmem:[%s2082 + $0x3c] sm:$0xf]
    %v2099 = vpack.c.bf16 %v2081, %v2080
    %s2100 = scalar_lea.vmem %s16, 1
    %v2101 = vld [vmem:[%s2100] sm:$0x1]
    %v2103 = vlaneseq
    %v2104 = vshrl.u32 %v2103, 7
    %v2105 = vsub.s32 0, %v2104
    %v2106 = vrot.slane %v2101, %v2105
    %v2124 = vunpack.c.l.b16 %v2083
    %v2125 = vunpack.c.l.b16 %v2084
    %v2126 = vunpack.c.l.b16 %v2085
    %v2127 = vunpack.c.l.b16 %v2086
    %v2128 = vunpack.c.l.b16 %v2087
    %v2129 = vunpack.c.l.b16 %v2088
    %v2130 = vunpack.c.l.b16 %v2089
    %v2131 = vunpack.c.l.b16 %v2090
    %v2132 = vunpack.c.l.b16 %v2091
    %v2133 = vunpack.c.l.b16 %v2092
    %v2134 = vunpack.c.l.b16 %v2093
    %v2135 = vunpack.c.l.b16 %v2094
    %v2136 = vunpack.c.l.b16 %v2095
    %v2137 = vunpack.c.l.b16 %v2096
    %v2138 = vunpack.c.l.b16 %v2097
    %v2139 = vunpack.c.l.b16 %v2098
    %v2140 = vpack.c.b16 %v2125, %v2124
    %v2141 = vpack.c.b16 %v2127, %v2126
    %v2142 = vpack.c.b16 %v2129, %v2128
    %v2143 = vpack.c.b16 %v2131, %v2130
    %v2144 = vpack.c.b16 %v2133, %v2132
    %v2145 = vpack.c.b16 %v2135, %v2134
    %v2146 = vpack.c.b16 %v2137, %v2136
    %v2147 = vpack.c.b16 %v2139, %v2138
    %2156 = vmatprep.subr.bf16.mxu0 0
    %2157 = vmatpush1.bf16.msra.mxu0 %v2140
    %2158 = vmatprep.subr.bf16.mxu0 0
    %2159 = vmatpush1.bf16.msra.mxu0 %v2141
    %2160 = vmatprep.subr.bf16.mxu0 0
    %2161 = vmatpush1.bf16.msra.mxu0 %v2142
    %2162 = vmatprep.subr.bf16.mxu0 0
    %2163 = vmatpush1.bf16.msra.mxu0 %v2143
    %2164 = vmatprep.subr.bf16.mxu0 0
    %2165 = vmatpush1.bf16.msra.mxu0 %v2144
    %2166 = vmatprep.subr.bf16.mxu0 0
    %2167 = vmatpush1.bf16.msra.mxu0 %v2145
    %2168 = vmatprep.subr.bf16.mxu0 0
    %2169 = vmatpush1.bf16.msra.mxu0 %v2146
    %2170 = vmatprep.subr.bf16.mxu0 0
    %2171 = vmatpush1.bf16.msra.mxu0 %v2147
    %2172 = vmatprep.subr.bf16.mxu0 0
    %2173 = vmatpush1.bf16.msra.mxu0 0
    %2174 = vmatprep.subr.bf16.mxu0 0
    %2175 = vmatpush1.bf16.msra.mxu0 0
    %2176 = vmatprep.subr.bf16.mxu0 0
    %2177 = vmatpush1.bf16.msra.mxu0 0
    %2178 = vmatprep.subr.bf16.mxu0 0
    %2179 = vmatpush1.bf16.msra.mxu0 0
    %2180 = vmatprep.subr.bf16.mxu0 0
    %2181 = vmatpush1.bf16.msra.mxu0 0
    %2182 = vmatprep.subr.bf16.mxu0 0
    %2183 = vmatpush1.bf16.msra.mxu0 0
    %2184 = vmatprep.subr.bf16.mxu0 0
    %2185 = vmatpush1.bf16.msra.mxu0 0
    %2186 = vmatprep.subr.bf16.mxu0 0
    %2187 = vmatpush1.bf16.msra.mxu0 0
    %2188 = vmatprep.mubr.bf16.mxu0 0
    %2189 = vmatmul.mubr.bf16.gmra.mrb[0].mxu0 %v2099
    %v2190 = vpop.f32.mrb[0].mxu0
    %v2191 = vadd.f32 %v2106, %v2190
    %v2192 = vpop.f32.mrb[0].mxu0
    %v2193 = vpop.f32.mrb[0].mxu0
    %v2194 = vadd.f32 %v2106, %v2193
    %v2195 = vpop.f32.mrb[0].mxu0
    %2196 = vdwg.mxu0
    %v2197 = vadd.f32 %v1948, %v2191
    %v2198 = vadd.f32 %v1949, %v2194
    %v2200 = vrot.slane %v2198, 7
    %vm2202 = vcmask 1040384
    %v2203 = vsel %vm2202, %v2197, %v2200
    %v2204 = vld [vmem:[%s19] sm:$0x1]
    %v2205 = vld [vmem:[%s20] sm:$0x1]
    %vm2206 = vcmask 254976
    %v2207 = vsel %vm2206, %v2203, 0.0
    %2208 = vadd.xlane.f32.xlu0 %v2207
    %v2209 = vpop.xlane.xlu0 %2208
    %v2210 = vmul.f32 %v2209, %v231
    %v2211 = vsub.f32 %v2203, %v2210
    %v2212 = vmul.f32 %v2211, %v2211
    %v2213 = vsel %vm2206, %v2212, 0.0
    %2214 = vadd.xlane.f32.xlu0 %v2213
    %v2215 = vpop.xlane.xlu0 %2214
    %v2216 = vmul.f32 %v2215, %v231
    %v2217 = vadd.f32 %v2216, 1e-05
    %v2218 = vrsqrt.pop %v2217
    %v2219 = vmul.f32 %v2211, %v2218
    %v2221 = vlaneseq
    %v2222 = vshrl.u32 %v2221, 7
    %v2223 = vsub.s32 0, %v2222
    %v2224 = vrot.slane %v2204, %v2223
    %v2226 = vmul.f32 %v2219, %v2224
    %v2228 = vlaneseq
    %v2229 = vshrl.u32 %v2228, 7
    %v2230 = vsub.s32 0, %v2229
    %v2231 = vrot.slane %v2205, %v2230
    %v2233 = vadd.f32 %v2226, %v2231
    %v2234 = vld [vmem:[%s21] sm:$0xf]
    %v2235 = vld [vmem:[%s21 + $0x4] sm:$0xf]
    %v2236 = vld [vmem:[%s21 + $0x8] sm:$0xf]
    %v2237 = vld [vmem:[%s21 + $0xc] sm:$0xf]
    %v2238 = vpack.c.bf16 %v2233, %v2233
    %v2243 = vunpack.c.l.b16 %v2234
    %v2244 = vunpack.c.l.b16 %v2235
    %v2245 = vunpack.c.l.b16 %v2236
    %v2246 = vunpack.c.l.b16 %v2237
    %v2247 = vpack.c.b16 %v2244, %v2243
    %v2248 = vpack.c.b16 %v2246, %v2245
    %v2252 = vsel %vm224, %v2238, 0
    %2254 = vmatprep.subr.bf16.mxu0 0
    %2255 = vmatpush1.bf16.msra.mxu0 %v2247
    %2256 = vmatprep.subr.bf16.mxu0 0
    %2257 = vmatpush1.bf16.msra.mxu0 %v2248
    %2258 = vmatprep.subr.bf16.mxu0 0
    %2259 = vmatpush1.bf16.msra.mxu0 0
    %2260 = vmatprep.subr.bf16.mxu0 0
    %2261 = vmatpush1.bf16.msra.mxu0 0
    %2262 = vmatprep.subr.bf16.mxu0 0
    %2263 = vmatpush1.bf16.msra.mxu0 0
    %2264 = vmatprep.subr.bf16.mxu0 0
    %2265 = vmatpush1.bf16.msra.mxu0 0
    %2266 = vmatprep.subr.bf16.mxu0 0
    %2267 = vmatpush1.bf16.msra.mxu0 0
    %2268 = vmatprep.subr.bf16.mxu0 0
    %2269 = vmatpush1.bf16.msra.mxu0 0
    %2270 = vmatprep.subr.bf16.mxu0 0
    %2271 = vmatpush1.bf16.msra.mxu0 0
    %2272 = vmatprep.subr.bf16.mxu0 0
    %2273 = vmatpush1.bf16.msra.mxu0 0
    %2274 = vmatprep.subr.bf16.mxu0 0
    %2275 = vmatpush1.bf16.msra.mxu0 0
    %2276 = vmatprep.subr.bf16.mxu0 0
    %2277 = vmatpush1.bf16.msra.mxu0 0
    %2278 = vmatprep.subr.bf16.mxu0 0
    %2279 = vmatpush1.bf16.msra.mxu0 0
    %2280 = vmatprep.subr.bf16.mxu0 0
    %2281 = vmatpush1.bf16.msra.mxu0 0
    %2282 = vmatprep.subr.bf16.mxu0 0
    %2283 = vmatpush1.bf16.msra.mxu0 0
    %2284 = vmatprep.subr.bf16.mxu0 0
    %2285 = vmatpush1.bf16.msra.mxu0 0
    %2286 = vmatprep.mubr.bf16.mxu0 0
    %2287 = vmatmul.mubr.bf16.gmra.mrb[0].mxu0 %v2252
    %v2288 = vpop.f32.mrb[0].mxu0
    %v2289 = vadd.f32 0.0, %v2288
    %v2290 = vpop.f32.mrb[0].mxu0
    %v2291 = vpop.f32.mrb[0].mxu0
    %v2292 = vpop.f32.mrb[0].mxu0
    %2293 = vdwg.mxu0
    %vm2294 = vcmask 123904
    %2295 = vst.msk [vmem:[#allocation2] sm:$0x3] %vm2294, %v2289
    // Predicated region
    $region90: #{masked_vit_forward.1} parent=1 // pred_check
      _
    $region91: #{masked_vit_forward.1} parent=1 // pred_check_branch
      %2297 = sbr.rel (0) target = $region93
    $region92: #{masked_vit_forward.1} parent=1 // pred_region
      %s2299 = ssub.s32 32, 32
      %2300 = vsyncadd [#allocation3], %s2299
      %s2302 = sshll.u32 [#allocation2], 4
      %s2303 = int_to_ptr.vmem [resolvable:$true] %s2302
      %2305 = dma.vmem_to_hbm [thread:$0]  %s2303, 32, %s22, [#allocation3]
    $region93: #{masked_vit_forward.1} parent=1 // pred_fallthru
      _
    // Predicated region
    $region94: #{masked_vit_forward.1} parent=1 // pred_check
      _
    $region95: #{masked_vit_forward.1} parent=1 // pred_check_branch
      %2307 = sbr.rel (0) target = $region97
    $region96: #{masked_vit_forward.1} parent=1 // pred_region
      %2308 = dma.done [#allocation3], 32
    $region97: #{masked_vit_forward.1} parent=1 // pred_fallthru
      _
    %2309 = vsyncpa [#allocation3], 1

</llo_original>
